<compile_context>
chip_gen: v7x
topology: tpu7x:2x2x1
jax: 0.10.0
libtpu: 0.0.40
codegen_flags: <defaults>
</compile_context>

<pallas_src>
import functools
import math

import jax
import jax.numpy as jnp
from jax.experimental import pallas as pl
from jax.experimental.pallas import tpu as pltpu

# ----------------------------- hyper-parameters ------------------------------
B = 2                      # batch
IN_LENGTH = 16             # input sequence length (W)
OUT_LENGTH = 4             # forecast horizon
NUM_NODES = 8              # graph nodes (H)
NODE_EMB_DIM = 8
GRAPH_HIDDEN = 16
IN_CHANNELS = 2
OUT_CHANNELS = 1
HIDDEN_CHANNELS = 16
SCALE_CHANNELS = 16
END_CHANNELS = 32
LAYER_STRUCTURE = [[1, 1], [1]]   # 2 scales: 2 cells at scale 0, 1 cell at scale 1
SCALES = len(LAYER_STRUCTURE)
NUM_CELLS = sum(len(s) for s in LAYER_STRUCTURE)


class Mode:
    # TODO(synk): original `Mode` enum / NAS path-selection machinery not provided;
    # mode only gates architecture sampling inside STCell and does not change the
    # stand-in forward math, so it is accepted and ignored.
    NONE = 0
    ALL_PATHS = 1


# ------------------------------ fused Pallas kernel --------------------------
def _net_kernel(*refs):
    """Entire Net forward.  Consumes inputs positionally (see net_forward_packed)."""
    out_ref = refs[-1]
    it = iter(refs[:-1])
    nxt = lambda: next(it)[...]
    f32 = jnp.float32

    def mm(a, b):          # bf16 MXU feed, f32 accumulation
        return jnp.dot(a.astype(jnp.bfloat16), b.astype(jnp.bfloat16),
                       preferred_element_type=f32)

    def mm32(a, b):        # tiny f32 matmuls (graph learner)
        return jnp.dot(a, b, preferred_element_type=f32)

    # ---- BaseGraphLearner (stand-in): adaptive adjacency, computed once ----
    # TODO(synk): BaseGraphLearner source not provided; standard adaptive-adjacency
    # construction (embeddings -> tanh(linear) -> relu(tanh(M1 M2^T - M2 M1^T))).
    e1 = nxt(); e2 = nxt(); gw1 = nxt(); gb1 = nxt()
    gw2 = nxt(); gb2 = nxt(); emb_top = nxt(); emb_bot = nxt()
    v1 = jnp.tanh(mm32(e1, gw1) + gb1)                 # (N, graph_hidden)
    v2 = jnp.tanh(mm32(e2, gw2) + gb2)
    a = mm32(v1, v2.T) - mm32(v2, v1.T)                # (N, N)
    adj = jnp.maximum(jnp.tanh(a), 0.0)
    a_sym = 0.5 * (adj + adj.T)                        # symmetric adjacency, used by all cells
    # block-diagonal (B*N, B*N) embedding: one matmul per graph conv
    a_big = (mm32(mm32(emb_top, a_sym), emb_top.T)
             + mm32(mm32(emb_bot, a_sym), emb_bot.T))

    # ---- start conv (Cin=2, 1x1): two VPU FMAs, no MXU ----
    x0a = nxt(); x0b = nxt(); ws0 = nxt(); ws1 = nxt(); bs = nxt()
    h0 = x0a * ws0 + x0b * ws1 + bs                    # (B*N, HID*T0) f32, lane-dense

    # ---- scale0 (1,T) conv -> scale_output accumulator (stays in registers) ----
    w_s0 = nxt(); b_s0 = nxt()
    scale_out = mm(h0, w_s0) + b_s0                    # (B*N, SCALE_CH) f32

    # ---- MultiScale (stand-in): stride-2 mean pooling over time, as matmuls ----
    # TODO(synk): MultiScale source not provided; stride-2 average pooling per scale.
    scale_in = [h0]
    for _ in range(SCALES - 1):
        pool = nxt()
        scale_in.append(mm(scale_in[-1], pool))        # halves the time axis

    # ---- ST cells + per-cell (1,T) scale convs ----
    # TODO(synk): STCell (NAS cell w/ candidate_op_profiles) source not provided;
    # stand-in = residual { relu(1x1 conv) -> symmetric graph convolution }.
    for s in range(SCALES):
        x1 = scale_in[s]
        for _ in range(len(LAYER_STRUCTURE[s])):
            w_c = nxt(); b_c = nxt(); w_sc = nxt(); b_sc = nxt()
            h = jnp.maximum(mm(x1, w_c) + b_c, 0.0)    # 1x1 conv + ReLU (Kron weights)
            x1 = x1 + mm(a_big, h)                     # graph conv + residual
            scale_out = scale_out + mm(x1, w_sc) + b_sc

    # ---- head: relu -> end_conv1 -> relu -> end_conv2 ----
    w_e1 = nxt(); b_e1 = nxt(); w_e2 = nxt(); b_e2 = nxt()
    y = jnp.maximum(scale_out, 0.0)
    y = jnp.maximum(mm(y, w_e1) + b_e1, 0.0)
    y = mm(y, w_e2) + b_e2                             # (B*N, OUT_CHANNELS*OUT_LENGTH)
    out_ref[...] = y.astype(out_ref.dtype)


# --------------------------- parameter repacking ------------------------------
def pack_params(params):
    """One-time host-side repack of raw Net params into kernel-ready matrices."""
    f32, bf16 = jnp.float32, jnp.bfloat16
    T0, H = IN_LENGTH, HIDDEN_CHANNELS
    e1, e2, w1, b1, w2, b2 = params["graph"]

    def kron_1x1(w, t):            # (O, C) -> (C*t, O*t): time-block-diagonal 1x1 conv
        return jnp.kron(w.T.astype(f32), jnp.eye(t, dtype=f32)).astype(bf16)

    def time_conv(w):              # (O, C, t) -> (C*t, O): full-time (1,t) conv
        o, c, t = w.shape
        return jnp.transpose(w, (1, 2, 0)).reshape(c * t, o).astype(bf16)

    packed = {
        "e1": e1.astype(f32), "e2": e2.astype(f32),
        "gw1": w1.astype(f32), "gb1": b1.reshape(1, -1).astype(f32),
        "gw2": w2.astype(f32), "gb2": b2.reshape(1, -1).astype(f32),
        "emb_top": jnp.eye(B * NUM_NODES, NUM_NODES, dtype=f32),
        "emb_bot": jnp.eye(B * NUM_NODES, NUM_NODES, k=-NUM_NODES, dtype=f32),
        "ws0": jnp.repeat(params["start_w"][:, 0], T0)[None, :].astype(f32),
        "ws1": jnp.repeat(params["start_w"][:, 1], T0)[None, :].astype(f32),
        "bs": jnp.repeat(params["start_b"], T0)[None, :].astype(f32),
        "w_scale0": time_conv(params["scale0_w"]),
        "b_scale0": params["scale0_b"][None, :].astype(f32),
        "wend1": params["end1_w"].T.astype(bf16),
        "bend1": params["end1_b"][None, :].astype(f32),
        "wend2": params["end2_w"].T.astype(bf16),
        "bend2": params["end2_b"][None, :].astype(f32),
    }

    # stride-2 mean-pooling matrices (one per extra scale)
    pools, t = [], T0
    for _ in range(SCALES - 1):
        pt = (jnp.arange(t)[:, None] // 2 == jnp.arange(t // 2)[None, :]).astype(f32) * 0.5
        pools.append(jnp.kron(jnp.eye(H, dtype=f32), pt).astype(bf16))
        t //= 2
    packed["pools"] = pools

    wcs, bcs, wscs, bscs = [], [], [], []
    idx = 0
    for s, scale in enumerate(LAYER_STRUCTURE):
        t = T0 // (2 ** s)
        for _ in scale:
            wc, bc = params["cells"][idx]
            wcs.append(kron_1x1(wc, t))
            bcs.append(jnp.repeat(bc, t)[None, :].astype(f32))
            wscs.append(time_conv(params["scale_conv_w"][idx]))
            bscs.append(params["scale_conv_b"][idx][None, :].astype(f32))
            idx += 1
    packed["wc"], packed["bc"] = wcs, bcs
    packed["wsc"], packed["bsc"] = wscs, bscs
    return packed


# --------------------------------- forward ------------------------------------
def net_forward_packed(packed, x):
    """x: (B, IN_CHANNELS, NUM_NODES, IN_LENGTH) -> (B, OUT_CHANNELS, NUM_NODES, OUT_LENGTH)."""
    bn = B * NUM_NODES
    # tiny input layout prep: rows = (batch, node), per-channel time rows tiled
    # across the HIDDEN output-channel blocks (feeds the VPU start conv).
    xr = jnp.transpose(x, (0, 2, 1, 3)).reshape(bn, IN_CHANNELS, IN_LENGTH)
    x0a = jnp.tile(xr[:, 0, :], (1, HIDDEN_CHANNELS))          # (16, 256)
    x0b = jnp.tile(xr[:, 1, :], (1, HIDDEN_CHANNELS))          # (16, 256)

    args = [packed["e1"], packed["e2"], packed["gw1"], packed["gb1"],
            packed["gw2"], packed["gb2"], packed["emb_top"], packed["emb_bot"],
            x0a, x0b, packed["ws0"], packed["ws1"], packed["bs"],
            packed["w_scale0"], packed["b_scale0"]]
    args += list(packed["pools"])
    for k in range(NUM_CELLS):
        args += [packed["wc"][k], packed["bc"][k], packed["wsc"][k], packed["bsc"][k]]
    args += [packed["wend1"], packed["bend1"], packed["wend2"], packed["bend2"]]

    vmem = pl.BlockSpec(memory_space=pltpu.MemorySpace.VMEM)
    y = pl.pallas_call(
        _net_kernel,
        out_shape=jax.ShapeDtypeStruct((bn, OUT_CHANNELS * OUT_LENGTH), jnp.float32),
        in_specs=[vmem] * len(args),
        out_specs=vmem,
    )(*args)

    # y[(b*N+n), co*L+l]  ->  (B, Cout, N, L)  (matches .view + .transpose(2,3))
    out = y.reshape(B, NUM_NODES, OUT_CHANNELS, OUT_LENGTH)
    return jnp.transpose(out, (0, 2, 1, 3))


def net_forward(params, x, mode=Mode.NONE):
    del mode  # see Mode TODO above
    return net_forward_packed(pack_params(params), x)


# ------------------------------ parameter init --------------------------------
def init_params(key):
    keys = iter(jax.random.split(key, 64))

    def randn(shape, scale=0.1):
        return scale * jax.random.normal(next(keys), shape, jnp.float32)

    params = {}
    params["graph"] = (
        randn((NUM_NODES, NODE_EMB_DIM)),
        randn((NUM_NODES, NODE_EMB_DIM)),
        randn((NODE_EMB_DIM, GRAPH_HIDDEN)), randn((GRAPH_HIDDEN,)),
        randn((NODE_EMB_DIM, GRAPH_HIDDEN)), randn((GRAPH_HIDDEN,)),
    )
    params["start_w"] = randn((HIDDEN_CHANNELS, IN_CHANNELS))
    params["start_b"] = randn((HIDDEN_CHANNELS,))
    params["scale0_w"] = randn((SCALE_CHANNELS, HIDDEN_CHANNELS, IN_LENGTH))
    params["scale0_b"] = randn((SCALE_CHANNELS,))

    cells, scw, scb = [], [], []
    scale_index = 0
    for scale in LAYER_STRUCTURE:
        T = int(IN_LENGTH / math.pow(2, scale_index))
        for _ in scale:
            cells.append((randn((HIDDEN_CHANNELS, HIDDEN_CHANNELS)),
                          randn((HIDDEN_CHANNELS,))))
            scw.append(randn((SCALE_CHANNELS, HIDDEN_CHANNELS, T)))
            scb.append(randn((SCALE_CHANNELS,)))
        scale_index += 1
    params["cells"] = cells
    params["scale_conv_w"] = scw
    params["scale_conv_b"] = scb

    params["end1_w"] = randn((END_CHANNELS, SCALE_CHANNELS))
    params["end1_b"] = randn((END_CHANNELS,))
    params["end2_w"] = randn((OUT_CHANNELS * OUT_LENGTH, END_CHANNELS))
    params["end2_b"] = randn((OUT_CHANNELS * OUT_LENGTH,))
    return params


# ----------------------------------- main --------------------------------------
if __name__ == "__main__":
    key = jax.random.PRNGKey(0)
    pkey, xkey = jax.random.split(key)
    params = init_params(pkey)

    # input: NCHW = (batch, in_channels, num_nodes, in_length)
    x = jax.random.normal(xkey, (B, IN_CHANNELS, NUM_NODES, IN_LENGTH), jnp.float32)

    packed = pack_params(params)                    # one-time weight repack
    fwd = jax.jit(net_forward_packed)
    out = fwd(packed, x)
    out = jax.block_until_ready(out)

    assert out.shape == (B, OUT_CHANNELS, NUM_NODES, OUT_LENGTH), out.shape
    assert bool(jnp.all(jnp.isfinite(out)))
    print("KERNEL_OK")
</pallas_src>

<mosaic_0001>
module attributes {stable_mosaic.version = 11 : i64} {
  func.func @_net_kernel(%arg0: memref<8x8xf32, #tpu.memory_space<vmem>>, %arg1: memref<8x8xf32, #tpu.memory_space<vmem>>, %arg2: memref<8x16xf32, #tpu.memory_space<vmem>>, %arg3: memref<1x16xf32, #tpu.memory_space<vmem>>, %arg4: memref<8x16xf32, #tpu.memory_space<vmem>>, %arg5: memref<1x16xf32, #tpu.memory_space<vmem>>, %arg6: memref<16x8xf32, #tpu.memory_space<vmem>>, %arg7: memref<16x8xf32, #tpu.memory_space<vmem>>, %arg8: memref<16x256xf32, #tpu.memory_space<vmem>>, %arg9: memref<16x256xf32, #tpu.memory_space<vmem>>, %arg10: memref<1x256xf32, #tpu.memory_space<vmem>>, %arg11: memref<1x256xf32, #tpu.memory_space<vmem>>, %arg12: memref<1x256xf32, #tpu.memory_space<vmem>>, %arg13: memref<256x16xbf16, #tpu.memory_space<vmem>>, %arg14: memref<1x16xf32, #tpu.memory_space<vmem>>, %arg15: memref<256x128xbf16, #tpu.memory_space<vmem>>, %arg16: memref<256x256xbf16, #tpu.memory_space<vmem>>, %arg17: memref<1x256xf32, #tpu.memory_space<vmem>>, %arg18: memref<256x16xbf16, #tpu.memory_space<vmem>>, %arg19: memref<1x16xf32, #tpu.memory_space<vmem>>, %arg20: memref<256x256xbf16, #tpu.memory_space<vmem>>, %arg21: memref<1x256xf32, #tpu.memory_space<vmem>>, %arg22: memref<256x16xbf16, #tpu.memory_space<vmem>>, %arg23: memref<1x16xf32, #tpu.memory_space<vmem>>, %arg24: memref<128x128xbf16, #tpu.memory_space<vmem>>, %arg25: memref<1x128xf32, #tpu.memory_space<vmem>>, %arg26: memref<128x16xbf16, #tpu.memory_space<vmem>>, %arg27: memref<1x16xf32, #tpu.memory_space<vmem>>, %arg28: memref<16x32xbf16, #tpu.memory_space<vmem>>, %arg29: memref<1x32xf32, #tpu.memory_space<vmem>>, %arg30: memref<32x4xbf16, #tpu.memory_space<vmem>>, %arg31: memref<1x4xf32, #tpu.memory_space<vmem>>, %arg32: memref<16x4xf32, #tpu.memory_space<vmem>>) attributes {dimension_semantics = [], scalar_prefetch = 0 : i64, scratch_operands = 0 : i64, tpu.core_type = #tpu.core_type<tc>} {
    %c0 = arith.constant 0 : index
    %c0_0 = arith.constant 0 : index
    %0 = vector.load %arg0[%c0, %c0_0] : memref<8x8xf32, #tpu.memory_space<vmem>>, vector<8x8xf32>
    %c0_1 = arith.constant 0 : index
    %c0_2 = arith.constant 0 : index
    %1 = vector.load %arg1[%c0_1, %c0_2] : memref<8x8xf32, #tpu.memory_space<vmem>>, vector<8x8xf32>
    %c0_3 = arith.constant 0 : index
    %c0_4 = arith.constant 0 : index
    %2 = vector.load %arg2[%c0_3, %c0_4] : memref<8x16xf32, #tpu.memory_space<vmem>>, vector<8x16xf32>
    %c0_5 = arith.constant 0 : index
    %c0_6 = arith.constant 0 : index
    %3 = vector.load %arg3[%c0_5, %c0_6] : memref<1x16xf32, #tpu.memory_space<vmem>>, vector<1x16xf32>
    %c0_7 = arith.constant 0 : index
    %c0_8 = arith.constant 0 : index
    %4 = vector.load %arg4[%c0_7, %c0_8] : memref<8x16xf32, #tpu.memory_space<vmem>>, vector<8x16xf32>
    %c0_9 = arith.constant 0 : index
    %c0_10 = arith.constant 0 : index
    %5 = vector.load %arg5[%c0_9, %c0_10] : memref<1x16xf32, #tpu.memory_space<vmem>>, vector<1x16xf32>
    %c0_11 = arith.constant 0 : index
    %c0_12 = arith.constant 0 : index
    %6 = vector.load %arg6[%c0_11, %c0_12] : memref<16x8xf32, #tpu.memory_space<vmem>>, vector<16x8xf32>
    %c0_13 = arith.constant 0 : index
    %c0_14 = arith.constant 0 : index
    %7 = vector.load %arg7[%c0_13, %c0_14] : memref<16x8xf32, #tpu.memory_space<vmem>>, vector<16x8xf32>
    %cst = arith.constant dense<0.000000e+00> : vector<8x16xf32>
    %8 = tpu.matmul %0, %2, %cst {dimension_numbers = #tpu.dot_dimension_numbers<[1], [0], [0], [1], [0, 0, 1, 1], [], []>} : vector<8x8xf32>, vector<8x16xf32>, vector<8x16xf32> -> vector<8x16xf32>
    %9 = vector.broadcast %3 : vector<1x16xf32> to vector<8x16xf32>
    %10 = arith.addf %8, %9 : vector<8x16xf32>
    %11 = math.tanh %10 : vector<8x16xf32>
    %cst_15 = arith.constant dense<0.000000e+00> : vector<8x16xf32>
    %12 = tpu.matmul %1, %4, %cst_15 {dimension_numbers = #tpu.dot_dimension_numbers<[1], [0], [0], [1], [0, 0, 1, 1], [], []>} : vector<8x8xf32>, vector<8x16xf32>, vector<8x16xf32> -> vector<8x16xf32>
    %13 = vector.broadcast %5 : vector<1x16xf32> to vector<8x16xf32>
    %14 = arith.addf %12, %13 : vector<8x16xf32>
    %15 = math.tanh %14 : vector<8x16xf32>
    %16 = tpu.transpose %15, [1, 0] : vector<8x16xf32> -> vector<16x8xf32>
    %cst_16 = arith.constant dense<0.000000e+00> : vector<8x8xf32>
    %17 = tpu.matmul %11, %16, %cst_16 {dimension_numbers = #tpu.dot_dimension_numbers<[1], [0], [0], [1], [0, 0, 1, 1], [], []>} : vector<8x16xf32>, vector<16x8xf32>, vector<8x8xf32> -> vector<8x8xf32>
    %18 = tpu.transpose %11, [1, 0] : vector<8x16xf32> -> vector<16x8xf32>
    %cst_17 = arith.constant dense<0.000000e+00> : vector<8x8xf32>
    %19 = tpu.matmul %15, %18, %cst_17 {dimension_numbers = #tpu.dot_dimension_numbers<[1], [0], [0], [1], [0, 0, 1, 1], [], []>} : vector<8x16xf32>, vector<16x8xf32>, vector<8x8xf32> -> vector<8x8xf32>
    %20 = arith.subf %17, %19 : vector<8x8xf32>
    %21 = math.tanh %20 : vector<8x8xf32>
    %cst_18 = arith.constant 0.000000e+00 : f32
    %22 = vector.broadcast %cst_18 : f32 to vector<8x8xf32>
    %23 = arith.maximumf %21, %22 : vector<8x8xf32>
    %24 = tpu.transpose %23, [1, 0] : vector<8x8xf32> -> vector<8x8xf32>
    %25 = arith.addf %23, %24 : vector<8x8xf32>
    %cst_19 = arith.constant 5.000000e-01 : f32
    %26 = vector.broadcast %cst_19 : f32 to vector<8x8xf32>
    %27 = arith.mulf %26, %25 : vector<8x8xf32>
    %cst_20 = arith.constant dense<0.000000e+00> : vector<16x8xf32>
    %28 = tpu.matmul %6, %27, %cst_20 {dimension_numbers = #tpu.dot_dimension_numbers<[1], [0], [0], [1], [0, 0, 1, 1], [], []>} : vector<16x8xf32>, vector<8x8xf32>, vector<16x8xf32> -> vector<16x8xf32>
    %29 = tpu.transpose %6, [1, 0] : vector<16x8xf32> -> vector<8x16xf32>
    %cst_21 = arith.constant dense<0.000000e+00> : vector<16x16xf32>
    %30 = tpu.matmul %28, %29, %cst_21 {dimension_numbers = #tpu.dot_dimension_numbers<[1], [0], [0], [1], [0, 0, 1, 1], [], []>} : vector<16x8xf32>, vector<8x16xf32>, vector<16x16xf32> -> vector<16x16xf32>
    %cst_22 = arith.constant dense<0.000000e+00> : vector<16x8xf32>
    %31 = tpu.matmul %7, %27, %cst_22 {dimension_numbers = #tpu.dot_dimension_numbers<[1], [0], [0], [1], [0, 0, 1, 1], [], []>} : vector<16x8xf32>, vector<8x8xf32>, vector<16x8xf32> -> vector<16x8xf32>
    %32 = tpu.transpose %7, [1, 0] : vector<16x8xf32> -> vector<8x16xf32>
    %cst_23 = arith.constant dense<0.000000e+00> : vector<16x16xf32>
    %33 = tpu.matmul %31, %32, %cst_23 {dimension_numbers = #tpu.dot_dimension_numbers<[1], [0], [0], [1], [0, 0, 1, 1], [], []>} : vector<16x8xf32>, vector<8x16xf32>, vector<16x16xf32> -> vector<16x16xf32>
    %34 = arith.addf %30, %33 : vector<16x16xf32>
    %c0_24 = arith.constant 0 : index
    %c0_25 = arith.constant 0 : index
    %35 = vector.load %arg8[%c0_24, %c0_25] : memref<16x256xf32, #tpu.memory_space<vmem>>, vector<16x256xf32>
    %c0_26 = arith.constant 0 : index
    %c0_27 = arith.constant 0 : index
    %36 = vector.load %arg9[%c0_26, %c0_27] : memref<16x256xf32, #tpu.memory_space<vmem>>, vector<16x256xf32>
    %c0_28 = arith.constant 0 : index
    %c0_29 = arith.constant 0 : index
    %37 = vector.load %arg10[%c0_28, %c0_29] : memref<1x256xf32, #tpu.memory_space<vmem>>, vector<1x256xf32>
    %c0_30 = arith.constant 0 : index
    %c0_31 = arith.constant 0 : index
    %38 = vector.load %arg11[%c0_30, %c0_31] : memref<1x256xf32, #tpu.memory_space<vmem>>, vector<1x256xf32>
    %c0_32 = arith.constant 0 : index
    %c0_33 = arith.constant 0 : index
    %39 = vector.load %arg12[%c0_32, %c0_33] : memref<1x256xf32, #tpu.memory_space<vmem>>, vector<1x256xf32>
    %40 = vector.broadcast %37 : vector<1x256xf32> to vector<16x256xf32>
    %41 = arith.mulf %35, %40 : vector<16x256xf32>
    %42 = vector.broadcast %38 : vector<1x256xf32> to vector<16x256xf32>
    %43 = arith.mulf %36, %42 : vector<16x256xf32>
    %44 = arith.addf %41, %43 : vector<16x256xf32>
    %45 = vector.broadcast %39 : vector<1x256xf32> to vector<16x256xf32>
    %46 = arith.addf %44, %45 : vector<16x256xf32>
    %c0_34 = arith.constant 0 : index
    %c0_35 = arith.constant 0 : index
    %47 = vector.load %arg13[%c0_34, %c0_35] : memref<256x16xbf16, #tpu.memory_space<vmem>>, vector<256x16xbf16>
    %c0_36 = arith.constant 0 : index
    %c0_37 = arith.constant 0 : index
    %48 = vector.load %arg14[%c0_36, %c0_37] : memref<1x16xf32, #tpu.memory_space<vmem>>, vector<1x16xf32>
    %49 = arith.truncf %46 : vector<16x256xf32> to vector<16x256xbf16>
    %cst_38 = arith.constant dense<0.000000e+00> : vector<16x16xf32>
    %50 = tpu.matmul %49, %47, %cst_38 {dimension_numbers = #tpu.dot_dimension_numbers<[1], [0], [0], [1], [0, 0, 1, 1], [], []>} : vector<16x256xbf16>, vector<256x16xbf16>, vector<16x16xf32> -> vector<16x16xf32>
    %51 = vector.broadcast %48 : vector<1x16xf32> to vector<16x16xf32>
    %52 = arith.addf %50, %51 : vector<16x16xf32>
    %c0_39 = arith.constant 0 : index
    %c0_40 = arith.constant 0 : index
    %53 = vector.load %arg15[%c0_39, %c0_40] : memref<256x128xbf16, #tpu.memory_space<vmem>>, vector<256x128xbf16>
    %54 = arith.truncf %46 : vector<16x256xf32> to vector<16x256xbf16>
    %cst_41 = arith.constant dense<0.000000e+00> : vector<16x128xf32>
    %55 = tpu.matmul %54, %53, %cst_41 {dimension_numbers = #tpu.dot_dimension_numbers<[1], [0], [0], [1], [0, 0, 1, 1], [], []>} : vector<16x256xbf16>, vector<256x128xbf16>, vector<16x128xf32> -> vector<16x128xf32>
    %c0_42 = arith.constant 0 : index
    %c0_43 = arith.constant 0 : index
    %56 = vector.load %arg16[%c0_42, %c0_43] : memref<256x256xbf16, #tpu.memory_space<vmem>>, vector<256x256xbf16>
    %c0_44 = arith.constant 0 : index
    %c0_45 = arith.constant 0 : index
    %57 = vector.load %arg17[%c0_44, %c0_45] : memref<1x256xf32, #tpu.memory_space<vmem>>, vector<1x256xf32>
    %c0_46 = arith.constant 0 : index
    %c0_47 = arith.constant 0 : index
    %58 = vector.load %arg18[%c0_46, %c0_47] : memref<256x16xbf16, #tpu.memory_space<vmem>>, vector<256x16xbf16>
    %c0_48 = arith.constant 0 : index
    %c0_49 = arith.constant 0 : index
    %59 = vector.load %arg19[%c0_48, %c0_49] : memref<1x16xf32, #tpu.memory_space<vmem>>, vector<1x16xf32>
    %60 = arith.truncf %46 : vector<16x256xf32> to vector<16x256xbf16>
    %cst_50 = arith.constant dense<0.000000e+00> : vector<16x256xf32>
    %61 = tpu.matmul %60, %56, %cst_50 {dimension_numbers = #tpu.dot_dimension_numbers<[1], [0], [0], [1], [0, 0, 1, 1], [], []>} : vector<16x256xbf16>, vector<256x256xbf16>, vector<16x256xf32> -> vector<16x256xf32>
    %62 = vector.broadcast %57 : vector<1x256xf32> to vector<16x256xf32>
    %63 = arith.addf %61, %62 : vector<16x256xf32>
    %cst_51 = arith.constant 0.000000e+00 : f32
    %64 = vector.broadcast %cst_51 : f32 to vector<16x256xf32>
    %65 = arith.maximumf %63, %64 : vector<16x256xf32>
    %66 = arith.truncf %34 : vector<16x16xf32> to vector<16x16xbf16>
    %67 = arith.truncf %65 : vector<16x256xf32> to vector<16x256xbf16>
    %cst_52 = arith.constant dense<0.000000e+00> : vector<16x256xf32>
    %68 = tpu.matmul %66, %67, %cst_52 {dimension_numbers = #tpu.dot_dimension_numbers<[1], [0], [0], [1], [0, 0, 1, 1], [], []>} : vector<16x16xbf16>, vector<16x256xbf16>, vector<16x256xf32> -> vector<16x256xf32>
    %69 = arith.addf %46, %68 : vector<16x256xf32>
    %70 = arith.truncf %69 : vector<16x256xf32> to vector<16x256xbf16>
    %cst_53 = arith.constant dense<0.000000e+00> : vector<16x16xf32>
    %71 = tpu.matmul %70, %58, %cst_53 {dimension_numbers = #tpu.dot_dimension_numbers<[1], [0], [0], [1], [0, 0, 1, 1], [], []>} : vector<16x256xbf16>, vector<256x16xbf16>, vector<16x16xf32> -> vector<16x16xf32>
    %72 = arith.addf %52, %71 : vector<16x16xf32>
    %73 = vector.broadcast %59 : vector<1x16xf32> to vector<16x16xf32>
    %74 = arith.addf %72, %73 : vector<16x16xf32>
    %c0_54 = arith.constant 0 : index
    %c0_55 = arith.constant 0 : index
    %75 = vector.load %arg20[%c0_54, %c0_55] : memref<256x256xbf16, #tpu.memory_space<vmem>>, vector<256x256xbf16>
    %c0_56 = arith.constant 0 : index
    %c0_57 = arith.constant 0 : index
    %76 = vector.load %arg21[%c0_56, %c0_57] : memref<1x256xf32, #tpu.memory_space<vmem>>, vector<1x256xf32>
    %c0_58 = arith.constant 0 : index
    %c0_59 = arith.constant 0 : index
    %77 = vector.load %arg22[%c0_58, %c0_59] : memref<256x16xbf16, #tpu.memory_space<vmem>>, vector<256x16xbf16>
    %c0_60 = arith.constant 0 : index
    %c0_61 = arith.constant 0 : index
    %78 = vector.load %arg23[%c0_60, %c0_61] : memref<1x16xf32, #tpu.memory_space<vmem>>, vector<1x16xf32>
    %79 = arith.truncf %69 : vector<16x256xf32> to vector<16x256xbf16>
    %cst_62 = arith.constant dense<0.000000e+00> : vector<16x256xf32>
    %80 = tpu.matmul %79, %75, %cst_62 {dimension_numbers = #tpu.dot_dimension_numbers<[1], [0], [0], [1], [0, 0, 1, 1], [], []>} : vector<16x256xbf16>, vector<256x256xbf16>, vector<16x256xf32> -> vector<16x256xf32>
    %81 = vector.broadcast %76 : vector<1x256xf32> to vector<16x256xf32>
    %82 = arith.addf %80, %81 : vector<16x256xf32>
    %cst_63 = arith.constant 0.000000e+00 : f32
    %83 = vector.broadcast %cst_63 : f32 to vector<16x256xf32>
    %84 = arith.maximumf %82, %83 : vector<16x256xf32>
    %85 = arith.truncf %34 : vector<16x16xf32> to vector<16x16xbf16>
    %86 = arith.truncf %84 : vector<16x256xf32> to vector<16x256xbf16>
    %cst_64 = arith.constant dense<0.000000e+00> : vector<16x256xf32>
    %87 = tpu.matmul %85, %86, %cst_64 {dimension_numbers = #tpu.dot_dimension_numbers<[1], [0], [0], [1], [0, 0, 1, 1], [], []>} : vector<16x16xbf16>, vector<16x256xbf16>, vector<16x256xf32> -> vector<16x256xf32>
    %88 = arith.addf %69, %87 : vector<16x256xf32>
    %89 = arith.truncf %88 : vector<16x256xf32> to vector<16x256xbf16>
    %cst_65 = arith.constant dense<0.000000e+00> : vector<16x16xf32>
    %90 = tpu.matmul %89, %77, %cst_65 {dimension_numbers = #tpu.dot_dimension_numbers<[1], [0], [0], [1], [0, 0, 1, 1], [], []>} : vector<16x256xbf16>, vector<256x16xbf16>, vector<16x16xf32> -> vector<16x16xf32>
    %91 = arith.addf %74, %90 : vector<16x16xf32>
    %92 = vector.broadcast %78 : vector<1x16xf32> to vector<16x16xf32>
    %93 = arith.addf %91, %92 : vector<16x16xf32>
    %c0_66 = arith.constant 0 : index
    %c0_67 = arith.constant 0 : index
    %94 = vector.load %arg24[%c0_66, %c0_67] : memref<128x128xbf16, #tpu.memory_space<vmem>>, vector<128x128xbf16>
    %c0_68 = arith.constant 0 : index
    %c0_69 = arith.constant 0 : index
    %95 = vector.load %arg25[%c0_68, %c0_69] : memref<1x128xf32, #tpu.memory_space<vmem>>, vector<1x128xf32>
    %c0_70 = arith.constant 0 : index
    %c0_71 = arith.constant 0 : index
    %96 = vector.load %arg26[%c0_70, %c0_71] : memref<128x16xbf16, #tpu.memory_space<vmem>>, vector<128x16xbf16>
    %c0_72 = arith.constant 0 : index
    %c0_73 = arith.constant 0 : index
    %97 = vector.load %arg27[%c0_72, %c0_73] : memref<1x16xf32, #tpu.memory_space<vmem>>, vector<1x16xf32>
    %98 = arith.truncf %55 : vector<16x128xf32> to vector<16x128xbf16>
    %cst_74 = arith.constant dense<0.000000e+00> : vector<16x128xf32>
    %99 = tpu.matmul %98, %94, %cst_74 {dimension_numbers = #tpu.dot_dimension_numbers<[1], [0], [0], [1], [0, 0, 1, 1], [], []>} : vector<16x128xbf16>, vector<128x128xbf16>, vector<16x128xf32> -> vector<16x128xf32>
    %100 = vector.broadcast %95 : vector<1x128xf32> to vector<16x128xf32>
    %101 = arith.addf %99, %100 : vector<16x128xf32>
    %cst_75 = arith.constant 0.000000e+00 : f32
    %102 = vector.broadcast %cst_75 : f32 to vector<16x128xf32>
    %103 = arith.maximumf %101, %102 : vector<16x128xf32>
    %104 = arith.truncf %34 : vector<16x16xf32> to vector<16x16xbf16>
    %105 = arith.truncf %103 : vector<16x128xf32> to vector<16x128xbf16>
    %cst_76 = arith.constant dense<0.000000e+00> : vector<16x128xf32>
    %106 = tpu.matmul %104, %105, %cst_76 {dimension_numbers = #tpu.dot_dimension_numbers<[1], [0], [0], [1], [0, 0, 1, 1], [], []>} : vector<16x16xbf16>, vector<16x128xbf16>, vector<16x128xf32> -> vector<16x128xf32>
    %107 = arith.addf %55, %106 : vector<16x128xf32>
    %108 = arith.truncf %107 : vector<16x128xf32> to vector<16x128xbf16>
    %cst_77 = arith.constant dense<0.000000e+00> : vector<16x16xf32>
    %109 = tpu.matmul %108, %96, %cst_77 {dimension_numbers = #tpu.dot_dimension_numbers<[1], [0], [0], [1], [0, 0, 1, 1], [], []>} : vector<16x128xbf16>, vector<128x16xbf16>, vector<16x16xf32> -> vector<16x16xf32>
    %110 = arith.addf %93, %109 : vector<16x16xf32>
    %111 = vector.broadcast %97 : vector<1x16xf32> to vector<16x16xf32>
    %112 = arith.addf %110, %111 : vector<16x16xf32>
    %c0_78 = arith.constant 0 : index
    %c0_79 = arith.constant 0 : index
    %113 = vector.load %arg28[%c0_78, %c0_79] : memref<16x32xbf16, #tpu.memory_space<vmem>>, vector<16x32xbf16>
    %c0_80 = arith.constant 0 : index
    %c0_81 = arith.constant 0 : index
    %114 = vector.load %arg29[%c0_80, %c0_81] : memref<1x32xf32, #tpu.memory_space<vmem>>, vector<1x32xf32>
    %c0_82 = arith.constant 0 : index
    %c0_83 = arith.constant 0 : index
    %115 = vector.load %arg30[%c0_82, %c0_83] : memref<32x4xbf16, #tpu.memory_space<vmem>>, vector<32x4xbf16>
    %c0_84 = arith.constant 0 : index
    %c0_85 = arith.constant 0 : index
    %116 = vector.load %arg31[%c0_84, %c0_85] : memref<1x4xf32, #tpu.memory_space<vmem>>, vector<1x4xf32>
    %cst_86 = arith.constant 0.000000e+00 : f32
    %117 = vector.broadcast %cst_86 : f32 to vector<16x16xf32>
    %118 = arith.maximumf %112, %117 : vector<16x16xf32>
    %119 = arith.truncf %118 : vector<16x16xf32> to vector<16x16xbf16>
    %cst_87 = arith.constant dense<0.000000e+00> : vector<16x32xf32>
    %120 = tpu.matmul %119, %113, %cst_87 {dimension_numbers = #tpu.dot_dimension_numbers<[1], [0], [0], [1], [0, 0, 1, 1], [], []>} : vector<16x16xbf16>, vector<16x32xbf16>, vector<16x32xf32> -> vector<16x32xf32>
    %121 = vector.broadcast %114 : vector<1x32xf32> to vector<16x32xf32>
    %122 = arith.addf %120, %121 : vector<16x32xf32>
    %cst_88 = arith.constant 0.000000e+00 : f32
    %123 = vector.broadcast %cst_88 : f32 to vector<16x32xf32>
    %124 = arith.maximumf %122, %123 : vector<16x32xf32>
    %125 = arith.truncf %124 : vector<16x32xf32> to vector<16x32xbf16>
    %cst_89 = arith.constant dense<0.000000e+00> : vector<16x4xf32>
    %126 = tpu.matmul %125, %115, %cst_89 {dimension_numbers = #tpu.dot_dimension_numbers<[1], [0], [0], [1], [0, 0, 1, 1], [], []>} : vector<16x32xbf16>, vector<32x4xbf16>, vector<16x4xf32> -> vector<16x4xf32>
    %127 = vector.broadcast %116 : vector<1x4xf32> to vector<16x4xf32>
    %128 = arith.addf %126, %127 : vector<16x4xf32>
    %c0_90 = arith.constant 0 : index
    %c0_91 = arith.constant 0 : index
    %129 = vector.load %arg32[%c0_90, %c0_91] : memref<16x4xf32, #tpu.memory_space<vmem>>, vector<16x4xf32>
    tpu.vector_store %arg32[%c0_90, %c0_91], %128 {strides = array<i32>} : memref<16x4xf32, #tpu.memory_space<vmem>>, vector<16x4xf32>,
    return
  }
}

</mosaic_0001>

<llo_original>
// kernel: tile.11
$region0: #{tile.11}
  %s0 = inlined_call_operand.vmem [shape: f32[16,16,16], index: 0, kind: input, shape index: {}]
  %s1 = inlined_call_operand.vmem [shape: f32[16,256], index: 1, kind: output, shape index: {}]
  %v2 = vld [vmem:[%s0] ss:$8 sm:$0xf]
  %v3 = vld [vmem:[%s0] ss:$8 sm:$0xf0]
  %vm4 = vcmask 1047556
  %v5 = vsel %vm4, %v3, %v2
  %vm6 = vcmask 130048
  %7 = vst.msk [vmem:[%s1] ss:$8 sm:$0x3] %vm6, %v5
  %s8 = scalar_lea.vmem %s1, 4294967281
  %9 = vst.msk [vmem:[%s8] ss:$8 sm:$0xc] %vm6, %v5
  %s10 = scalar_lea.vmem %s1, 4294967266
  %11 = vst.msk [vmem:[%s10] ss:$8 sm:$0x30] %vm6, %v5
  %s12 = scalar_lea.vmem %s1, 4294967251
  %13 = vst.msk [vmem:[%s12] ss:$8 sm:$0xc0] %vm6, %v5
  %s14 = scalar_lea.vmem %s0, 64
  %v15 = vld [vmem:[%s14] ss:$8 sm:$0xf]
  %s16 = scalar_lea.vmem %s0, 64
  %v17 = vld [vmem:[%s16] ss:$8 sm:$0xf0]
  %vm18 = vcmask 1047556
  %v19 = vsel %vm18, %v17, %v15
  %vm20 = vcmask 130048
  %s21 = scalar_lea.vmem %s1, 4
  %22 = vst.msk [vmem:[%s21] ss:$8 sm:$0x3] %vm20, %v19
  %s23 = scalar_lea.vmem %s1, 4294967285
  %24 = vst.msk [vmem:[%s23] ss:$8 sm:$0xc] %vm20, %v19
  %s25 = scalar_lea.vmem %s1, 4294967270
  %26 = vst.msk [vmem:[%s25] ss:$8 sm:$0x30] %vm20, %v19
  %s27 = scalar_lea.vmem %s1, 4294967255
  %28 = vst.msk [vmem:[%s27] ss:$8 sm:$0xc0] %vm20, %v19
  %s29 = scalar_lea.vmem %s0, 128
  %v30 = vld [vmem:[%s29] ss:$8 sm:$0xf]
  %s31 = scalar_lea.vmem %s0, 128
  %v32 = vld [vmem:[%s31] ss:$8 sm:$0xf0]
  %vm33 = vcmask 1047556
  %v34 = vsel %vm33, %v32, %v30
  %vm35 = vcmask 130048
  %s36 = scalar_lea.vmem %s1, 16
  %37 = vst.msk [vmem:[%s36] ss:$8 sm:$0x3] %vm35, %v34
  %s38 = scalar_lea.vmem %s1, 1
  %39 = vst.msk [vmem:[%s38] ss:$8 sm:$0xc] %vm35, %v34
  %s40 = scalar_lea.vmem %s1, 4294967282
  %41 = vst.msk [vmem:[%s40] ss:$8 sm:$0x30] %vm35, %v34
  %s42 = scalar_lea.vmem %s1, 4294967267
  %43 = vst.msk [vmem:[%s42] ss:$8 sm:$0xc0] %vm35, %v34
  %s44 = scalar_lea.vmem %s0, 192
  %v45 = vld [vmem:[%s44] ss:$8 sm:$0xf]
  %s46 = scalar_lea.vmem %s0, 192
  %v47 = vld [vmem:[%s46] ss:$8 sm:$0xf0]
  %vm48 = vcmask 1047556
  %v49 = vsel %vm48, %v47, %v45
  %vm50 = vcmask 130048
  %s51 = scalar_lea.vmem %s1, 20
  %52 = vst.msk [vmem:[%s51] ss:$8 sm:$0x3] %vm50, %v49
  %s53 = scalar_lea.vmem %s1, 5
  %54 = vst.msk [vmem:[%s53] ss:$8 sm:$0xc] %vm50, %v49
  %s55 = scalar_lea.vmem %s1, 4294967286
  %56 = vst.msk [vmem:[%s55] ss:$8 sm:$0x30] %vm50, %v49
  %s57 = scalar_lea.vmem %s1, 4294967271
  %58 = vst.msk [vmem:[%s57] ss:$8 sm:$0xc0] %vm50, %v49
  %s59 = scalar_lea.vmem %s0, 7
  %s60 = smov 3
  %v61 = vld [vmem:[%s59] ss:$16 sm:%s60]
  %s62 = scalar_lea.vmem %s0, 7
  %s63 = smov 12
  %v64 = vld [vmem:[%s62] ss:$16 sm:%s63]
  %vm65 = vcmask 1043458
  %v66 = vsel %vm65, %v64, %v61
  %s67 = scalar_lea.vmem %s0, 7
  %s68 = smov 48
  %v69 = vld [vmem:[%s67] ss:$16 sm:%s68]
  %vm70 = vcmask 1045508
  %v71 = vsel %vm70, %v69, %v66
  %s72 = scalar_lea.vmem %s0, 7
  %s73 = smov 192
  %v74 = vld [vmem:[%s72] ss:$16 sm:%s73]
  %vm75 = vcmask 1047558
  %v76 = vsel %vm75, %v74, %v71
  %77 = vrot.lane.b32.xlu0 %v76, 112
  %v78 = vpop.permute.xlu0 %77
  %vm79 = vcmask 1048448
  %80 = vst.msk [vmem:[%s1] sm:$0xff] %vm79, %v78
  %s81 = scalar_lea.vmem %s0, 15
  %s82 = smov 3
  %v83 = vld [vmem:[%s81] ss:$16 sm:%s82]
  %s84 = scalar_lea.vmem %s0, 15
  %s85 = smov 12
  %v86 = vld [vmem:[%s84] ss:$16 sm:%s85]
  %vm87 = vcmask 1043458
  %v88 = vsel %vm87, %v86, %v83
  %s89 = scalar_lea.vmem %s0, 15
  %s90 = smov 48
  %v91 = vld [vmem:[%s89] ss:$16 sm:%s90]
  %vm92 = vcmask 1045508
  %v93 = vsel %vm92, %v91, %v88
  %s94 = scalar_lea.vmem %s0, 15
  %s95 = smov 192
  %v96 = vld [vmem:[%s94] ss:$16 sm:%s95]
  %vm97 = vcmask 1047558
  %v98 = vsel %vm97, %v96, %v93
  %99 = vrot.lane.b32.xlu0 %v98, 112
  %v100 = vpop.permute.xlu0 %99
  %vm101 = vcmask 1048448
  %s102 = scalar_lea.vmem %s1, 8
  %103 = vst.msk [vmem:[%s102] sm:$0xff] %vm101, %v100
  %s104 = scalar_lea.vmem %s0, 135
  %s105 = smov 3
  %v106 = vld [vmem:[%s104] ss:$16 sm:%s105]
  %s107 = scalar_lea.vmem %s0, 135
  %s108 = smov 12
  %v109 = vld [vmem:[%s107] ss:$16 sm:%s108]
  %vm110 = vcmask 1043458
  %v111 = vsel %vm110, %v109, %v106
  %s112 = scalar_lea.vmem %s0, 135
  %s113 = smov 48
  %v114 = vld [vmem:[%s112] ss:$16 sm:%s113]
  %vm115 = vcmask 1045508
  %v116 = vsel %vm115, %v114, %v111
  %s117 = scalar_lea.vmem %s0, 135
  %s118 = smov 192
  %v119 = vld [vmem:[%s117] ss:$16 sm:%s118]
  %vm120 = vcmask 1047558
  %v121 = vsel %vm120, %v119, %v116
  %122 = vrot.lane.b32.xlu0 %v121, 112
  %v123 = vpop.permute.xlu0 %122
  %vm124 = vcmask 1048448
  %s125 = scalar_lea.vmem %s1, 16
  %126 = vst.msk [vmem:[%s125] sm:$0xff] %vm124, %v123
  %s127 = scalar_lea.vmem %s0, 143
  %s128 = smov 3
  %v129 = vld [vmem:[%s127] ss:$16 sm:%s128]
  %s130 = scalar_lea.vmem %s0, 143
  %s131 = smov 12
  %v132 = vld [vmem:[%s130] ss:$16 sm:%s131]
  %vm133 = vcmask 1043458
  %v134 = vsel %vm133, %v132, %v129
  %s135 = scalar_lea.vmem %s0, 143
  %s136 = smov 48
  %v137 = vld [vmem:[%s135] ss:$16 sm:%s136]
  %vm138 = vcmask 1045508
  %v139 = vsel %vm138, %v137, %v134
  %s140 = scalar_lea.vmem %s0, 143
  %s141 = smov 192
  %v142 = vld [vmem:[%s140] ss:$16 sm:%s141]
  %vm143 = vcmask 1047558
  %v144 = vsel %vm143, %v142, %v139
  %145 = vrot.lane.b32.xlu0 %v144, 112
  %v146 = vpop.permute.xlu0 %145
  %vm147 = vcmask 1048448
  %s148 = scalar_lea.vmem %s1, 24
  %149 = vst.msk [vmem:[%s148] sm:$0xff] %vm147, %v146
  %s150 = scalar_lea.vmem %s0, 6
  %s151 = smov 3
  %v152 = vld [vmem:[%s150] ss:$16 sm:%s151]
  %s153 = scalar_lea.vmem %s0, 6
  %s154 = smov 12
  %v155 = vld [vmem:[%s153] ss:$16 sm:%s154]
  %vm156 = vcmask 1043458
  %v157 = vsel %vm156, %v155, %v152
  %s158 = scalar_lea.vmem %s0, 6
  %s159 = smov 48
  %v160 = vld [vmem:[%s158] ss:$16 sm:%s159]
  %vm161 = vcmask 1045508
  %v162 = vsel %vm161, %v160, %v157
  %s163 = scalar_lea.vmem %s0, 6
  %s164 = smov 192
  %v165 = vld [vmem:[%s163] ss:$16 sm:%s164]
  %vm166 = vcmask 1047558
  %v167 = vsel %vm166, %v165, %v162
  %168 = vrot.lane.b32.xlu0 %v167, 96
  %v169 = vpop.permute.xlu0 %168
  %vm170 = vcmask 917248
  %171 = vst.msk [vmem:[%s1] sm:$0xff] %vm170, %v169
  %s172 = scalar_lea.vmem %s0, 14
  %s173 = smov 3
  %v174 = vld [vmem:[%s172] ss:$16 sm:%s173]
  %s175 = scalar_lea.vmem %s0, 14
  %s176 = smov 12
  %v177 = vld [vmem:[%s175] ss:$16 sm:%s176]
  %vm178 = vcmask 1043458
  %v179 = vsel %vm178, %v177, %v174
  %s180 = scalar_lea.vmem %s0, 14
  %s181 = smov 48
  %v182 = vld [vmem:[%s180] ss:$16 sm:%s181]
  %vm183 = vcmask 1045508
  %v184 = vsel %vm183, %v182, %v179
  %s185 = scalar_lea.vmem %s0, 14
  %s186 = smov 192
  %v187 = vld [vmem:[%s185] ss:$16 sm:%s186]
  %vm188 = vcmask 1047558
  %v189 = vsel %vm188, %v187, %v184
  %190 = vrot.lane.b32.xlu0 %v189, 96
  %v191 = vpop.permute.xlu0 %190
  %vm192 = vcmask 917248
  %s193 = scalar_lea.vmem %s1, 8
  %194 = vst.msk [vmem:[%s193] sm:$0xff] %vm192, %v191
  %s195 = scalar_lea.vmem %s0, 134
  %s196 = smov 3
  %v197 = vld [vmem:[%s195] ss:$16 sm:%s196]
  %s198 = scalar_lea.vmem %s0, 134
  %s199 = smov 12
  %v200 = vld [vmem:[%s198] ss:$16 sm:%s199]
  %vm201 = vcmask 1043458
  %v202 = vsel %vm201, %v200, %v197
  %s203 = scalar_lea.vmem %s0, 134
  %s204 = smov 48
  %v205 = vld [vmem:[%s203] ss:$16 sm:%s204]
  %vm206 = vcmask 1045508
  %v207 = vsel %vm206, %v205, %v202
  %s208 = scalar_lea.vmem %s0, 134
  %s209 = smov 192
  %v210 = vld [vmem:[%s208] ss:$16 sm:%s209]
  %vm211 = vcmask 1047558
  %v212 = vsel %vm211, %v210, %v207
  %213 = vrot.lane.b32.xlu0 %v212, 96
  %v214 = vpop.permute.xlu0 %213
  %vm215 = vcmask 917248
  %s216 = scalar_lea.vmem %s1, 16
  %217 = vst.msk [vmem:[%s216] sm:$0xff] %vm215, %v214
  %s218 = scalar_lea.vmem %s0, 142
  %s219 = smov 3
  %v220 = vld [vmem:[%s218] ss:$16 sm:%s219]
  %s221 = scalar_lea.vmem %s0, 142
  %s222 = smov 12
  %v223 = vld [vmem:[%s221] ss:$16 sm:%s222]
  %vm224 = vcmask 1043458
  %v225 = vsel %vm224, %v223, %v220
  %s226 = scalar_lea.vmem %s0, 142
  %s227 = smov 48
  %v228 = vld [vmem:[%s226] ss:$16 sm:%s227]
  %vm229 = vcmask 1045508
  %v230 = vsel %vm229, %v228, %v225
  %s231 = scalar_lea.vmem %s0, 142
  %s232 = smov 192
  %v233 = vld [vmem:[%s231] ss:$16 sm:%s232]
  %vm234 = vcmask 1047558
  %v235 = vsel %vm234, %v233, %v230
  %236 = vrot.lane.b32.xlu0 %v235, 96
  %v237 = vpop.permute.xlu0 %236
  %vm238 = vcmask 917248
  %s239 = scalar_lea.vmem %s1, 24
  %240 = vst.msk [vmem:[%s239] sm:$0xff] %vm238, %v237
  %s241 = scalar_lea.vmem %s0, 5
  %s242 = smov 3
  %v243 = vld [vmem:[%s241] ss:$16 sm:%s242]
  %s244 = scalar_lea.vmem %s0, 5
  %s245 = smov 12
  %v246 = vld [vmem:[%s244] ss:$16 sm:%s245]
  %vm247 = vcmask 1043458
  %v248 = vsel %vm247, %v246, %v243
  %s249 = scalar_lea.vmem %s0, 5
  %s250 = smov 48
  %v251 = vld [vmem:[%s249] ss:$16 sm:%s250]
  %vm252 = vcmask 1045508
  %v253 = vsel %vm252, %v251, %v248
  %s254 = scalar_lea.vmem %s0, 5
  %s255 = smov 192
  %v256 = vld [vmem:[%s254] ss:$16 sm:%s255]
  %vm257 = vcmask 1047558
  %v258 = vsel %vm257, %v256, %v253
  %259 = vrot.lane.b32.xlu0 %v258, 80
  %v260 = vpop.permute.xlu0 %259
  %vm261 = vcmask 786048
  %262 = vst.msk [vmem:[%s1] sm:$0xff] %vm261, %v260
  %s263 = scalar_lea.vmem %s0, 13
  %s264 = smov 3
  %v265 = vld [vmem:[%s263] ss:$16 sm:%s264]
  %s266 = scalar_lea.vmem %s0, 13
  %s267 = smov 12
  %v268 = vld [vmem:[%s266] ss:$16 sm:%s267]
  %vm269 = vcmask 1043458
  %v270 = vsel %vm269, %v268, %v265
  %s271 = scalar_lea.vmem %s0, 13
  %s272 = smov 48
  %v273 = vld [vmem:[%s271] ss:$16 sm:%s272]
  %vm274 = vcmask 1045508
  %v275 = vsel %vm274, %v273, %v270
  %s276 = scalar_lea.vmem %s0, 13
  %s277 = smov 192
  %v278 = vld [vmem:[%s276] ss:$16 sm:%s277]
  %vm279 = vcmask 1047558
  %v280 = vsel %vm279, %v278, %v275
  %281 = vrot.lane.b32.xlu0 %v280, 80
  %v282 = vpop.permute.xlu0 %281
  %vm283 = vcmask 786048
  %s284 = scalar_lea.vmem %s1, 8
  %285 = vst.msk [vmem:[%s284] sm:$0xff] %vm283, %v282
  %s286 = scalar_lea.vmem %s0, 133
  %s287 = smov 3
  %v288 = vld [vmem:[%s286] ss:$16 sm:%s287]
  %s289 = scalar_lea.vmem %s0, 133
  %s290 = smov 12
  %v291 = vld [vmem:[%s289] ss:$16 sm:%s290]
  %vm292 = vcmask 1043458
  %v293 = vsel %vm292, %v291, %v288
  %s294 = scalar_lea.vmem %s0, 133
  %s295 = smov 48
  %v296 = vld [vmem:[%s294] ss:$16 sm:%s295]
  %vm297 = vcmask 1045508
  %v298 = vsel %vm297, %v296, %v293
  %s299 = scalar_lea.vmem %s0, 133
  %s300 = smov 192
  %v301 = vld [vmem:[%s299] ss:$16 sm:%s300]
  %vm302 = vcmask 1047558
  %v303 = vsel %vm302, %v301, %v298
  %304 = vrot.lane.b32.xlu0 %v303, 80
  %v305 = vpop.permute.xlu0 %304
  %vm306 = vcmask 786048
  %s307 = scalar_lea.vmem %s1, 16
  %308 = vst.msk [vmem:[%s307] sm:$0xff] %vm306, %v305
  %s309 = scalar_lea.vmem %s0, 141
  %s310 = smov 3
  %v311 = vld [vmem:[%s309] ss:$16 sm:%s310]
  %s312 = scalar_lea.vmem %s0, 141
  %s313 = smov 12
  %v314 = vld [vmem:[%s312] ss:$16 sm:%s313]
  %vm315 = vcmask 1043458
  %v316 = vsel %vm315, %v314, %v311
  %s317 = scalar_lea.vmem %s0, 141
  %s318 = smov 48
  %v319 = vld [vmem:[%s317] ss:$16 sm:%s318]
  %vm320 = vcmask 1045508
  %v321 = vsel %vm320, %v319, %v316
  %s322 = scalar_lea.vmem %s0, 141
  %s323 = smov 192
  %v324 = vld [vmem:[%s322] ss:$16 sm:%s323]
  %vm325 = vcmask 1047558
  %v326 = vsel %vm325, %v324, %v321
  %327 = vrot.lane.b32.xlu0 %v326, 80
  %v328 = vpop.permute.xlu0 %327
  %vm329 = vcmask 786048
  %s330 = scalar_lea.vmem %s1, 24
  %331 = vst.msk [vmem:[%s330] sm:$0xff] %vm329, %v328
  %s332 = scalar_lea.vmem %s0, 4
  %s333 = smov 3
  %v334 = vld [vmem:[%s332] ss:$16 sm:%s333]
  %s335 = scalar_lea.vmem %s0, 4
  %s336 = smov 12
  %v337 = vld [vmem:[%s335] ss:$16 sm:%s336]
  %vm338 = vcmask 1043458
  %v339 = vsel %vm338, %v337, %v334
  %s340 = scalar_lea.vmem %s0, 4
  %s341 = smov 48
  %v342 = vld [vmem:[%s340] ss:$16 sm:%s341]
  %vm343 = vcmask 1045508
  %v344 = vsel %vm343, %v342, %v339
  %s345 = scalar_lea.vmem %s0, 4
  %s346 = smov 192
  %v347 = vld [vmem:[%s345] ss:$16 sm:%s346]
  %vm348 = vcmask 1047558
  %v349 = vsel %vm348, %v347, %v344
  %350 = vrot.lane.b32.xlu0 %v349, 64
  %v351 = vpop.permute.xlu0 %350
  %vm352 = vcmask 654848
  %353 = vst.msk [vmem:[%s1] sm:$0xff] %vm352, %v351
  %s354 = scalar_lea.vmem %s0, 12
  %s355 = smov 3
  %v356 = vld [vmem:[%s354] ss:$16 sm:%s355]
  %s357 = scalar_lea.vmem %s0, 12
  %s358 = smov 12
  %v359 = vld [vmem:[%s357] ss:$16 sm:%s358]
  %vm360 = vcmask 1043458
  %v361 = vsel %vm360, %v359, %v356
  %s362 = scalar_lea.vmem %s0, 12
  %s363 = smov 48
  %v364 = vld [vmem:[%s362] ss:$16 sm:%s363]
  %vm365 = vcmask 1045508
  %v366 = vsel %vm365, %v364, %v361
  %s367 = scalar_lea.vmem %s0, 12
  %s368 = smov 192
  %v369 = vld [vmem:[%s367] ss:$16 sm:%s368]
  %vm370 = vcmask 1047558
  %v371 = vsel %vm370, %v369, %v366
  %372 = vrot.lane.b32.xlu0 %v371, 64
  %v373 = vpop.permute.xlu0 %372
  %vm374 = vcmask 654848
  %s375 = scalar_lea.vmem %s1, 8
  %376 = vst.msk [vmem:[%s375] sm:$0xff] %vm374, %v373
  %s377 = scalar_lea.vmem %s0, 132
  %s378 = smov 3
  %v379 = vld [vmem:[%s377] ss:$16 sm:%s378]
  %s380 = scalar_lea.vmem %s0, 132
  %s381 = smov 12
  %v382 = vld [vmem:[%s380] ss:$16 sm:%s381]
  %vm383 = vcmask 1043458
  %v384 = vsel %vm383, %v382, %v379
  %s385 = scalar_lea.vmem %s0, 132
  %s386 = smov 48
  %v387 = vld [vmem:[%s385] ss:$16 sm:%s386]
  %vm388 = vcmask 1045508
  %v389 = vsel %vm388, %v387, %v384
  %s390 = scalar_lea.vmem %s0, 132
  %s391 = smov 192
  %v392 = vld [vmem:[%s390] ss:$16 sm:%s391]
  %vm393 = vcmask 1047558
  %v394 = vsel %vm393, %v392, %v389
  %395 = vrot.lane.b32.xlu0 %v394, 64
  %v396 = vpop.permute.xlu0 %395
  %vm397 = vcmask 654848
  %s398 = scalar_lea.vmem %s1, 16
  %399 = vst.msk [vmem:[%s398] sm:$0xff] %vm397, %v396
  %s400 = scalar_lea.vmem %s0, 140
  %s401 = smov 3
  %v402 = vld [vmem:[%s400] ss:$16 sm:%s401]
  %s403 = scalar_lea.vmem %s0, 140
  %s404 = smov 12
  %v405 = vld [vmem:[%s403] ss:$16 sm:%s404]
  %vm406 = vcmask 1043458
  %v407 = vsel %vm406, %v405, %v402
  %s408 = scalar_lea.vmem %s0, 140
  %s409 = smov 48
  %v410 = vld [vmem:[%s408] ss:$16 sm:%s409]
  %vm411 = vcmask 1045508
  %v412 = vsel %vm411, %v410, %v407
  %s413 = scalar_lea.vmem %s0, 140
  %s414 = smov 192
  %v415 = vld [vmem:[%s413] ss:$16 sm:%s414]
  %vm416 = vcmask 1047558
  %v417 = vsel %vm416, %v415, %v412
  %418 = vrot.lane.b32.xlu0 %v417, 64
  %v419 = vpop.permute.xlu0 %418
  %vm420 = vcmask 654848
  %s421 = scalar_lea.vmem %s1, 24
  %422 = vst.msk [vmem:[%s421] sm:$0xff] %vm420, %v419
  %s423 = scalar_lea.vmem %s0, 3
  %s424 = smov 3
  %v425 = vld [vmem:[%s423] ss:$16 sm:%s424]
  %s426 = scalar_lea.vmem %s0, 3
  %s427 = smov 12
  %v428 = vld [vmem:[%s426] ss:$16 sm:%s427]
  %vm429 = vcmask 1043458
  %v430 = vsel %vm429, %v428, %v425
  %s431 = scalar_lea.vmem %s0, 3
  %s432 = smov 48
  %v433 = vld [vmem:[%s431] ss:$16 sm:%s432]
  %vm434 = vcmask 1045508
  %v435 = vsel %vm434, %v433, %v430
  %s436 = scalar_lea.vmem %s0, 3
  %s437 = smov 192
  %v438 = vld [vmem:[%s436] ss:$16 sm:%s437]
  %vm439 = vcmask 1047558
  %v440 = vsel %vm439, %v438, %v435
  %441 = vrot.lane.b32.xlu0 %v440, 48
  %v442 = vpop.permute.xlu0 %441
  %vm443 = vcmask 523648
  %444 = vst.msk [vmem:[%s1] sm:$0xff] %vm443, %v442
  %s445 = scalar_lea.vmem %s0, 11
  %s446 = smov 3
  %v447 = vld [vmem:[%s445] ss:$16 sm:%s446]
  %s448 = scalar_lea.vmem %s0, 11
  %s449 = smov 12
  %v450 = vld [vmem:[%s448] ss:$16 sm:%s449]
  %vm451 = vcmask 1043458
  %v452 = vsel %vm451, %v450, %v447
  %s453 = scalar_lea.vmem %s0, 11
  %s454 = smov 48
  %v455 = vld [vmem:[%s453] ss:$16 sm:%s454]
  %vm456 = vcmask 1045508
  %v457 = vsel %vm456, %v455, %v452
  %s458 = scalar_lea.vmem %s0, 11
  %s459 = smov 192
  %v460 = vld [vmem:[%s458] ss:$16 sm:%s459]
  %vm461 = vcmask 1047558
  %v462 = vsel %vm461, %v460, %v457
  %463 = vrot.lane.b32.xlu0 %v462, 48
  %v464 = vpop.permute.xlu0 %463
  %vm465 = vcmask 523648
  %s466 = scalar_lea.vmem %s1, 8
  %467 = vst.msk [vmem:[%s466] sm:$0xff] %vm465, %v464
  %s468 = scalar_lea.vmem %s0, 131
  %s469 = smov 3
  %v470 = vld [vmem:[%s468] ss:$16 sm:%s469]
  %s471 = scalar_lea.vmem %s0, 131
  %s472 = smov 12
  %v473 = vld [vmem:[%s471] ss:$16 sm:%s472]
  %vm474 = vcmask 1043458
  %v475 = vsel %vm474, %v473, %v470
  %s476 = scalar_lea.vmem %s0, 131
  %s477 = smov 48
  %v478 = vld [vmem:[%s476] ss:$16 sm:%s477]
  %vm479 = vcmask 1045508
  %v480 = vsel %vm479, %v478, %v475
  %s481 = scalar_lea.vmem %s0, 131
  %s482 = smov 192
  %v483 = vld [vmem:[%s481] ss:$16 sm:%s482]
  %vm484 = vcmask 1047558
  %v485 = vsel %vm484, %v483, %v480
  %486 = vrot.lane.b32.xlu0 %v485, 48
  %v487 = vpop.permute.xlu0 %486
  %vm488 = vcmask 523648
  %s489 = scalar_lea.vmem %s1, 16
  %490 = vst.msk [vmem:[%s489] sm:$0xff] %vm488, %v487
  %s491 = scalar_lea.vmem %s0, 139
  %s492 = smov 3
  %v493 = vld [vmem:[%s491] ss:$16 sm:%s492]
  %s494 = scalar_lea.vmem %s0, 139
  %s495 = smov 12
  %v496 = vld [vmem:[%s494] ss:$16 sm:%s495]
  %vm497 = vcmask 1043458
  %v498 = vsel %vm497, %v496, %v493
  %s499 = scalar_lea.vmem %s0, 139
  %s500 = smov 48
  %v501 = vld [vmem:[%s499] ss:$16 sm:%s500]
  %vm502 = vcmask 1045508
  %v503 = vsel %vm502, %v501, %v498
  %s504 = scalar_lea.vmem %s0, 139
  %s505 = smov 192
  %v506 = vld [vmem:[%s504] ss:$16 sm:%s505]
  %vm507 = vcmask 1047558
  %v508 = vsel %vm507, %v506, %v503
  %509 = vrot.lane.b32.xlu0 %v508, 48
  %v510 = vpop.permute.xlu0 %509
  %vm511 = vcmask 523648
  %s512 = scalar_lea.vmem %s1, 24
  %513 = vst.msk [vmem:[%s512] sm:$0xff] %vm511, %v510
  %s514 = scalar_lea.vmem %s0, 2
  %s515 = smov 3
  %v516 = vld [vmem:[%s514] ss:$16 sm:%s515]
  %s517 = scalar_lea.vmem %s0, 2
  %s518 = smov 12
  %v519 = vld [vmem:[%s517] ss:$16 sm:%s518]
  %vm520 = vcmask 1043458
  %v521 = vsel %vm520, %v519, %v516
  %s522 = scalar_lea.vmem %s0, 2
  %s523 = smov 48
  %v524 = vld [vmem:[%s522] ss:$16 sm:%s523]
  %vm525 = vcmask 1045508
  %v526 = vsel %vm525, %v524, %v521
  %s527 = scalar_lea.vmem %s0, 2
  %s528 = smov 192
  %v529 = vld [vmem:[%s527] ss:$16 sm:%s528]
  %vm530 = vcmask 1047558
  %v531 = vsel %vm530, %v529, %v526
  %532 = vrot.lane.b32.xlu0 %v531, 32
  %v533 = vpop.permute.xlu0 %532
  %vm534 = vcmask 392448
  %535 = vst.msk [vmem:[%s1] sm:$0xff] %vm534, %v533
  %s536 = scalar_lea.vmem %s0, 10
  %s537 = smov 3
  %v538 = vld [vmem:[%s536] ss:$16 sm:%s537]
  %s539 = scalar_lea.vmem %s0, 10
  %s540 = smov 12
  %v541 = vld [vmem:[%s539] ss:$16 sm:%s540]
  %vm542 = vcmask 1043458
  %v543 = vsel %vm542, %v541, %v538
  %s544 = scalar_lea.vmem %s0, 10
  %s545 = smov 48
  %v546 = vld [vmem:[%s544] ss:$16 sm:%s545]
  %vm547 = vcmask 1045508
  %v548 = vsel %vm547, %v546, %v543
  %s549 = scalar_lea.vmem %s0, 10
  %s550 = smov 192
  %v551 = vld [vmem:[%s549] ss:$16 sm:%s550]
  %vm552 = vcmask 1047558
  %v553 = vsel %vm552, %v551, %v548
  %554 = vrot.lane.b32.xlu0 %v553, 32
  %v555 = vpop.permute.xlu0 %554
  %vm556 = vcmask 392448
  %s557 = scalar_lea.vmem %s1, 8
  %558 = vst.msk [vmem:[%s557] sm:$0xff] %vm556, %v555
  %s559 = scalar_lea.vmem %s0, 130
  %s560 = smov 3
  %v561 = vld [vmem:[%s559] ss:$16 sm:%s560]
  %s562 = scalar_lea.vmem %s0, 130
  %s563 = smov 12
  %v564 = vld [vmem:[%s562] ss:$16 sm:%s563]
  %vm565 = vcmask 1043458
  %v566 = vsel %vm565, %v564, %v561
  %s567 = scalar_lea.vmem %s0, 130
  %s568 = smov 48
  %v569 = vld [vmem:[%s567] ss:$16 sm:%s568]
  %vm570 = vcmask 1045508
  %v571 = vsel %vm570, %v569, %v566
  %s572 = scalar_lea.vmem %s0, 130
  %s573 = smov 192
  %v574 = vld [vmem:[%s572] ss:$16 sm:%s573]
  %vm575 = vcmask 1047558
  %v576 = vsel %vm575, %v574, %v571
  %577 = vrot.lane.b32.xlu0 %v576, 32
  %v578 = vpop.permute.xlu0 %577
  %vm579 = vcmask 392448
  %s580 = scalar_lea.vmem %s1, 16
  %581 = vst.msk [vmem:[%s580] sm:$0xff] %vm579, %v578
  %s582 = scalar_lea.vmem %s0, 138
  %s583 = smov 3
  %v584 = vld [vmem:[%s582] ss:$16 sm:%s583]
  %s585 = scalar_lea.vmem %s0, 138
  %s586 = smov 12
  %v587 = vld [vmem:[%s585] ss:$16 sm:%s586]
  %vm588 = vcmask 1043458
  %v589 = vsel %vm588, %v587, %v584
  %s590 = scalar_lea.vmem %s0, 138
  %s591 = smov 48
  %v592 = vld [vmem:[%s590] ss:$16 sm:%s591]
  %vm593 = vcmask 1045508
  %v594 = vsel %vm593, %v592, %v589
  %s595 = scalar_lea.vmem %s0, 138
  %s596 = smov 192
  %v597 = vld [vmem:[%s595] ss:$16 sm:%s596]
  %vm598 = vcmask 1047558
  %v599 = vsel %vm598, %v597, %v594
  %600 = vrot.lane.b32.xlu0 %v599, 32
  %v601 = vpop.permute.xlu0 %600
  %vm602 = vcmask 392448
  %s603 = scalar_lea.vmem %s1, 24
  %604 = vst.msk [vmem:[%s603] sm:$0xff] %vm602, %v601
  %s605 = scalar_lea.vmem %s0, 1
  %s606 = smov 3
  %v607 = vld [vmem:[%s605] ss:$16 sm:%s606]
  %s608 = scalar_lea.vmem %s0, 1
  %s609 = smov 12
  %v610 = vld [vmem:[%s608] ss:$16 sm:%s609]
  %vm611 = vcmask 1043458
  %v612 = vsel %vm611, %v610, %v607
  %s613 = scalar_lea.vmem %s0, 1
  %s614 = smov 48
  %v615 = vld [vmem:[%s613] ss:$16 sm:%s614]
  %vm616 = vcmask 1045508
  %v617 = vsel %vm616, %v615, %v612
  %s618 = scalar_lea.vmem %s0, 1
  %s619 = smov 192
  %v620 = vld [vmem:[%s618] ss:$16 sm:%s619]
  %vm621 = vcmask 1047558
  %v622 = vsel %vm621, %v620, %v617
  %623 = vrot.lane.b32.xlu0 %v622, 16
  %v624 = vpop.permute.xlu0 %623
  %vm625 = vcmask 261248
  %626 = vst.msk [vmem:[%s1] sm:$0xff] %vm625, %v624
  %s627 = scalar_lea.vmem %s0, 9
  %s628 = smov 3
  %v629 = vld [vmem:[%s627] ss:$16 sm:%s628]
  %s630 = scalar_lea.vmem %s0, 9
  %s631 = smov 12
  %v632 = vld [vmem:[%s630] ss:$16 sm:%s631]
  %vm633 = vcmask 1043458
  %v634 = vsel %vm633, %v632, %v629
  %s635 = scalar_lea.vmem %s0, 9
  %s636 = smov 48
  %v637 = vld [vmem:[%s635] ss:$16 sm:%s636]
  %vm638 = vcmask 1045508
  %v639 = vsel %vm638, %v637, %v634
  %s640 = scalar_lea.vmem %s0, 9
  %s641 = smov 192
  %v642 = vld [vmem:[%s640] ss:$16 sm:%s641]
  %vm643 = vcmask 1047558
  %v644 = vsel %vm643, %v642, %v639
  %645 = vrot.lane.b32.xlu0 %v644, 16
  %v646 = vpop.permute.xlu0 %645
  %vm647 = vcmask 261248
  %s648 = scalar_lea.vmem %s1, 8
  %649 = vst.msk [vmem:[%s648] sm:$0xff] %vm647, %v646
  %s650 = scalar_lea.vmem %s0, 129
  %s651 = smov 3
  %v652 = vld [vmem:[%s650] ss:$16 sm:%s651]
  %s653 = scalar_lea.vmem %s0, 129
  %s654 = smov 12
  %v655 = vld [vmem:[%s653] ss:$16 sm:%s654]
  %vm656 = vcmask 1043458
  %v657 = vsel %vm656, %v655, %v652
  %s658 = scalar_lea.vmem %s0, 129
  %s659 = smov 48
  %v660 = vld [vmem:[%s658] ss:$16 sm:%s659]
  %vm661 = vcmask 1045508
  %v662 = vsel %vm661, %v660, %v657
  %s663 = scalar_lea.vmem %s0, 129
  %s664 = smov 192
  %v665 = vld [vmem:[%s663] ss:$16 sm:%s664]
  %vm666 = vcmask 1047558
  %v667 = vsel %vm666, %v665, %v662
  %668 = vrot.lane.b32.xlu0 %v667, 16
  %v669 = vpop.permute.xlu0 %668
  %vm670 = vcmask 261248
  %s671 = scalar_lea.vmem %s1, 16
  %672 = vst.msk [vmem:[%s671] sm:$0xff] %vm670, %v669
  %s673 = scalar_lea.vmem %s0, 137
  %s674 = smov 3
  %v675 = vld [vmem:[%s673] ss:$16 sm:%s674]
  %s676 = scalar_lea.vmem %s0, 137
  %s677 = smov 12
  %v678 = vld [vmem:[%s676] ss:$16 sm:%s677]
  %vm679 = vcmask 1043458
  %v680 = vsel %vm679, %v678, %v675
  %s681 = scalar_lea.vmem %s0, 137
  %s682 = smov 48
  %v683 = vld [vmem:[%s681] ss:$16 sm:%s682]
  %vm684 = vcmask 1045508
  %v685 = vsel %vm684, %v683, %v680
  %s686 = scalar_lea.vmem %s0, 137
  %s687 = smov 192
  %v688 = vld [vmem:[%s686] ss:$16 sm:%s687]
  %vm689 = vcmask 1047558
  %v690 = vsel %vm689, %v688, %v685
  %691 = vrot.lane.b32.xlu0 %v690, 16
  %v692 = vpop.permute.xlu0 %691
  %vm693 = vcmask 261248
  %s694 = scalar_lea.vmem %s1, 24
  %695 = vst.msk [vmem:[%s694] sm:$0xff] %vm693, %v692

// kernel: net_forward_packed.1
$region0: #{net_forward_packed.1}
  #allocation0 [shape = 'u32[]', space=smem, size = 0x4, offset = 0x4, fixed_abs, tag = 'smem constant byte address 0x4 - core index']
  #allocation1 [shape = 'u32[144,128]{1,0:T(1,128)}', space=vmem, size = 0x12000, scoped, tag = 'internal scratch']
  %s0 = inlined_call_operand.smem [shape: u32[33], index: -1, kind: input, shape index: {}]
  %s1 = sld [smem:[%s0]]
  %s2 = scalar_lea.smem %s0, 1
  %s3 = sld [smem:[%s2]]
  %s4 = scalar_lea.smem %s0, 2
  %s5 = sld [smem:[%s4]]
  %s6 = scalar_lea.smem %s0, 3
  %s7 = sld [smem:[%s6]]
  %s8 = scalar_lea.smem %s0, 4
  %s9 = sld [smem:[%s8]]
  %s10 = scalar_lea.smem %s0, 5
  %s11 = sld [smem:[%s10]]
  %s12 = scalar_lea.smem %s0, 6
  %s13 = sld [smem:[%s12]]
  %s14 = scalar_lea.smem %s0, 7
  %s15 = sld [smem:[%s14]]
  %s16 = scalar_lea.smem %s0, 8
  %s17 = sld [smem:[%s16]]
  %s18 = scalar_lea.smem %s0, 9
  %s19 = sld [smem:[%s18]]
  %s20 = scalar_lea.smem %s0, 10
  %s21 = sld [smem:[%s20]]
  %s22 = scalar_lea.smem %s0, 11
  %s23 = sld [smem:[%s22]]
  %s24 = scalar_lea.smem %s0, 12
  %s25 = sld [smem:[%s24]]
  %s26 = scalar_lea.smem %s0, 13
  %s27 = sld [smem:[%s26]]
  %s28 = scalar_lea.smem %s0, 14
  %s29 = sld [smem:[%s28]]
  %s30 = scalar_lea.smem %s0, 15
  %s31 = sld [smem:[%s30]]
  %s32 = scalar_lea.smem %s0, 16
  %s33 = sld [smem:[%s32]]
  %s34 = scalar_lea.smem %s0, 17
  %s35 = sld [smem:[%s34]]
  %s36 = scalar_lea.smem %s0, 18
  %s37 = sld [smem:[%s36]]
  %s38 = scalar_lea.smem %s0, 19
  %s39 = sld [smem:[%s38]]
  %s40 = scalar_lea.smem %s0, 20
  %s41 = sld [smem:[%s40]]
  %s42 = scalar_lea.smem %s0, 21
  %s43 = sld [smem:[%s42]]
  %s44 = scalar_lea.smem %s0, 22
  %s45 = sld [smem:[%s44]]
  %s46 = scalar_lea.smem %s0, 23
  %s47 = sld [smem:[%s46]]
  %s48 = scalar_lea.smem %s0, 24
  %s49 = sld [smem:[%s48]]
  %s50 = scalar_lea.smem %s0, 25
  %s51 = sld [smem:[%s50]]
  %s52 = scalar_lea.smem %s0, 26
  %s53 = sld [smem:[%s52]]
  %s54 = scalar_lea.smem %s0, 27
  %s55 = sld [smem:[%s54]]
  %s56 = scalar_lea.smem %s0, 28
  %s57 = sld [smem:[%s56]]
  %s58 = scalar_lea.smem %s0, 29
  %s59 = sld [smem:[%s58]]
  %s60 = scalar_lea.smem %s0, 30
  %s61 = sld [smem:[%s60]]
  %s62 = scalar_lea.smem %s0, 31
  %s63 = sld [smem:[%s62]]
  %s64 = scalar_lea.smem %s0, 32
  %s65 = sld [smem:[%s64]]
  %s66 = sld [smem:[#allocation0]]
  $region138: #{net_forward_packed.1} parent=0
    _
  %s68 = ssub.s32 1, %s66
  %s69 = scalar_select 0, %s68, %s66
  // Predicated region
  $region2: #{net_forward_packed.1} parent=0 // pred_check
    _
  $region3: #{net_forward_packed.1} parent=0 // pred_check_branch
    %71 = sbr.rel (0) target = $region5
  $region4: #{net_forward_packed.1} parent=0 // pred_region
    _
  $region5: #{net_forward_packed.1} parent=0 // pred_fallthru
    _
  // Predicated region
  $region6: #{net_forward_packed.1} parent=0 // pred_check
    _
  $region7: #{net_forward_packed.1} parent=0 // pred_check_branch
    %73 = sbr.rel (0) target = $region9
  $region8: #{net_forward_packed.1} parent=0 // pred_region
    _
  $region9: #{net_forward_packed.1} parent=0 // pred_fallthru
    _
  // Predicated region
  $region10: #{net_forward_packed.1} parent=0 // pred_check
    _
  $region11: #{net_forward_packed.1} parent=0 // pred_check_branch
    %75 = sbr.rel (0) target = $region13
  $region12: #{net_forward_packed.1} parent=0 // pred_region
    _
  $region13: #{net_forward_packed.1} parent=0 // pred_fallthru
    _
  // Predicated region
  $region14: #{net_forward_packed.1} parent=0 // pred_check
    _
  $region15: #{net_forward_packed.1} parent=0 // pred_check_branch
    %77 = sbr.rel (0) target = $region17
  $region16: #{net_forward_packed.1} parent=0 // pred_region
    _
  $region17: #{net_forward_packed.1} parent=0 // pred_fallthru
    _
  // Predicated region
  $region18: #{net_forward_packed.1} parent=0 // pred_check
    _
  $region19: #{net_forward_packed.1} parent=0 // pred_check_branch
    %79 = sbr.rel (0) target = $region21
  $region20: #{net_forward_packed.1} parent=0 // pred_region
    _
  $region21: #{net_forward_packed.1} parent=0 // pred_fallthru
    _
  // Predicated region
  $region22: #{net_forward_packed.1} parent=0 // pred_check
    _
  $region23: #{net_forward_packed.1} parent=0 // pred_check_branch
    %81 = sbr.rel (0) target = $region25
  $region24: #{net_forward_packed.1} parent=0 // pred_region
    _
  $region25: #{net_forward_packed.1} parent=0 // pred_fallthru
    _
  // Predicated region
  $region26: #{net_forward_packed.1} parent=0 // pred_check
    _
  $region27: #{net_forward_packed.1} parent=0 // pred_check_branch
    %83 = sbr.rel (0) target = $region29
  $region28: #{net_forward_packed.1} parent=0 // pred_region
    _
  $region29: #{net_forward_packed.1} parent=0 // pred_fallthru
    _
  // Predicated region
  $region30: #{net_forward_packed.1} parent=0 // pred_check
    _
  $region31: #{net_forward_packed.1} parent=0 // pred_check_branch
    %85 = sbr.rel (0) target = $region33
  $region32: #{net_forward_packed.1} parent=0 // pred_region
    _
  $region33: #{net_forward_packed.1} parent=0 // pred_fallthru
    _
  // Predicated region
  $region34: #{net_forward_packed.1} parent=0 // pred_check
    _
  $region35: #{net_forward_packed.1} parent=0 // pred_check_branch
    %87 = sbr.rel (0) target = $region37
  $region36: #{net_forward_packed.1} parent=0 // pred_region
    _
  $region37: #{net_forward_packed.1} parent=0 // pred_fallthru
    _
  // Predicated region
  $region38: #{net_forward_packed.1} parent=0 // pred_check
    _
  $region39: #{net_forward_packed.1} parent=0 // pred_check_branch
    %89 = sbr.rel (0) target = $region41
  $region40: #{net_forward_packed.1} parent=0 // pred_region
    _
  $region41: #{net_forward_packed.1} parent=0 // pred_fallthru
    _
  // Predicated region
  $region42: #{net_forward_packed.1} parent=0 // pred_check
    _
  $region43: #{net_forward_packed.1} parent=0 // pred_check_branch
    %91 = sbr.rel (0) target = $region45
  $region44: #{net_forward_packed.1} parent=0 // pred_region
    _
  $region45: #{net_forward_packed.1} parent=0 // pred_fallthru
    _
  // Predicated region
  $region46: #{net_forward_packed.1} parent=0 // pred_check
    _
  $region47: #{net_forward_packed.1} parent=0 // pred_check_branch
    %93 = sbr.rel (0) target = $region49
  $region48: #{net_forward_packed.1} parent=0 // pred_region
    _
  $region49: #{net_forward_packed.1} parent=0 // pred_fallthru
    _
  // Predicated region
  $region50: #{net_forward_packed.1} parent=0 // pred_check
    _
  $region51: #{net_forward_packed.1} parent=0 // pred_check_branch
    %95 = sbr.rel (0) target = $region53
  $region52: #{net_forward_packed.1} parent=0 // pred_region
    _
  $region53: #{net_forward_packed.1} parent=0 // pred_fallthru
    _
  // Predicated region
  $region54: #{net_forward_packed.1} parent=0 // pred_check
    _
  $region55: #{net_forward_packed.1} parent=0 // pred_check_branch
    %97 = sbr.rel (0) target = $region57
  $region56: #{net_forward_packed.1} parent=0 // pred_region
    _
  $region57: #{net_forward_packed.1} parent=0 // pred_fallthru
    _
  // Predicated region
  $region58: #{net_forward_packed.1} parent=0 // pred_check
    _
  $region59: #{net_forward_packed.1} parent=0 // pred_check_branch
    %99 = sbr.rel (0) target = $region61
  $region60: #{net_forward_packed.1} parent=0 // pred_region
    _
  $region61: #{net_forward_packed.1} parent=0 // pred_fallthru
    _
  // Predicated region
  $region62: #{net_forward_packed.1} parent=0 // pred_check
    _
  $region63: #{net_forward_packed.1} parent=0 // pred_check_branch
    %101 = sbr.rel (0) target = $region65
  $region64: #{net_forward_packed.1} parent=0 // pred_region
    _
  $region65: #{net_forward_packed.1} parent=0 // pred_fallthru
    _
  // Predicated region
  $region66: #{net_forward_packed.1} parent=0 // pred_check
    _
  $region67: #{net_forward_packed.1} parent=0 // pred_check_branch
    %103 = sbr.rel (0) target = $region69
  $region68: #{net_forward_packed.1} parent=0 // pred_region
    _
  $region69: #{net_forward_packed.1} parent=0 // pred_fallthru
    _
  // Predicated region
  $region70: #{net_forward_packed.1} parent=0 // pred_check
    _
  $region71: #{net_forward_packed.1} parent=0 // pred_check_branch
    %105 = sbr.rel (0) target = $region73
  $region72: #{net_forward_packed.1} parent=0 // pred_region
    _
  $region73: #{net_forward_packed.1} parent=0 // pred_fallthru
    _
  // Predicated region
  $region74: #{net_forward_packed.1} parent=0 // pred_check
    _
  $region75: #{net_forward_packed.1} parent=0 // pred_check_branch
    %107 = sbr.rel (0) target = $region77
  $region76: #{net_forward_packed.1} parent=0 // pred_region
    _
  $region77: #{net_forward_packed.1} parent=0 // pred_fallthru
    _
  // Predicated region
  $region78: #{net_forward_packed.1} parent=0 // pred_check
    _
  $region79: #{net_forward_packed.1} parent=0 // pred_check_branch
    %109 = sbr.rel (0) target = $region81
  $region80: #{net_forward_packed.1} parent=0 // pred_region
    _
  $region81: #{net_forward_packed.1} parent=0 // pred_fallthru
    _
  // Predicated region
  $region82: #{net_forward_packed.1} parent=0 // pred_check
    _
  $region83: #{net_forward_packed.1} parent=0 // pred_check_branch
    %111 = sbr.rel (0) target = $region85
  $region84: #{net_forward_packed.1} parent=0 // pred_region
    _
  $region85: #{net_forward_packed.1} parent=0 // pred_fallthru
    _
  // Predicated region
  $region86: #{net_forward_packed.1} parent=0 // pred_check
    _
  $region87: #{net_forward_packed.1} parent=0 // pred_check_branch
    %113 = sbr.rel (0) target = $region89
  $region88: #{net_forward_packed.1} parent=0 // pred_region
    _
  $region89: #{net_forward_packed.1} parent=0 // pred_fallthru
    _
  // Predicated region
  $region90: #{net_forward_packed.1} parent=0 // pred_check
    _
  $region91: #{net_forward_packed.1} parent=0 // pred_check_branch
    %115 = sbr.rel (0) target = $region93
  $region92: #{net_forward_packed.1} parent=0 // pred_region
    _
  $region93: #{net_forward_packed.1} parent=0 // pred_fallthru
    _
  // Predicated region
  $region94: #{net_forward_packed.1} parent=0 // pred_check
    _
  $region95: #{net_forward_packed.1} parent=0 // pred_check_branch
    %117 = sbr.rel (0) target = $region97
  $region96: #{net_forward_packed.1} parent=0 // pred_region
    _
  $region97: #{net_forward_packed.1} parent=0 // pred_fallthru
    _
  // Predicated region
  $region98: #{net_forward_packed.1} parent=0 // pred_check
    _
  $region99: #{net_forward_packed.1} parent=0 // pred_check_branch
    %119 = sbr.rel (0) target = $region101
  $region100: #{net_forward_packed.1} parent=0 // pred_region
    _
  $region101: #{net_forward_packed.1} parent=0 // pred_fallthru
    _
  // Predicated region
  $region102: #{net_forward_packed.1} parent=0 // pred_check
    _
  $region103: #{net_forward_packed.1} parent=0 // pred_check_branch
    %121 = sbr.rel (0) target = $region105
  $region104: #{net_forward_packed.1} parent=0 // pred_region
    _
  $region105: #{net_forward_packed.1} parent=0 // pred_fallthru
    _
  // Predicated region
  $region106: #{net_forward_packed.1} parent=0 // pred_check
    _
  $region107: #{net_forward_packed.1} parent=0 // pred_check_branch
    %123 = sbr.rel (0) target = $region109
  $region108: #{net_forward_packed.1} parent=0 // pred_region
    _
  $region109: #{net_forward_packed.1} parent=0 // pred_fallthru
    _
  // Predicated region
  $region110: #{net_forward_packed.1} parent=0 // pred_check
    _
  $region111: #{net_forward_packed.1} parent=0 // pred_check_branch
    %125 = sbr.rel (0) target = $region113
  $region112: #{net_forward_packed.1} parent=0 // pred_region
    _
  $region113: #{net_forward_packed.1} parent=0 // pred_fallthru
    _
  // Predicated region
  $region114: #{net_forward_packed.1} parent=0 // pred_check
    _
  $region115: #{net_forward_packed.1} parent=0 // pred_check_branch
    %127 = sbr.rel (0) target = $region117
  $region116: #{net_forward_packed.1} parent=0 // pred_region
    _
  $region117: #{net_forward_packed.1} parent=0 // pred_fallthru
    _
  // Predicated region
  $region118: #{net_forward_packed.1} parent=0 // pred_check
    _
  $region119: #{net_forward_packed.1} parent=0 // pred_check_branch
    %129 = sbr.rel (0) target = $region121
  $region120: #{net_forward_packed.1} parent=0 // pred_region
    _
  $region121: #{net_forward_packed.1} parent=0 // pred_fallthru
    _
  // Predicated region
  $region122: #{net_forward_packed.1} parent=0 // pred_check
    _
  $region123: #{net_forward_packed.1} parent=0 // pred_check_branch
    %131 = sbr.rel (0) target = $region125
  $region124: #{net_forward_packed.1} parent=0 // pred_region
    _
  $region125: #{net_forward_packed.1} parent=0 // pred_fallthru
    _
  // Predicated region
  $region126: #{net_forward_packed.1} parent=0 // pred_check
    _
  $region127: #{net_forward_packed.1} parent=0 // pred_check_branch
    %133 = sbr.rel (0) target = $region129
  $region128: #{net_forward_packed.1} parent=0 // pred_region
    _
  $region129: #{net_forward_packed.1} parent=0 // pred_fallthru
    _
  %v135 = vld [vmem:[%s1] sm:$0xff]
  %v136 = vld [vmem:[%s3] sm:$0xff]
  %v137 = vld [vmem:[%s5] sm:$0xff]
  %v138 = vld [vmem:[%s7] sm:$0x1]
  %v139 = vld [vmem:[%s9] sm:$0xff]
  %v140 = vld [vmem:[%s11] sm:$0x1]
  %v141 = vld [vmem:[%s13] sm:$0xff]
  %v142 = vld [vmem:[%s13 + $0x8] sm:$0xff]
  %v143 = vld [vmem:[%s15] sm:$0xff]
  %v144 = vld [vmem:[%s15 + $0x8] sm:$0xff]
  %v146 = vlaneseq
  %v147 = vshrl.u32 %v146, 7
  %v148 = vsub.s32 0, %v147
  %v149 = vrot.slane %v138, %v148
  %vm151 = vcmask 64512
  %v153 = vsel %vm151, %v135, 0
  %155 = vmatprep.subr.mxu0 0.0
  %156 = vmatpush1.msra.mxu0 %v137
  %157 = vmatprep.subr.mxu0 0.0
  %158 = vmatpush1.msra.mxu0 0.0
  %159 = vmatprep.subr.mxu0 0.0
  %160 = vmatpush1.msra.mxu0 0.0
  %161 = vmatprep.subr.mxu0 0.0
  %162 = vmatpush1.msra.mxu0 0.0
  %163 = vmatprep.subr.mxu0 0.0
  %164 = vmatpush1.msra.mxu0 0.0
  %165 = vmatprep.subr.mxu0 0.0
  %166 = vmatpush1.msra.mxu0 0.0
  %167 = vmatprep.subr.mxu0 0.0
  %168 = vmatpush1.msra.mxu0 0.0
  %169 = vmatprep.subr.mxu0 0.0
  %170 = vmatpush1.msra.mxu0 0.0
  %171 = vmatprep.subr.mxu0 0.0
  %172 = vmatpush1.msra.mxu0 0.0
  %173 = vmatprep.subr.mxu0 0.0
  %174 = vmatpush1.msra.mxu0 0.0
  %175 = vmatprep.subr.mxu0 0.0
  %176 = vmatpush1.msra.mxu0 0.0
  %177 = vmatprep.subr.mxu0 0.0
  %178 = vmatpush1.msra.mxu0 0.0
  %179 = vmatprep.subr.mxu0 0.0
  %180 = vmatpush1.msra.mxu0 0.0
  %181 = vmatprep.subr.mxu0 0.0
  %182 = vmatpush1.msra.mxu0 0.0
  %183 = vmatprep.subr.mxu0 0.0
  %184 = vmatpush1.msra.mxu0 0.0
  %185 = vmatprep.subr.mxu0 0.0
  %186 = vmatpush1.msra.mxu0 0.0
  %187 = vmatprep.subr.mxu0 0.0
  %188 = vmatpush1.msra.mxu0 0.0
  %189 = vmatprep.subr.mxu0 0.0
  %190 = vmatpush1.msra.mxu0 0.0
  %191 = vmatprep.subr.mxu0 0.0
  %192 = vmatpush1.msra.mxu0 0.0
  %193 = vmatprep.subr.mxu0 0.0
  %194 = vmatpush1.msra.mxu0 0.0
  %195 = vmatprep.subr.mxu0 0.0
  %196 = vmatpush1.msra.mxu0 0.0
  %197 = vmatprep.subr.mxu0 0.0
  %198 = vmatpush1.msra.mxu0 0.0
  %199 = vmatprep.subr.mxu0 0.0
  %200 = vmatpush1.msra.mxu0 0.0
  %201 = vmatprep.subr.mxu0 0.0
  %202 = vmatpush1.msra.mxu0 0.0
  %203 = vmatprep.subr.mxu0 0.0
  %204 = vmatpush1.msra.mxu0 0.0
  %205 = vmatprep.subr.mxu0 0.0
  %206 = vmatpush1.msra.mxu0 0.0
  %207 = vmatprep.subr.mxu0 0.0
  %208 = vmatpush1.msra.mxu0 0.0
  %209 = vmatprep.subr.mxu0 0.0
  %210 = vmatpush1.msra.mxu0 0.0
  %211 = vmatprep.subr.mxu0 0.0
  %212 = vmatpush1.msra.mxu0 0.0
  %213 = vmatprep.subr.mxu0 0.0
  %214 = vmatpush1.msra.mxu0 0.0
  %215 = vmatprep.subr.mxu0 0.0
  %216 = vmatpush1.msra.mxu0 0.0
  %217 = vmatprep.subr.mxu0 0.0
  %218 = vmatpush1.msra.mxu0 0.0
  %219 = vmatprep.mubr.f32.mxu0 0.0
  %220 = vmatmul.mubr.f32.gmra.mrb[0].mxu0 %v153
  %v221 = vpop.f32.mrb[0].mxu0
  %v222 = vadd.f32 %v149, %v221
  %v223 = vpop.f32.mrb[0].mxu0
  %224 = vdwg.mxu0
  %v225 = vtanh.pop %v222
  %v227 = vlaneseq
  %v228 = vshrl.u32 %v227, 7
  %v229 = vsub.s32 0, %v228
  %v230 = vrot.slane %v140, %v229
  %v233 = vsel %vm151, %v136, 0
  %235 = vmatprep.subr.mxu0 0.0
  %236 = vmatpush1.msra.mxu0 %v139
  %237 = vmatprep.subr.mxu0 0.0
  %238 = vmatpush1.msra.mxu0 0.0
  %239 = vmatprep.subr.mxu0 0.0
  %240 = vmatpush1.msra.mxu0 0.0
  %241 = vmatprep.subr.mxu0 0.0
  %242 = vmatpush1.msra.mxu0 0.0
  %243 = vmatprep.subr.mxu0 0.0
  %244 = vmatpush1.msra.mxu0 0.0
  %245 = vmatprep.subr.mxu0 0.0
  %246 = vmatpush1.msra.mxu0 0.0
  %247 = vmatprep.subr.mxu0 0.0
  %248 = vmatpush1.msra.mxu0 0.0
  %249 = vmatprep.subr.mxu0 0.0
  %250 = vmatpush1.msra.mxu0 0.0
  %251 = vmatprep.subr.mxu0 0.0
  %252 = vmatpush1.msra.mxu0 0.0
  %253 = vmatprep.subr.mxu0 0.0
  %254 = vmatpush1.msra.mxu0 0.0
  %255 = vmatprep.subr.mxu0 0.0
  %256 = vmatpush1.msra.mxu0 0.0
  %257 = vmatprep.subr.mxu0 0.0
  %258 = vmatpush1.msra.mxu0 0.0
  %259 = vmatprep.subr.mxu0 0.0
  %260 = vmatpush1.msra.mxu0 0.0
  %261 = vmatprep.subr.mxu0 0.0
  %262 = vmatpush1.msra.mxu0 0.0
  %263 = vmatprep.subr.mxu0 0.0
  %264 = vmatpush1.msra.mxu0 0.0
  %265 = vmatprep.subr.mxu0 0.0
  %266 = vmatpush1.msra.mxu0 0.0
  %267 = vmatprep.subr.mxu0 0.0
  %268 = vmatpush1.msra.mxu0 0.0
  %269 = vmatprep.subr.mxu0 0.0
  %270 = vmatpush1.msra.mxu0 0.0
  %271 = vmatprep.subr.mxu0 0.0
  %272 = vmatpush1.msra.mxu0 0.0
  %273 = vmatprep.subr.mxu0 0.0
  %274 = vmatpush1.msra.mxu0 0.0
  %275 = vmatprep.subr.mxu0 0.0
  %276 = vmatpush1.msra.mxu0 0.0
  %277 = vmatprep.subr.mxu0 0.0
  %278 = vmatpush1.msra.mxu0 0.0
  %279 = vmatprep.subr.mxu0 0.0
  %280 = vmatpush1.msra.mxu0 0.0
  %281 = vmatprep.subr.mxu0 0.0
  %282 = vmatpush1.msra.mxu0 0.0
  %283 = vmatprep.subr.mxu0 0.0
  %284 = vmatpush1.msra.mxu0 0.0
  %285 = vmatprep.subr.mxu0 0.0
  %286 = vmatpush1.msra.mxu0 0.0
  %287 = vmatprep.subr.mxu0 0.0
  %288 = vmatpush1.msra.mxu0 0.0
  %289 = vmatprep.subr.mxu0 0.0
  %290 = vmatpush1.msra.mxu0 0.0
  %291 = vmatprep.subr.mxu0 0.0
  %292 = vmatpush1.msra.mxu0 0.0
  %293 = vmatprep.subr.mxu0 0.0
  %294 = vmatpush1.msra.mxu0 0.0
  %295 = vmatprep.subr.mxu0 0.0
  %296 = vmatpush1.msra.mxu0 0.0
  %297 = vmatprep.subr.mxu0 0.0
  %298 = vmatpush1.msra.mxu0 0.0
  %299 = vmatprep.mubr.f32.mxu0 0.0
  %300 = vmatmul.mubr.f32.gmra.mrb[0].mxu0 %v233
  %v301 = vpop.f32.mrb[0].mxu0
  %v302 = vadd.f32 %v230, %v301
  %v303 = vpop.f32.mrb[0].mxu0
  %304 = vdwg.mxu0
  %v305 = vtanh.pop %v302
  %vm306 = vcmask 130048
  %v308 = vsel %vm306, %v225, 0
  %v311 = vsel %vm306, %v305, 0
  %313 = vmatprep.subr.mxu0 0.0
  %314 = vmatpush1.xpose.msra.mxu0 %v311
  %315 = vmatprep.subr.mxu0 0.0
  %316 = vmatpush1.xpose.msra.mxu0 0.0
  %317 = vmatprep.subr.mxu0 0.0
  %318 = vmatpush1.xpose.msra.mxu0 0.0
  %319 = vmatprep.subr.mxu0 0.0
  %320 = vmatpush1.xpose.msra.mxu0 0.0
  %321 = vmatprep.subr.mxu0 0.0
  %322 = vmatpush1.xpose.msra.mxu0 0.0
  %323 = vmatprep.subr.mxu0 0.0
  %324 = vmatpush1.xpose.msra.mxu0 0.0
  %325 = vmatprep.subr.mxu0 0.0
  %326 = vmatpush1.xpose.msra.mxu0 0.0
  %327 = vmatprep.subr.mxu0 0.0
  %328 = vmatpush1.xpose.msra.mxu0 0.0
  %329 = vmatprep.subr.mxu0 0.0
  %330 = vmatpush1.xpose.msra.mxu0 0.0
  %331 = vmatprep.subr.mxu0 0.0
  %332 = vmatpush1.xpose.msra.mxu0 0.0
  %333 = vmatprep.subr.mxu0 0.0
  %334 = vmatpush1.xpose.msra.mxu0 0.0
  %335 = vmatprep.subr.mxu0 0.0
  %336 = vmatpush1.xpose.msra.mxu0 0.0
  %337 = vmatprep.subr.mxu0 0.0
  %338 = vmatpush1.xpose.msra.mxu0 0.0
  %339 = vmatprep.subr.mxu0 0.0
  %340 = vmatpush1.xpose.msra.mxu0 0.0
  %341 = vmatprep.subr.mxu0 0.0
  %342 = vmatpush1.xpose.msra.mxu0 0.0
  %343 = vmatprep.subr.mxu0 0.0
  %344 = vmatpush1.xpose.msra.mxu0 0.0
  %345 = vmatprep.subr.mxu0 0.0
  %346 = vmatpush1.xpose.msra.mxu0 0.0
  %347 = vmatprep.subr.mxu0 0.0
  %348 = vmatpush1.xpose.msra.mxu0 0.0
  %349 = vmatprep.subr.mxu0 0.0
  %350 = vmatpush1.xpose.msra.mxu0 0.0
  %351 = vmatprep.subr.mxu0 0.0
  %352 = vmatpush1.xpose.msra.mxu0 0.0
  %353 = vmatprep.subr.mxu0 0.0
  %354 = vmatpush1.xpose.msra.mxu0 0.0
  %355 = vmatprep.subr.mxu0 0.0
  %356 = vmatpush1.xpose.msra.mxu0 0.0
  %357 = vmatprep.subr.mxu0 0.0
  %358 = vmatpush1.xpose.msra.mxu0 0.0
  %359 = vmatprep.subr.mxu0 0.0
  %360 = vmatpush1.xpose.msra.mxu0 0.0
  %361 = vmatprep.subr.mxu0 0.0
  %362 = vmatpush1.xpose.msra.mxu0 0.0
  %363 = vmatprep.subr.mxu0 0.0
  %364 = vmatpush1.xpose.msra.mxu0 0.0
  %365 = vmatprep.subr.mxu0 0.0
  %366 = vmatpush1.xpose.msra.mxu0 0.0
  %367 = vmatprep.subr.mxu0 0.0
  %368 = vmatpush1.xpose.msra.mxu0 0.0
  %369 = vmatprep.subr.mxu0 0.0
  %370 = vmatpush1.xpose.msra.mxu0 0.0
  %371 = vmatprep.subr.mxu0 0.0
  %372 = vmatpush1.xpose.msra.mxu0 0.0
  %373 = vmatprep.subr.mxu0 0.0
  %374 = vmatpush1.xpose.msra.mxu0 0.0
  %375 = vmatprep.subr.mxu0 0.0
  %376 = vmatpush1.xpose.msra.mxu0 0.0
  %377 = vmatprep.mubr.f32.mxu0 0.0
  %378 = vmatmul.mubr.f32.gmra.mrb[0].mxu0 %v308
  %v379 = vpop.f32.mrb[0].mxu0
  %v380 = vadd.f32 0.0, %v379
  %v381 = vpop.f32.mrb[0].mxu0
  %382 = vdwg.mxu0
  %383 = vmatprep.subr.mxu0 0.0
  %384 = vmatpush1.xpose.msra.mxu0 %v308
  %385 = vmatprep.subr.mxu0 0.0
  %386 = vmatpush1.xpose.msra.mxu0 0.0
  %387 = vmatprep.subr.mxu0 0.0
  %388 = vmatpush1.xpose.msra.mxu0 0.0
  %389 = vmatprep.subr.mxu0 0.0
  %390 = vmatpush1.xpose.msra.mxu0 0.0
  %391 = vmatprep.subr.mxu0 0.0
  %392 = vmatpush1.xpose.msra.mxu0 0.0
  %393 = vmatprep.subr.mxu0 0.0
  %394 = vmatpush1.xpose.msra.mxu0 0.0
  %395 = vmatprep.subr.mxu0 0.0
  %396 = vmatpush1.xpose.msra.mxu0 0.0
  %397 = vmatprep.subr.mxu0 0.0
  %398 = vmatpush1.xpose.msra.mxu0 0.0
  %399 = vmatprep.subr.mxu0 0.0
  %400 = vmatpush1.xpose.msra.mxu0 0.0
  %401 = vmatprep.subr.mxu0 0.0
  %402 = vmatpush1.xpose.msra.mxu0 0.0
  %403 = vmatprep.subr.mxu0 0.0
  %404 = vmatpush1.xpose.msra.mxu0 0.0
  %405 = vmatprep.subr.mxu0 0.0
  %406 = vmatpush1.xpose.msra.mxu0 0.0
  %407 = vmatprep.subr.mxu0 0.0
  %408 = vmatpush1.xpose.msra.mxu0 0.0
  %409 = vmatprep.subr.mxu0 0.0
  %410 = vmatpush1.xpose.msra.mxu0 0.0
  %411 = vmatprep.subr.mxu0 0.0
  %412 = vmatpush1.xpose.msra.mxu0 0.0
  %413 = vmatprep.subr.mxu0 0.0
  %414 = vmatpush1.xpose.msra.mxu0 0.0
  %415 = vmatprep.subr.mxu0 0.0
  %416 = vmatpush1.xpose.msra.mxu0 0.0
  %417 = vmatprep.subr.mxu0 0.0
  %418 = vmatpush1.xpose.msra.mxu0 0.0
  %419 = vmatprep.subr.mxu0 0.0
  %420 = vmatpush1.xpose.msra.mxu0 0.0
  %421 = vmatprep.subr.mxu0 0.0
  %422 = vmatpush1.xpose.msra.mxu0 0.0
  %423 = vmatprep.subr.mxu0 0.0
  %424 = vmatpush1.xpose.msra.mxu0 0.0
  %425 = vmatprep.subr.mxu0 0.0
  %426 = vmatpush1.xpose.msra.mxu0 0.0
  %427 = vmatprep.subr.mxu0 0.0
  %428 = vmatpush1.xpose.msra.mxu0 0.0
  %429 = vmatprep.subr.mxu0 0.0
  %430 = vmatpush1.xpose.msra.mxu0 0.0
  %431 = vmatprep.subr.mxu0 0.0
  %432 = vmatpush1.xpose.msra.mxu0 0.0
  %433 = vmatprep.subr.mxu0 0.0
  %434 = vmatpush1.xpose.msra.mxu0 0.0
  %435 = vmatprep.subr.mxu0 0.0
  %436 = vmatpush1.xpose.msra.mxu0 0.0
  %437 = vmatprep.subr.mxu0 0.0
  %438 = vmatpush1.xpose.msra.mxu0 0.0
  %439 = vmatprep.subr.mxu0 0.0
  %440 = vmatpush1.xpose.msra.mxu0 0.0
  %441 = vmatprep.subr.mxu0 0.0
  %442 = vmatpush1.xpose.msra.mxu0 0.0
  %443 = vmatprep.subr.mxu0 0.0
  %444 = vmatpush1.xpose.msra.mxu0 0.0
  %445 = vmatprep.subr.mxu0 0.0
  %446 = vmatpush1.xpose.msra.mxu0 0.0
  %447 = vmatprep.mubr.f32.mxu0 0.0
  %448 = vmatmul.mubr.f32.gmra.mrb[0].mxu0 %v311
  %v449 = vpop.f32.mrb[0].mxu0
  %v450 = vadd.f32 0.0, %v449
  %v451 = vpop.f32.mrb[0].mxu0
  %452 = vdwg.mxu0
  %v453 = vsub.f32 %v380, %v450
  %v454 = vtanh.pop %v453
  %v455 = vmax.f32 %v454, 0.0
  %456 = vxpose.xlu0.b32.start [1/16] %v455, 128
  %457 = vxpose.xlu0.b32.cont [2/16] 0.0, 128
  %458 = vxpose.xlu0.b32.cont [3/16] 0.0, 128
  %459 = vxpose.xlu0.b32.cont [4/16] 0.0, 128
  %460 = vxpose.xlu0.b32.cont [5/16] 0.0, 128
  %461 = vxpose.xlu0.b32.cont [6/16] 0.0, 128
  %462 = vxpose.xlu0.b32.cont [7/16] 0.0, 128
  %463 = vxpose.xlu0.b32.cont [8/16] 0.0, 128
  %464 = vxpose.xlu0.b32.cont [9/16] 0.0, 128
  %465 = vxpose.xlu0.b32.cont [10/16] 0.0, 128
  %466 = vxpose.xlu0.b32.cont [11/16] 0.0, 128
  %467 = vxpose.xlu0.b32.cont [12/16] 0.0, 128
  %468 = vxpose.xlu0.b32.cont [13/16] 0.0, 128
  %469 = vxpose.xlu0.b32.cont [14/16] 0.0, 128
  %470 = vxpose.xlu0.b32.cont [15/16] 0.0, 128
  %471 = vxpose.xlu0.b32.end [16/16] 0.0, 128
  %v472 = vpop.trf.xlu0
  %v473 = vpop.trf.xlu0
  %v474 = vpop.trf.xlu0
  %v475 = vpop.trf.xlu0
  %v476 = vpop.trf.xlu0
  %v477 = vpop.trf.xlu0
  %v478 = vpop.trf.xlu0
  %v479 = vpop.trf.xlu0
  %v480 = vpop.trf.xlu0
  %v481 = vpop.trf.xlu0
  %v482 = vpop.trf.xlu0
  %v483 = vpop.trf.xlu0
  %v484 = vpop.trf.xlu0
  %v485 = vpop.trf.xlu0
  %v486 = vpop.trf.xlu0
  %v487 = vpop.trf.xlu0
  %v488 = vadd.f32 %v455, %v472
  %v489 = vmul.f32 %v488, 0.5
  %v491 = vsel %vm151, %v141, 0
  %v494 = vsel %vm151, %v142, 0
  %496 = vmatprep.subr.mxu0 0.0
  %497 = vmatpush1.msra.mxu0 %v489
  %498 = vmatprep.subr.mxu0 0.0
  %499 = vmatpush1.msra.mxu0 0.0
  %500 = vmatprep.subr.mxu0 0.0
  %501 = vmatpush1.msra.mxu0 0.0
  %502 = vmatprep.subr.mxu0 0.0
  %503 = vmatpush1.msra.mxu0 0.0
  %504 = vmatprep.subr.mxu0 0.0
  %505 = vmatpush1.msra.mxu0 0.0
  %506 = vmatprep.subr.mxu0 0.0
  %507 = vmatpush1.msra.mxu0 0.0
  %508 = vmatprep.subr.mxu0 0.0
  %509 = vmatpush1.msra.mxu0 0.0
  %510 = vmatprep.subr.mxu0 0.0
  %511 = vmatpush1.msra.mxu0 0.0
  %512 = vmatprep.subr.mxu0 0.0
  %513 = vmatpush1.msra.mxu0 0.0
  %514 = vmatprep.subr.mxu0 0.0
  %515 = vmatpush1.msra.mxu0 0.0
  %516 = vmatprep.subr.mxu0 0.0
  %517 = vmatpush1.msra.mxu0 0.0
  %518 = vmatprep.subr.mxu0 0.0
  %519 = vmatpush1.msra.mxu0 0.0
  %520 = vmatprep.subr.mxu0 0.0
  %521 = vmatpush1.msra.mxu0 0.0
  %522 = vmatprep.subr.mxu0 0.0
  %523 = vmatpush1.msra.mxu0 0.0
  %524 = vmatprep.subr.mxu0 0.0
  %525 = vmatpush1.msra.mxu0 0.0
  %526 = vmatprep.subr.mxu0 0.0
  %527 = vmatpush1.msra.mxu0 0.0
  %528 = vmatprep.subr.mxu0 0.0
  %529 = vmatpush1.msra.mxu0 0.0
  %530 = vmatprep.subr.mxu0 0.0
  %531 = vmatpush1.msra.mxu0 0.0
  %532 = vmatprep.subr.mxu0 0.0
  %533 = vmatpush1.msra.mxu0 0.0
  %534 = vmatprep.subr.mxu0 0.0
  %535 = vmatpush1.msra.mxu0 0.0
  %536 = vmatprep.subr.mxu0 0.0
  %537 = vmatpush1.msra.mxu0 0.0
  %538 = vmatprep.subr.mxu0 0.0
  %539 = vmatpush1.msra.mxu0 0.0
  %540 = vmatprep.subr.mxu0 0.0
  %541 = vmatpush1.msra.mxu0 0.0
  %542 = vmatprep.subr.mxu0 0.0
  %543 = vmatpush1.msra.mxu0 0.0
  %544 = vmatprep.subr.mxu0 0.0
  %545 = vmatpush1.msra.mxu0 0.0
  %546 = vmatprep.subr.mxu0 0.0
  %547 = vmatpush1.msra.mxu0 0.0
  %548 = vmatprep.subr.mxu0 0.0
  %549 = vmatpush1.msra.mxu0 0.0
  %550 = vmatprep.subr.mxu0 0.0
  %551 = vmatpush1.msra.mxu0 0.0
  %552 = vmatprep.subr.mxu0 0.0
  %553 = vmatpush1.msra.mxu0 0.0
  %554 = vmatprep.subr.mxu0 0.0
  %555 = vmatpush1.msra.mxu0 0.0
  %556 = vmatprep.subr.mxu0 0.0
  %557 = vmatpush1.msra.mxu0 0.0
  %558 = vmatprep.subr.mxu0 0.0
  %559 = vmatpush1.msra.mxu0 0.0
  %560 = vmatprep.mubr.f32.mxu0 0.0
  %561 = vmatmul.mubr.f32.gmra.mrb[0].mxu0 %v491
  %v562 = vpop.f32.mrb[0].mxu0
  %v563 = vadd.f32 0.0, %v562
  %v564 = vpop.f32.mrb[0].mxu0
  %565 = vmatprep.mubr.f32.mxu0 0.0
  %566 = vmatmul.mubr.f32.gmra.mrb[0].mxu0 %v494
  %v567 = vpop.f32.mrb[0].mxu0
  %v568 = vadd.f32 0.0, %v567
  %v569 = vpop.f32.mrb[0].mxu0
  %570 = vdwg.mxu0
  %v572 = vsel %vm151, %v143, 0
  %v575 = vsel %vm151, %v144, 0
  %577 = vmatprep.subr.mxu0 0.0
  %578 = vmatpush1.msra.mxu0 %v489
  %579 = vmatprep.subr.mxu0 0.0
  %580 = vmatpush1.msra.mxu0 0.0
  %581 = vmatprep.subr.mxu0 0.0
  %582 = vmatpush1.msra.mxu0 0.0
  %583 = vmatprep.subr.mxu0 0.0
  %584 = vmatpush1.msra.mxu0 0.0
  %585 = vmatprep.subr.mxu0 0.0
  %586 = vmatpush1.msra.mxu0 0.0
  %587 = vmatprep.subr.mxu0 0.0
  %588 = vmatpush1.msra.mxu0 0.0
  %589 = vmatprep.subr.mxu0 0.0
  %590 = vmatpush1.msra.mxu0 0.0
  %591 = vmatprep.subr.mxu0 0.0
  %592 = vmatpush1.msra.mxu0 0.0
  %593 = vmatprep.subr.mxu0 0.0
  %594 = vmatpush1.msra.mxu0 0.0
  %595 = vmatprep.subr.mxu0 0.0
  %596 = vmatpush1.msra.mxu0 0.0
  %597 = vmatprep.subr.mxu0 0.0
  %598 = vmatpush1.msra.mxu0 0.0
  %599 = vmatprep.subr.mxu0 0.0
  %600 = vmatpush1.msra.mxu0 0.0
  %601 = vmatprep.subr.mxu0 0.0
  %602 = vmatpush1.msra.mxu0 0.0
  %603 = vmatprep.subr.mxu0 0.0
  %604 = vmatpush1.msra.mxu0 0.0
  %605 = vmatprep.subr.mxu0 0.0
  %606 = vmatpush1.msra.mxu0 0.0
  %607 = vmatprep.subr.mxu0 0.0
  %608 = vmatpush1.msra.mxu0 0.0
  %609 = vmatprep.subr.mxu0 0.0
  %610 = vmatpush1.msra.mxu0 0.0
  %611 = vmatprep.subr.mxu0 0.0
  %612 = vmatpush1.msra.mxu0 0.0
  %613 = vmatprep.subr.mxu0 0.0
  %614 = vmatpush1.msra.mxu0 0.0
  %615 = vmatprep.subr.mxu0 0.0
  %616 = vmatpush1.msra.mxu0 0.0
  %617 = vmatprep.subr.mxu0 0.0
  %618 = vmatpush1.msra.mxu0 0.0
  %619 = vmatprep.subr.mxu0 0.0
  %620 = vmatpush1.msra.mxu0 0.0
  %621 = vmatprep.subr.mxu0 0.0
  %622 = vmatpush1.msra.mxu0 0.0
  %623 = vmatprep.subr.mxu0 0.0
  %624 = vmatpush1.msra.mxu0 0.0
  %625 = vmatprep.subr.mxu0 0.0
  %626 = vmatpush1.msra.mxu0 0.0
  %627 = vmatprep.subr.mxu0 0.0
  %628 = vmatpush1.msra.mxu0 0.0
  %629 = vmatprep.subr.mxu0 0.0
  %630 = vmatpush1.msra.mxu0 0.0
  %631 = vmatprep.subr.mxu0 0.0
  %632 = vmatpush1.msra.mxu0 0.0
  %633 = vmatprep.subr.mxu0 0.0
  %634 = vmatpush1.msra.mxu0 0.0
  %635 = vmatprep.subr.mxu0 0.0
  %636 = vmatpush1.msra.mxu0 0.0
  %637 = vmatprep.subr.mxu0 0.0
  %638 = vmatpush1.msra.mxu0 0.0
  %639 = vmatprep.subr.mxu0 0.0
  %640 = vmatpush1.msra.mxu0 0.0
  %641 = vmatprep.mubr.f32.mxu0 0.0
  %642 = vmatmul.mubr.f32.gmra.mrb[0].mxu0 %v572
  %v643 = vpop.f32.mrb[0].mxu0
  %v644 = vadd.f32 0.0, %v643
  %v645 = vpop.f32.mrb[0].mxu0
  %646 = vmatprep.mubr.f32.mxu0 0.0
  %647 = vmatmul.mubr.f32.gmra.mrb[0].mxu0 %v575
  %v648 = vpop.f32.mrb[0].mxu0
  %v649 = vadd.f32 0.0, %v648
  %v650 = vpop.f32.mrb[0].mxu0
  %651 = vdwg.mxu0
  %v653 = vsel %vm151, %v644, 0
  %v656 = vsel %vm151, %v649, 0
  %658 = vmatprep.subr.mxu0 0.0
  %659 = vmatpush1.xpose.msra.mxu0 %v572
  %660 = vmatprep.subr.mxu0 0.0
  %661 = vmatpush1.xpose.msra.mxu0 %v575
  %662 = vmatprep.subr.mxu0 0.0
  %663 = vmatpush1.xpose.msra.mxu0 0.0
  %664 = vmatprep.subr.mxu0 0.0
  %665 = vmatpush1.xpose.msra.mxu0 0.0
  %666 = vmatprep.subr.mxu0 0.0
  %667 = vmatpush1.xpose.msra.mxu0 0.0
  %668 = vmatprep.subr.mxu0 0.0
  %669 = vmatpush1.xpose.msra.mxu0 0.0
  %670 = vmatprep.subr.mxu0 0.0
  %671 = vmatpush1.xpose.msra.mxu0 0.0
  %672 = vmatprep.subr.mxu0 0.0
  %673 = vmatpush1.xpose.msra.mxu0 0.0
  %674 = vmatprep.subr.mxu0 0.0
  %675 = vmatpush1.xpose.msra.mxu0 0.0
  %676 = vmatprep.subr.mxu0 0.0
  %677 = vmatpush1.xpose.msra.mxu0 0.0
  %678 = vmatprep.subr.mxu0 0.0
  %679 = vmatpush1.xpose.msra.mxu0 0.0
  %680 = vmatprep.subr.mxu0 0.0
  %681 = vmatpush1.xpose.msra.mxu0 0.0
  %682 = vmatprep.subr.mxu0 0.0
  %683 = vmatpush1.xpose.msra.mxu0 0.0
  %684 = vmatprep.subr.mxu0 0.0
  %685 = vmatpush1.xpose.msra.mxu0 0.0
  %686 = vmatprep.subr.mxu0 0.0
  %687 = vmatpush1.xpose.msra.mxu0 0.0
  %688 = vmatprep.subr.mxu0 0.0
  %689 = vmatpush1.xpose.msra.mxu0 0.0
  %690 = vmatprep.subr.mxu0 0.0
  %691 = vmatpush1.xpose.msra.mxu0 0.0
  %692 = vmatprep.subr.mxu0 0.0
  %693 = vmatpush1.xpose.msra.mxu0 0.0
  %694 = vmatprep.subr.mxu0 0.0
  %695 = vmatpush1.xpose.msra.mxu0 0.0
  %696 = vmatprep.subr.mxu0 0.0
  %697 = vmatpush1.xpose.msra.mxu0 0.0
  %698 = vmatprep.subr.mxu0 0.0
  %699 = vmatpush1.xpose.msra.mxu0 0.0
  %700 = vmatprep.subr.mxu0 0.0
  %701 = vmatpush1.xpose.msra.mxu0 0.0
  %702 = vmatprep.subr.mxu0 0.0
  %703 = vmatpush1.xpose.msra.mxu0 0.0
  %704 = vmatprep.subr.mxu0 0.0
  %705 = vmatpush1.xpose.msra.mxu0 0.0
  %706 = vmatprep.subr.mxu0 0.0
  %707 = vmatpush1.xpose.msra.mxu0 0.0
  %708 = vmatprep.subr.mxu0 0.0
  %709 = vmatpush1.xpose.msra.mxu0 0.0
  %710 = vmatprep.subr.mxu0 0.0
  %711 = vmatpush1.xpose.msra.mxu0 0.0
  %712 = vmatprep.subr.mxu0 0.0
  %713 = vmatpush1.xpose.msra.mxu0 0.0
  %714 = vmatprep.subr.mxu0 0.0
  %715 = vmatpush1.xpose.msra.mxu0 0.0
  %716 = vmatprep.subr.mxu0 0.0
  %717 = vmatpush1.xpose.msra.mxu0 0.0
  %718 = vmatprep.subr.mxu0 0.0
  %719 = vmatpush1.xpose.msra.mxu0 0.0
  %720 = vmatprep.subr.mxu0 0.0
  %721 = vmatpush1.xpose.msra.mxu0 0.0
  %722 = vmatprep.mubr.f32.mxu0 0.0
  %723 = vmatmul.mubr.f32.gmra.mrb[0].mxu0 %v653
  %v724 = vpop.f32.mrb[0].mxu0
  %v725 = vadd.f32 0.0, %v724
  %v726 = vpop.f32.mrb[0].mxu0
  %727 = vmatprep.mubr.f32.mxu0 0.0
  %728 = vmatmul.mubr.f32.gmra.mrb[0].mxu0 %v656
  %v729 = vpop.f32.mrb[0].mxu0
  %v730 = vadd.f32 0.0, %v729
  %v731 = vpop.f32.mrb[0].mxu0
  %732 = vdwg.mxu0
  %v734 = vsel %vm151, %v563, 0
  %v737 = vsel %vm151, %v568, 0
  %739 = vmatprep.subr.mxu0 0.0
  %740 = vmatpush1.xpose.msra.mxu0 %v491
  %741 = vmatprep.subr.mxu0 0.0
  %742 = vmatpush1.xpose.msra.mxu0 %v494
  %743 = vmatprep.subr.mxu0 0.0
  %744 = vmatpush1.xpose.msra.mxu0 0.0
  %745 = vmatprep.subr.mxu0 0.0
  %746 = vmatpush1.xpose.msra.mxu0 0.0
  %747 = vmatprep.subr.mxu0 0.0
  %748 = vmatpush1.xpose.msra.mxu0 0.0
  %749 = vmatprep.subr.mxu0 0.0
  %750 = vmatpush1.xpose.msra.mxu0 0.0
  %751 = vmatprep.subr.mxu0 0.0
  %752 = vmatpush1.xpose.msra.mxu0 0.0
  %753 = vmatprep.subr.mxu0 0.0
  %754 = vmatpush1.xpose.msra.mxu0 0.0
  %755 = vmatprep.subr.mxu0 0.0
  %756 = vmatpush1.xpose.msra.mxu0 0.0
  %757 = vmatprep.subr.mxu0 0.0
  %758 = vmatpush1.xpose.msra.mxu0 0.0
  %759 = vmatprep.subr.mxu0 0.0
  %760 = vmatpush1.xpose.msra.mxu0 0.0
  %761 = vmatprep.subr.mxu0 0.0
  %762 = vmatpush1.xpose.msra.mxu0 0.0
  %763 = vmatprep.subr.mxu0 0.0
  %764 = vmatpush1.xpose.msra.mxu0 0.0
  %765 = vmatprep.subr.mxu0 0.0
  %766 = vmatpush1.xpose.msra.mxu0 0.0
  %767 = vmatprep.subr.mxu0 0.0
  %768 = vmatpush1.xpose.msra.mxu0 0.0
  %769 = vmatprep.subr.mxu0 0.0
  %770 = vmatpush1.xpose.msra.mxu0 0.0
  %771 = vmatprep.subr.mxu0 0.0
  %772 = vmatpush1.xpose.msra.mxu0 0.0
  %773 = vmatprep.subr.mxu0 0.0
  %774 = vmatpush1.xpose.msra.mxu0 0.0
  %775 = vmatprep.subr.mxu0 0.0
  %776 = vmatpush1.xpose.msra.mxu0 0.0
  %777 = vmatprep.subr.mxu0 0.0
  %778 = vmatpush1.xpose.msra.mxu0 0.0
  %779 = vmatprep.subr.mxu0 0.0
  %780 = vmatpush1.xpose.msra.mxu0 0.0
  %781 = vmatprep.subr.mxu0 0.0
  %782 = vmatpush1.xpose.msra.mxu0 0.0
  %783 = vmatprep.subr.mxu0 0.0
  %784 = vmatpush1.xpose.msra.mxu0 0.0
  %785 = vmatprep.subr.mxu0 0.0
  %786 = vmatpush1.xpose.msra.mxu0 0.0
  %787 = vmatprep.subr.mxu0 0.0
  %788 = vmatpush1.xpose.msra.mxu0 0.0
  %789 = vmatprep.subr.mxu0 0.0
  %790 = vmatpush1.xpose.msra.mxu0 0.0
  %791 = vmatprep.subr.mxu0 0.0
  %792 = vmatpush1.xpose.msra.mxu0 0.0
  %793 = vmatprep.subr.mxu0 0.0
  %794 = vmatpush1.xpose.msra.mxu0 0.0
  %795 = vmatprep.subr.mxu0 0.0
  %796 = vmatpush1.xpose.msra.mxu0 0.0
  %797 = vmatprep.subr.mxu0 0.0
  %798 = vmatpush1.xpose.msra.mxu0 0.0
  %799 = vmatprep.subr.mxu0 0.0
  %800 = vmatpush1.xpose.msra.mxu0 0.0
  %801 = vmatprep.subr.mxu0 0.0
  %802 = vmatpush1.xpose.msra.mxu0 0.0
  %803 = vmatprep.mubr.f32.mxu0 0.0
  %804 = vmatmul.mubr.f32.gmra.mrb[0].mxu0 %v734
  %v805 = vpop.f32.mrb[0].mxu0
  %v806 = vadd.f32 %v725, %v805
  %v807 = vpop.f32.mrb[0].mxu0
  %808 = vmatprep.mubr.f32.mxu0 0.0
  %809 = vmatmul.mubr.f32.gmra.mrb[0].mxu0 %v737
  %v810 = vpop.f32.mrb[0].mxu0
  %v811 = vadd.f32 %v730, %v810
  %v812 = vpop.f32.mrb[0].mxu0
  %813 = vdwg.mxu0
  %v814 = vld [vmem:[%s17] sm:$0xff]
  %v815 = vld [vmem:[%s17 + $0x8] sm:$0xff]
  %v816 = vld [vmem:[%s17 + $0x10] sm:$0xff]
  %v817 = vld [vmem:[%s17 + $0x18] sm:$0xff]
  %v818 = vld [vmem:[%s19] sm:$0xff]
  %v819 = vld [vmem:[%s19 + $0x8] sm:$0xff]
  %v820 = vld [vmem:[%s19 + $0x10] sm:$0xff]
  %v821 = vld [vmem:[%s19 + $0x18] sm:$0xff]
  %v822 = vld [vmem:[%s21] sm:$0x3]
  %v823 = vld [vmem:[%s23] sm:$0x3]
  %v824 = vld [vmem:[%s25] sm:$0x3]
  %v826 = vlaneseq
  %v827 = vshrl.u32 %v826, 7
  %v828 = vsub.s32 0, %v827
  %v829 = vrot.slane %v822, %v828
  %v830 = vlaneseq
  %v831 = vshrl.u32 %v830, 7
  %v832 = vsub.s32 1, %v831
  %v833 = vrot.slane %v822, %v832
  %v836 = vmul.f32 %v814, %v829
  %v837 = vmul.f32 %v815, %v833
  %v838 = vmul.f32 %v816, %v829
  %v839 = vmul.f32 %v817, %v833
  %v841 = vlaneseq
  %v842 = vshrl.u32 %v841, 7
  %v843 = vsub.s32 0, %v842
  %v844 = vrot.slane %v823, %v843
  %v845 = vlaneseq
  %v846 = vshrl.u32 %v845, 7
  %v847 = vsub.s32 1, %v846
  %v848 = vrot.slane %v823, %v847
  %v851 = vmul.f32 %v818, %v844
  %v852 = vmul.f32 %v819, %v848
  %v853 = vmul.f32 %v820, %v844
  %v854 = vmul.f32 %v821, %v848
  %v855 = vadd.f32 %v836, %v851
  %v856 = vadd.f32 %v837, %v852
  %v857 = vadd.f32 %v838, %v853
  %v858 = vadd.f32 %v839, %v854
  %v860 = vlaneseq
  %v861 = vshrl.u32 %v860, 7
  %v862 = vsub.s32 0, %v861
  %v863 = vrot.slane %v824, %v862
  %v864 = vlaneseq
  %v865 = vshrl.u32 %v864, 7
  %v866 = vsub.s32 1, %v865
  %v867 = vrot.slane %v824, %v866
  %v870 = vadd.f32 %v855, %v863
  %v871 = vadd.f32 %v856, %v867
  %v872 = vadd.f32 %v857, %v863
  %v873 = vadd.f32 %v858, %v867
  %v874 = vld [vmem:[%s27] sm:$0xf]
  %v875 = vld [vmem:[%s27 + $0x4] sm:$0xf]
  %v876 = vld [vmem:[%s27 + $0x8] sm:$0xf]
  %v877 = vld [vmem:[%s27 + $0xc] sm:$0xf]
  %v878 = vld [vmem:[%s27 + $0x10] sm:$0xf]
  %v879 = vld [vmem:[%s27 + $0x14] sm:$0xf]
  %v880 = vld [vmem:[%s27 + $0x18] sm:$0xf]
  %v881 = vld [vmem:[%s27 + $0x1c] sm:$0xf]
  %v882 = vld [vmem:[%s27 + $0x20] sm:$0xf]
  %v883 = vld [vmem:[%s27 + $0x24] sm:$0xf]
  %v884 = vld [vmem:[%s27 + $0x28] sm:$0xf]
  %v885 = vld [vmem:[%s27 + $0x2c] sm:$0xf]
  %v886 = vld [vmem:[%s27 + $0x30] sm:$0xf]
  %v887 = vld [vmem:[%s27 + $0x34] sm:$0xf]
  %v888 = vld [vmem:[%s27 + $0x38] sm:$0xf]
  %v889 = vld [vmem:[%s27 + $0x3c] sm:$0xf]
  %v890 = vld [vmem:[%s27 + $0x40] sm:$0xf]
  %v891 = vld [vmem:[%s27 + $0x44] sm:$0xf]
  %v892 = vld [vmem:[%s27 + $0x48] sm:$0xf]
  %v893 = vld [vmem:[%s27 + $0x4c] sm:$0xf]
  %v894 = vld [vmem:[%s27 + $0x50] sm:$0xf]
  %v895 = vld [vmem:[%s27 + $0x54] sm:$0xf]
  %v896 = vld [vmem:[%s27 + $0x58] sm:$0xf]
  %v897 = vld [vmem:[%s27 + $0x5c] sm:$0xf]
  %v898 = vld [vmem:[%s27 + $0x60] sm:$0xf]
  %v899 = vld [vmem:[%s27 + $0x64] sm:$0xf]
  %v900 = vld [vmem:[%s27 + $0x68] sm:$0xf]
  %v901 = vld [vmem:[%s27 + $0x6c] sm:$0xf]
  %v902 = vld [vmem:[%s27 + $0x70] sm:$0xf]
  %v903 = vld [vmem:[%s27 + $0x74] sm:$0xf]
  %v904 = vld [vmem:[%s27 + $0x78] sm:$0xf]
  %v905 = vld [vmem:[%s27 + $0x7c] sm:$0xf]
  %v906 = vld [vmem:[%s29] sm:$0x1]
  %v907 = vpack.c.bf16 %v872, %v870
  %v908 = vpack.c.bf16 %v873, %v871
  %v910 = vlaneseq
  %v911 = vshrl.u32 %v910, 7
  %v912 = vsub.s32 0, %v911
  %v913 = vrot.slane %v906, %v912
  %v947 = vunpack.c.l.b16 %v874
  %v948 = vunpack.c.l.b16 %v875
  %v949 = vunpack.c.l.b16 %v876
  %v950 = vunpack.c.l.b16 %v877
  %v951 = vunpack.c.l.b16 %v878
  %v952 = vunpack.c.l.b16 %v879
  %v953 = vunpack.c.l.b16 %v880
  %v954 = vunpack.c.l.b16 %v881
  %v955 = vunpack.c.l.b16 %v882
  %v956 = vunpack.c.l.b16 %v883
  %v957 = vunpack.c.l.b16 %v884
  %v958 = vunpack.c.l.b16 %v885
  %v959 = vunpack.c.l.b16 %v886
  %v960 = vunpack.c.l.b16 %v887
  %v961 = vunpack.c.l.b16 %v888
  %v962 = vunpack.c.l.b16 %v889
  %v963 = vunpack.c.l.b16 %v890
  %v964 = vunpack.c.l.b16 %v891
  %v965 = vunpack.c.l.b16 %v892
  %v966 = vunpack.c.l.b16 %v893
  %v967 = vunpack.c.l.b16 %v894
  %v968 = vunpack.c.l.b16 %v895
  %v969 = vunpack.c.l.b16 %v896
  %v970 = vunpack.c.l.b16 %v897
  %v971 = vunpack.c.l.b16 %v898
  %v972 = vunpack.c.l.b16 %v899
  %v973 = vunpack.c.l.b16 %v900
  %v974 = vunpack.c.l.b16 %v901
  %v975 = vunpack.c.l.b16 %v902
  %v976 = vunpack.c.l.b16 %v903
  %v977 = vunpack.c.l.b16 %v904
  %v978 = vunpack.c.l.b16 %v905
  %v979 = vpack.c.b16 %v948, %v947
  %v980 = vpack.c.b16 %v950, %v949
  %v981 = vpack.c.b16 %v952, %v951
  %v982 = vpack.c.b16 %v954, %v953
  %v983 = vpack.c.b16 %v956, %v955
  %v984 = vpack.c.b16 %v958, %v957
  %v985 = vpack.c.b16 %v960, %v959
  %v986 = vpack.c.b16 %v962, %v961
  %v987 = vpack.c.b16 %v964, %v963
  %v988 = vpack.c.b16 %v966, %v965
  %v989 = vpack.c.b16 %v968, %v967
  %v990 = vpack.c.b16 %v970, %v969
  %v991 = vpack.c.b16 %v972, %v971
  %v992 = vpack.c.b16 %v974, %v973
  %v993 = vpack.c.b16 %v976, %v975
  %v994 = vpack.c.b16 %v978, %v977
  %1011 = vmatprep.subr.bf16.mxu0 0
  %1012 = vmatpush1.bf16.msra.mxu0 %v979
  %1013 = vmatprep.subr.bf16.mxu0 0
  %1014 = vmatpush1.bf16.msra.mxu0 %v980
  %1015 = vmatprep.subr.bf16.mxu0 0
  %1016 = vmatpush1.bf16.msra.mxu0 %v981
  %1017 = vmatprep.subr.bf16.mxu0 0
  %1018 = vmatpush1.bf16.msra.mxu0 %v982
  %1019 = vmatprep.subr.bf16.mxu0 0
  %1020 = vmatpush1.bf16.msra.mxu0 %v983
  %1021 = vmatprep.subr.bf16.mxu0 0
  %1022 = vmatpush1.bf16.msra.mxu0 %v984
  %1023 = vmatprep.subr.bf16.mxu0 0
  %1024 = vmatpush1.bf16.msra.mxu0 %v985
  %1025 = vmatprep.subr.bf16.mxu0 0
  %1026 = vmatpush1.bf16.msra.mxu0 %v986
  %1027 = vmatprep.subr.bf16.mxu0 0
  %1028 = vmatpush1.bf16.msra.mxu0 %v987
  %1029 = vmatprep.subr.bf16.mxu0 0
  %1030 = vmatpush1.bf16.msra.mxu0 %v988
  %1031 = vmatprep.subr.bf16.mxu0 0
  %1032 = vmatpush1.bf16.msra.mxu0 %v989
  %1033 = vmatprep.subr.bf16.mxu0 0
  %1034 = vmatpush1.bf16.msra.mxu0 %v990
  %1035 = vmatprep.subr.bf16.mxu0 0
  %1036 = vmatpush1.bf16.msra.mxu0 %v991
  %1037 = vmatprep.subr.bf16.mxu0 0
  %1038 = vmatpush1.bf16.msra.mxu0 %v992
  %1039 = vmatprep.subr.bf16.mxu0 0
  %1040 = vmatpush1.bf16.msra.mxu0 %v993
  %1041 = vmatprep.subr.bf16.mxu0 0
  %1042 = vmatpush1.bf16.msra.mxu0 %v994
  %1043 = vmatprep.mubr.bf16.mxu0 %v908
  %1044 = vmatmul.mubr.bf16.gmra.mrb[0].mxu0 %v907
  %v1045 = vpop.f32.mrb[0].mxu0
  %v1046 = vadd.f32 %v913, %v1045
  %v1047 = vpop.f32.mrb[0].mxu0
  %v1048 = vpop.f32.mrb[0].mxu0
  %v1049 = vadd.f32 %v913, %v1048
  %v1050 = vpop.f32.mrb[0].mxu0
  %1051 = vdwg.mxu0
  %v1052 = vld [vmem:[%s31] sm:$0xf]
  %v1053 = vld [vmem:[%s31 + $0x4] sm:$0xf]
  %v1054 = vld [vmem:[%s31 + $0x8] sm:$0xf]
  %v1055 = vld [vmem:[%s31 + $0xc] sm:$0xf]
  %v1056 = vld [vmem:[%s31 + $0x10] sm:$0xf]
  %v1057 = vld [vmem:[%s31 + $0x14] sm:$0xf]
  %v1058 = vld [vmem:[%s31 + $0x18] sm:$0xf]
  %v1059 = vld [vmem:[%s31 + $0x1c] sm:$0xf]
  %v1060 = vld [vmem:[%s31 + $0x20] sm:$0xf]
  %v1061 = vld [vmem:[%s31 + $0x24] sm:$0xf]
  %v1062 = vld [vmem:[%s31 + $0x28] sm:$0xf]
  %v1063 = vld [vmem:[%s31 + $0x2c] sm:$0xf]
  %v1064 = vld [vmem:[%s31 + $0x30] sm:$0xf]
  %v1065 = vld [vmem:[%s31 + $0x34] sm:$0xf]
  %v1066 = vld [vmem:[%s31 + $0x38] sm:$0xf]
  %v1067 = vld [vmem:[%s31 + $0x3c] sm:$0xf]
  %v1068 = vld [vmem:[%s31 + $0x40] sm:$0xf]
  %v1069 = vld [vmem:[%s31 + $0x44] sm:$0xf]
  %v1070 = vld [vmem:[%s31 + $0x48] sm:$0xf]
  %v1071 = vld [vmem:[%s31 + $0x4c] sm:$0xf]
  %v1072 = vld [vmem:[%s31 + $0x50] sm:$0xf]
  %v1073 = vld [vmem:[%s31 + $0x54] sm:$0xf]
  %v1074 = vld [vmem:[%s31 + $0x58] sm:$0xf]
  %v1075 = vld [vmem:[%s31 + $0x5c] sm:$0xf]
  %v1076 = vld [vmem:[%s31 + $0x60] sm:$0xf]
  %v1077 = vld [vmem:[%s31 + $0x64] sm:$0xf]
  %v1078 = vld [vmem:[%s31 + $0x68] sm:$0xf]
  %v1079 = vld [vmem:[%s31 + $0x6c] sm:$0xf]
  %v1080 = vld [vmem:[%s31 + $0x70] sm:$0xf]
  %v1081 = vld [vmem:[%s31 + $0x74] sm:$0xf]
  %v1082 = vld [vmem:[%s31 + $0x78] sm:$0xf]
  %v1083 = vld [vmem:[%s31 + $0x7c] sm:$0xf]
  %v1116 = vunpack.c.l.b16 %v1052
  %v1117 = vunpack.c.l.b16 %v1053
  %v1118 = vunpack.c.l.b16 %v1054
  %v1119 = vunpack.c.l.b16 %v1055
  %v1120 = vunpack.c.l.b16 %v1056
  %v1121 = vunpack.c.l.b16 %v1057
  %v1122 = vunpack.c.l.b16 %v1058
  %v1123 = vunpack.c.l.b16 %v1059
  %v1124 = vunpack.c.l.b16 %v1060
  %v1125 = vunpack.c.l.b16 %v1061
  %v1126 = vunpack.c.l.b16 %v1062
  %v1127 = vunpack.c.l.b16 %v1063
  %v1128 = vunpack.c.l.b16 %v1064
  %v1129 = vunpack.c.l.b16 %v1065
  %v1130 = vunpack.c.l.b16 %v1066
  %v1131 = vunpack.c.l.b16 %v1067
  %v1132 = vunpack.c.l.b16 %v1068
  %v1133 = vunpack.c.l.b16 %v1069
  %v1134 = vunpack.c.l.b16 %v1070
  %v1135 = vunpack.c.l.b16 %v1071
  %v1136 = vunpack.c.l.b16 %v1072
  %v1137 = vunpack.c.l.b16 %v1073
  %v1138 = vunpack.c.l.b16 %v1074
  %v1139 = vunpack.c.l.b16 %v1075
  %v1140 = vunpack.c.l.b16 %v1076
  %v1141 = vunpack.c.l.b16 %v1077
  %v1142 = vunpack.c.l.b16 %v1078
  %v1143 = vunpack.c.l.b16 %v1079
  %v1144 = vunpack.c.l.b16 %v1080
  %v1145 = vunpack.c.l.b16 %v1081
  %v1146 = vunpack.c.l.b16 %v1082
  %v1147 = vunpack.c.l.b16 %v1083
  %v1148 = vpack.c.b16 %v1117, %v1116
  %v1149 = vpack.c.b16 %v1119, %v1118
  %v1150 = vpack.c.b16 %v1121, %v1120
  %v1151 = vpack.c.b16 %v1123, %v1122
  %v1152 = vpack.c.b16 %v1125, %v1124
  %v1153 = vpack.c.b16 %v1127, %v1126
  %v1154 = vpack.c.b16 %v1129, %v1128
  %v1155 = vpack.c.b16 %v1131, %v1130
  %v1156 = vpack.c.b16 %v1133, %v1132
  %v1157 = vpack.c.b16 %v1135, %v1134
  %v1158 = vpack.c.b16 %v1137, %v1136
  %v1159 = vpack.c.b16 %v1139, %v1138
  %v1160 = vpack.c.b16 %v1141, %v1140
  %v1161 = vpack.c.b16 %v1143, %v1142
  %v1162 = vpack.c.b16 %v1145, %v1144
  %v1163 = vpack.c.b16 %v1147, %v1146
  %1180 = vmatprep.subr.bf16.mxu0 0
  %1181 = vmatpush1.bf16.msra.mxu0 %v1148
  %1182 = vmatprep.subr.bf16.mxu0 0
  %1183 = vmatpush1.bf16.msra.mxu0 %v1149
  %1184 = vmatprep.subr.bf16.mxu0 0
  %1185 = vmatpush1.bf16.msra.mxu0 %v1150
  %1186 = vmatprep.subr.bf16.mxu0 0
  %1187 = vmatpush1.bf16.msra.mxu0 %v1151
  %1188 = vmatprep.subr.bf16.mxu0 0
  %1189 = vmatpush1.bf16.msra.mxu0 %v1152
  %1190 = vmatprep.subr.bf16.mxu0 0
  %1191 = vmatpush1.bf16.msra.mxu0 %v1153
  %1192 = vmatprep.subr.bf16.mxu0 0
  %1193 = vmatpush1.bf16.msra.mxu0 %v1154
  %1194 = vmatprep.subr.bf16.mxu0 0
  %1195 = vmatpush1.bf16.msra.mxu0 %v1155
  %1196 = vmatprep.subr.bf16.mxu0 0
  %1197 = vmatpush1.bf16.msra.mxu0 %v1156
  %1198 = vmatprep.subr.bf16.mxu0 0
  %1199 = vmatpush1.bf16.msra.mxu0 %v1157
  %1200 = vmatprep.subr.bf16.mxu0 0
  %1201 = vmatpush1.bf16.msra.mxu0 %v1158
  %1202 = vmatprep.subr.bf16.mxu0 0
  %1203 = vmatpush1.bf16.msra.mxu0 %v1159
  %1204 = vmatprep.subr.bf16.mxu0 0
  %1205 = vmatpush1.bf16.msra.mxu0 %v1160
  %1206 = vmatprep.subr.bf16.mxu0 0
  %1207 = vmatpush1.bf16.msra.mxu0 %v1161
  %1208 = vmatprep.subr.bf16.mxu0 0
  %1209 = vmatpush1.bf16.msra.mxu0 %v1162
  %1210 = vmatprep.subr.bf16.mxu0 0
  %1211 = vmatpush1.bf16.msra.mxu0 %v1163
  %1212 = vmatprep.mubr.bf16.mxu0 %v908
  %1213 = vmatmul.mubr.bf16.gmra.mrb[0].mxu0 %v907
  %v1214 = vpop.f32.mrb[0].mxu0
  %v1215 = vadd.f32 0.0, %v1214
  %v1216 = vpop.f32.mrb[0].mxu0
  %v1217 = vpop.f32.mrb[0].mxu0
  %v1218 = vadd.f32 0.0, %v1217
  %v1219 = vpop.f32.mrb[0].mxu0
  %1220 = vdwg.mxu0
  %v1221 = vld [vmem:[%s33] sm:$0xff]
  %v1222 = vld [vmem:[%s33 + $0x8] sm:$0xff]
  %v1223 = vld [vmem:[%s33 + $0x10] sm:$0xff]
  %v1224 = vld [vmem:[%s33 + $0x18] sm:$0xff]
  %v1225 = vld [vmem:[%s33 + $0x20] sm:$0xff]
  %v1226 = vld [vmem:[%s33 + $0x28] sm:$0xff]
  %v1227 = vld [vmem:[%s33 + $0x30] sm:$0xff]
  %v1228 = vld [vmem:[%s33 + $0x38] sm:$0xff]
  %v1229 = vld [vmem:[%s33 + $0x40] sm:$0xff]
  %v1230 = vld [vmem:[%s33 + $0x48] sm:$0xff]
  %v1231 = vld [vmem:[%s33 + $0x50] sm:$0xff]
  %v1232 = vld [vmem:[%s33 + $0x58] sm:$0xff]
  %v1233 = vld [vmem:[%s33 + $0x60] sm:$0xff]
  %v1234 = vld [vmem:[%s33 + $0x68] sm:$0xff]
  %v1235 = vld [vmem:[%s33 + $0x70] sm:$0xff]
  %v1236 = vld [vmem:[%s33 + $0x78] sm:$0xff]
  %v1237 = vld [vmem:[%s33 + $0x80] sm:$0xff]
  %v1238 = vld [vmem:[%s33 + $0x88] sm:$0xff]
  %v1239 = vld [vmem:[%s33 + $0x90] sm:$0xff]
  %v1240 = vld [vmem:[%s33 + $0x98] sm:$0xff]
  %v1241 = vld [vmem:[%s33 + $0xa0] sm:$0xff]
  %v1242 = vld [vmem:[%s33 + $0xa8] sm:$0xff]
  %v1243 = vld [vmem:[%s33 + $0xb0] sm:$0xff]
  %v1244 = vld [vmem:[%s33 + $0xb8] sm:$0xff]
  %v1245 = vld [vmem:[%s33 + $0xc0] sm:$0xff]
  %v1246 = vld [vmem:[%s33 + $0xc8] sm:$0xff]
  %v1247 = vld [vmem:[%s33 + $0xd0] sm:$0xff]
  %v1248 = vld [vmem:[%s33 + $0xd8] sm:$0xff]
  %v1249 = vld [vmem:[%s33 + $0xe0] sm:$0xff]
  %v1250 = vld [vmem:[%s33 + $0xe8] sm:$0xff]
  %v1251 = vld [vmem:[%s33 + $0xf0] sm:$0xff]
  %v1252 = vld [vmem:[%s33 + $0xf8] sm:$0xff]
  %v1253 = vld [vmem:[%s35] sm:$0x3]
  %v1254 = vld [vmem:[%s37] sm:$0xf]
  %v1255 = vld [vmem:[%s37 + $0x4] sm:$0xf]
  %v1256 = vld [vmem:[%s37 + $0x8] sm:$0xf]
  %v1257 = vld [vmem:[%s37 + $0xc] sm:$0xf]
  %v1258 = vld [vmem:[%s37 + $0x10] sm:$0xf]
  %v1259 = vld [vmem:[%s37 + $0x14] sm:$0xf]
  %v1260 = vld [vmem:[%s37 + $0x18] sm:$0xf]
  %v1261 = vld [vmem:[%s37 + $0x1c] sm:$0xf]
  %v1262 = vld [vmem:[%s37 + $0x20] sm:$0xf]
  %v1263 = vld [vmem:[%s37 + $0x24] sm:$0xf]
  %v1264 = vld [vmem:[%s37 + $0x28] sm:$0xf]
  %v1265 = vld [vmem:[%s37 + $0x2c] sm:$0xf]
  %v1266 = vld [vmem:[%s37 + $0x30] sm:$0xf]
  %v1267 = vld [vmem:[%s37 + $0x34] sm:$0xf]
  %v1268 = vld [vmem:[%s37 + $0x38] sm:$0xf]
  %v1269 = vld [vmem:[%s37 + $0x3c] sm:$0xf]
  %v1270 = vld [vmem:[%s37 + $0x40] sm:$0xf]
  %v1271 = vld [vmem:[%s37 + $0x44] sm:$0xf]
  %v1272 = vld [vmem:[%s37 + $0x48] sm:$0xf]
  %v1273 = vld [vmem:[%s37 + $0x4c] sm:$0xf]
  %v1274 = vld [vmem:[%s37 + $0x50] sm:$0xf]
  %v1275 = vld [vmem:[%s37 + $0x54] sm:$0xf]
  %v1276 = vld [vmem:[%s37 + $0x58] sm:$0xf]
  %v1277 = vld [vmem:[%s37 + $0x5c] sm:$0xf]
  %v1278 = vld [vmem:[%s37 + $0x60] sm:$0xf]
  %v1279 = vld [vmem:[%s37 + $0x64] sm:$0xf]
  %v1280 = vld [vmem:[%s37 + $0x68] sm:$0xf]
  %v1281 = vld [vmem:[%s37 + $0x6c] sm:$0xf]
  %v1282 = vld [vmem:[%s37 + $0x70] sm:$0xf]
  %v1283 = vld [vmem:[%s37 + $0x74] sm:$0xf]
  %v1284 = vld [vmem:[%s37 + $0x78] sm:$0xf]
  %v1285 = vld [vmem:[%s37 + $0x7c] sm:$0xf]
  %v1286 = vld [vmem:[%s39] sm:$0x1]
  %v1288 = vlaneseq
  %v1289 = vshrl.u32 %v1288, 7
  %v1290 = vsub.s32 0, %v1289
  %v1291 = vrot.slane %v1253, %v1290
  %v1292 = vlaneseq
  %v1293 = vshrl.u32 %v1292, 7
  %v1294 = vsub.s32 1, %v1293
  %v1295 = vrot.slane %v1253, %v1294
  %v1330 = vunpack.c.l.b16 %v1221
  %v1331 = vunpack.c.h.b16 %v1221
  %v1332 = vunpack.c.l.b16 %v1222
  %v1333 = vunpack.c.h.b16 %v1222
  %v1334 = vunpack.c.l.b16 %v1223
  %v1335 = vunpack.c.h.b16 %v1223
  %v1336 = vunpack.c.l.b16 %v1224
  %v1337 = vunpack.c.h.b16 %v1224
  %v1338 = vunpack.c.l.b16 %v1225
  %v1339 = vunpack.c.h.b16 %v1225
  %v1340 = vunpack.c.l.b16 %v1226
  %v1341 = vunpack.c.h.b16 %v1226
  %v1342 = vunpack.c.l.b16 %v1227
  %v1343 = vunpack.c.h.b16 %v1227
  %v1344 = vunpack.c.l.b16 %v1228
  %v1345 = vunpack.c.h.b16 %v1228
  %v1346 = vunpack.c.l.b16 %v1229
  %v1347 = vunpack.c.h.b16 %v1229
  %v1348 = vunpack.c.l.b16 %v1230
  %v1349 = vunpack.c.h.b16 %v1230
  %v1350 = vunpack.c.l.b16 %v1231
  %v1351 = vunpack.c.h.b16 %v1231
  %v1352 = vunpack.c.l.b16 %v1232
  %v1353 = vunpack.c.h.b16 %v1232
  %v1354 = vunpack.c.l.b16 %v1233
  %v1355 = vunpack.c.h.b16 %v1233
  %v1356 = vunpack.c.l.b16 %v1234
  %v1357 = vunpack.c.h.b16 %v1234
  %v1358 = vunpack.c.l.b16 %v1235
  %v1359 = vunpack.c.h.b16 %v1235
  %v1360 = vunpack.c.l.b16 %v1236
  %v1361 = vunpack.c.h.b16 %v1236
  %v1362 = vunpack.c.l.b16 %v1237
  %v1363 = vunpack.c.h.b16 %v1237
  %v1364 = vunpack.c.l.b16 %v1238
  %v1365 = vunpack.c.h.b16 %v1238
  %v1366 = vunpack.c.l.b16 %v1239
  %v1367 = vunpack.c.h.b16 %v1239
  %v1368 = vunpack.c.l.b16 %v1240
  %v1369 = vunpack.c.h.b16 %v1240
  %v1370 = vunpack.c.l.b16 %v1241
  %v1371 = vunpack.c.h.b16 %v1241
  %v1372 = vunpack.c.l.b16 %v1242
  %v1373 = vunpack.c.h.b16 %v1242
  %v1374 = vunpack.c.l.b16 %v1243
  %v1375 = vunpack.c.h.b16 %v1243
  %v1376 = vunpack.c.l.b16 %v1244
  %v1377 = vunpack.c.h.b16 %v1244
  %v1378 = vunpack.c.l.b16 %v1245
  %v1379 = vunpack.c.h.b16 %v1245
  %v1380 = vunpack.c.l.b16 %v1246
  %v1381 = vunpack.c.h.b16 %v1246
  %v1382 = vunpack.c.l.b16 %v1247
  %v1383 = vunpack.c.h.b16 %v1247
  %v1384 = vunpack.c.l.b16 %v1248
  %v1385 = vunpack.c.h.b16 %v1248
  %v1386 = vunpack.c.l.b16 %v1249
  %v1387 = vunpack.c.h.b16 %v1249
  %v1388 = vunpack.c.l.b16 %v1250
  %v1389 = vunpack.c.h.b16 %v1250
  %v1390 = vunpack.c.l.b16 %v1251
  %v1391 = vunpack.c.h.b16 %v1251
  %v1392 = vunpack.c.l.b16 %v1252
  %v1393 = vunpack.c.h.b16 %v1252
  %v1394 = vpack.c.b16 %v1332, %v1330
  %v1395 = vpack.c.b16 %v1333, %v1331
  %v1396 = vpack.c.b16 %v1336, %v1334
  %v1397 = vpack.c.b16 %v1337, %v1335
  %v1398 = vpack.c.b16 %v1340, %v1338
  %v1399 = vpack.c.b16 %v1341, %v1339
  %v1400 = vpack.c.b16 %v1344, %v1342
  %v1401 = vpack.c.b16 %v1345, %v1343
  %v1402 = vpack.c.b16 %v1348, %v1346
  %v1403 = vpack.c.b16 %v1349, %v1347
  %v1404 = vpack.c.b16 %v1352, %v1350
  %v1405 = vpack.c.b16 %v1353, %v1351
  %v1406 = vpack.c.b16 %v1356, %v1354
  %v1407 = vpack.c.b16 %v1357, %v1355
  %v1408 = vpack.c.b16 %v1360, %v1358
  %v1409 = vpack.c.b16 %v1361, %v1359
  %v1410 = vpack.c.b16 %v1364, %v1362
  %v1411 = vpack.c.b16 %v1365, %v1363
  %v1412 = vpack.c.b16 %v1368, %v1366
  %v1413 = vpack.c.b16 %v1369, %v1367
  %v1414 = vpack.c.b16 %v1372, %v1370
  %v1415 = vpack.c.b16 %v1373, %v1371
  %v1416 = vpack.c.b16 %v1376, %v1374
  %v1417 = vpack.c.b16 %v1377, %v1375
  %v1418 = vpack.c.b16 %v1380, %v1378
  %v1419 = vpack.c.b16 %v1381, %v1379
  %v1420 = vpack.c.b16 %v1384, %v1382
  %v1421 = vpack.c.b16 %v1385, %v1383
  %v1422 = vpack.c.b16 %v1388, %v1386
  %v1423 = vpack.c.b16 %v1389, %v1387
  %v1424 = vpack.c.b16 %v1392, %v1390
  %v1425 = vpack.c.b16 %v1393, %v1391
  %1458 = vmatprep.subr.bf16.mxu0 %v1395
  %1459 = vmatpush1.bf16.msra.mxu0 %v1394
  %1460 = vmatprep.subr.bf16.mxu0 %v1397
  %1461 = vmatpush1.bf16.msra.mxu0 %v1396
  %1462 = vmatprep.subr.bf16.mxu0 %v1399
  %1463 = vmatpush1.bf16.msra.mxu0 %v1398
  %1464 = vmatprep.subr.bf16.mxu0 %v1401
  %1465 = vmatpush1.bf16.msra.mxu0 %v1400
  %1466 = vmatprep.subr.bf16.mxu0 %v1403
  %1467 = vmatpush1.bf16.msra.mxu0 %v1402
  %1468 = vmatprep.subr.bf16.mxu0 %v1405
  %1469 = vmatpush1.bf16.msra.mxu0 %v1404
  %1470 = vmatprep.subr.bf16.mxu0 %v1407
  %1471 = vmatpush1.bf16.msra.mxu0 %v1406
  %1472 = vmatprep.subr.bf16.mxu0 %v1409
  %1473 = vmatpush1.bf16.msra.mxu0 %v1408
  %1474 = vmatprep.subr.bf16.mxu0 %v1411
  %1475 = vmatpush1.bf16.msra.mxu0 %v1410
  %1476 = vmatprep.subr.bf16.mxu0 %v1413
  %1477 = vmatpush1.bf16.msra.mxu0 %v1412
  %1478 = vmatprep.subr.bf16.mxu0 %v1415
  %1479 = vmatpush1.bf16.msra.mxu0 %v1414
  %1480 = vmatprep.subr.bf16.mxu0 %v1417
  %1481 = vmatpush1.bf16.msra.mxu0 %v1416
  %1482 = vmatprep.subr.bf16.mxu0 %v1419
  %1483 = vmatpush1.bf16.msra.mxu0 %v1418
  %1484 = vmatprep.subr.bf16.mxu0 %v1421
  %1485 = vmatpush1.bf16.msra.mxu0 %v1420
  %1486 = vmatprep.subr.bf16.mxu0 %v1423
  %1487 = vmatpush1.bf16.msra.mxu0 %v1422
  %1488 = vmatprep.subr.bf16.mxu0 %v1425
  %1489 = vmatpush1.bf16.msra.mxu0 %v1424
  %1490 = vmatprep.mubr.bf16.mxu0 %v908
  %1491 = vmatmul.mubr.bf16.gmra.mrb[0].mxu0 %v907
  %v1492 = vpop.f32.mrb[0].mxu0
  %v1493 = vadd.f32 %v1291, %v1492
  %v1494 = vpop.f32.mrb[0].mxu0
  %v1495 = vadd.f32 %v1295, %v1494
  %v1496 = vpop.f32.mrb[0].mxu0
  %v1497 = vadd.f32 %v1291, %v1496
  %v1498 = vpop.f32.mrb[0].mxu0
  %v1499 = vadd.f32 %v1295, %v1498
  %1500 = vdwg.mxu0
  %v1501 = vmax.f32 %v1493, 0.0
  %v1502 = vmax.f32 %v1495, 0.0
  %v1503 = vmax.f32 %v1497, 0.0
  %v1504 = vmax.f32 %v1499, 0.0
  %v1505 = vpack.c.bf16 %v811, %v806
  %v1506 = vpack.c.bf16 %v1503, %v1501
  %v1507 = vpack.c.bf16 %v1504, %v1502
  %v1509 = vsel %vm306, %v1505, 0
  %1511 = vmatprep.subr.bf16.mxu0 %v1507
  %1512 = vmatpush1.bf16.msra.mxu0 %v1506
  %1513 = vmatprep.subr.bf16.mxu0 0
  %1514 = vmatpush1.bf16.msra.mxu0 0
  %1515 = vmatprep.subr.bf16.mxu0 0
  %1516 = vmatpush1.bf16.msra.mxu0 0
  %1517 = vmatprep.subr.bf16.mxu0 0
  %1518 = vmatpush1.bf16.msra.mxu0 0
  %1519 = vmatprep.subr.bf16.mxu0 0
  %1520 = vmatpush1.bf16.msra.mxu0 0
  %1521 = vmatprep.subr.bf16.mxu0 0
  %1522 = vmatpush1.bf16.msra.mxu0 0
  %1523 = vmatprep.subr.bf16.mxu0 0
  %1524 = vmatpush1.bf16.msra.mxu0 0
  %1525 = vmatprep.subr.bf16.mxu0 0
  %1526 = vmatpush1.bf16.msra.mxu0 0
  %1527 = vmatprep.subr.bf16.mxu0 0
  %1528 = vmatpush1.bf16.msra.mxu0 0
  %1529 = vmatprep.subr.bf16.mxu0 0
  %1530 = vmatpush1.bf16.msra.mxu0 0
  %1531 = vmatprep.subr.bf16.mxu0 0
  %1532 = vmatpush1.bf16.msra.mxu0 0
  %1533 = vmatprep.subr.bf16.mxu0 0
  %1534 = vmatpush1.bf16.msra.mxu0 0
  %1535 = vmatprep.subr.bf16.mxu0 0
  %1536 = vmatpush1.bf16.msra.mxu0 0
  %1537 = vmatprep.subr.bf16.mxu0 0
  %1538 = vmatpush1.bf16.msra.mxu0 0
  %1539 = vmatprep.subr.bf16.mxu0 0
  %1540 = vmatpush1.bf16.msra.mxu0 0
  %1541 = vmatprep.subr.bf16.mxu0 0
  %1542 = vmatpush1.bf16.msra.mxu0 0
  %1543 = vmatprep.mubr.bf16.mxu0 0
  %1544 = vmatmul.mubr.bf16.gmra.mrb[0].mxu0 %v1509
  %v1545 = vpop.f32.mrb[0].mxu0
  %v1546 = vadd.f32 0.0, %v1545
  %v1547 = vpop.f32.mrb[0].mxu0
  %v1548 = vadd.f32 0.0, %v1547
  %v1549 = vpop.f32.mrb[0].mxu0
  %v1550 = vadd.f32 0.0, %v1549
  %v1551 = vpop.f32.mrb[0].mxu0
  %v1552 = vadd.f32 0.0, %v1551
  %1553 = vdwg.mxu0
  %v1554 = vadd.f32 %v870, %v1546
  %v1555 = vadd.f32 %v871, %v1548
  %v1556 = vadd.f32 %v872, %v1550
  %v1557 = vadd.f32 %v873, %v1552
  %v1558 = vpack.c.bf16 %v1556, %v1554
  %v1559 = vpack.c.bf16 %v1557, %v1555
  %v1592 = vunpack.c.l.b16 %v1254
  %v1593 = vunpack.c.l.b16 %v1255
  %v1594 = vunpack.c.l.b16 %v1256
  %v1595 = vunpack.c.l.b16 %v1257
  %v1596 = vunpack.c.l.b16 %v1258
  %v1597 = vunpack.c.l.b16 %v1259
  %v1598 = vunpack.c.l.b16 %v1260
  %v1599 = vunpack.c.l.b16 %v1261
  %v1600 = vunpack.c.l.b16 %v1262
  %v1601 = vunpack.c.l.b16 %v1263
  %v1602 = vunpack.c.l.b16 %v1264
  %v1603 = vunpack.c.l.b16 %v1265
  %v1604 = vunpack.c.l.b16 %v1266
  %v1605 = vunpack.c.l.b16 %v1267
  %v1606 = vunpack.c.l.b16 %v1268
  %v1607 = vunpack.c.l.b16 %v1269
  %v1608 = vunpack.c.l.b16 %v1270
  %v1609 = vunpack.c.l.b16 %v1271
  %v1610 = vunpack.c.l.b16 %v1272
  %v1611 = vunpack.c.l.b16 %v1273
  %v1612 = vunpack.c.l.b16 %v1274
  %v1613 = vunpack.c.l.b16 %v1275
  %v1614 = vunpack.c.l.b16 %v1276
  %v1615 = vunpack.c.l.b16 %v1277
  %v1616 = vunpack.c.l.b16 %v1278
  %v1617 = vunpack.c.l.b16 %v1279
  %v1618 = vunpack.c.l.b16 %v1280
  %v1619 = vunpack.c.l.b16 %v1281
  %v1620 = vunpack.c.l.b16 %v1282
  %v1621 = vunpack.c.l.b16 %v1283
  %v1622 = vunpack.c.l.b16 %v1284
  %v1623 = vunpack.c.l.b16 %v1285
  %v1624 = vpack.c.b16 %v1593, %v1592
  %v1625 = vpack.c.b16 %v1595, %v1594
  %v1626 = vpack.c.b16 %v1597, %v1596
  %v1627 = vpack.c.b16 %v1599, %v1598
  %v1628 = vpack.c.b16 %v1601, %v1600
  %v1629 = vpack.c.b16 %v1603, %v1602
  %v1630 = vpack.c.b16 %v1605, %v1604
  %v1631 = vpack.c.b16 %v1607, %v1606
  %v1632 = vpack.c.b16 %v1609, %v1608
  %v1633 = vpack.c.b16 %v1611, %v1610
  %v1634 = vpack.c.b16 %v1613, %v1612
  %v1635 = vpack.c.b16 %v1615, %v1614
  %v1636 = vpack.c.b16 %v1617, %v1616
  %v1637 = vpack.c.b16 %v1619, %v1618
  %v1638 = vpack.c.b16 %v1621, %v1620
  %v1639 = vpack.c.b16 %v1623, %v1622
  %1656 = vmatprep.subr.bf16.mxu0 0
  %1657 = vmatpush1.bf16.msra.mxu0 %v1624
  %1658 = vmatprep.subr.bf16.mxu0 0
  %1659 = vmatpush1.bf16.msra.mxu0 %v1625
  %1660 = vmatprep.subr.bf16.mxu0 0
  %1661 = vmatpush1.bf16.msra.mxu0 %v1626
  %1662 = vmatprep.subr.bf16.mxu0 0
  %1663 = vmatpush1.bf16.msra.mxu0 %v1627
  %1664 = vmatprep.subr.bf16.mxu0 0
  %1665 = vmatpush1.bf16.msra.mxu0 %v1628
  %1666 = vmatprep.subr.bf16.mxu0 0
  %1667 = vmatpush1.bf16.msra.mxu0 %v1629
  %1668 = vmatprep.subr.bf16.mxu0 0
  %1669 = vmatpush1.bf16.msra.mxu0 %v1630
  %1670 = vmatprep.subr.bf16.mxu0 0
  %1671 = vmatpush1.bf16.msra.mxu0 %v1631
  %1672 = vmatprep.subr.bf16.mxu0 0
  %1673 = vmatpush1.bf16.msra.mxu0 %v1632
  %1674 = vmatprep.subr.bf16.mxu0 0
  %1675 = vmatpush1.bf16.msra.mxu0 %v1633
  %1676 = vmatprep.subr.bf16.mxu0 0
  %1677 = vmatpush1.bf16.msra.mxu0 %v1634
  %1678 = vmatprep.subr.bf16.mxu0 0
  %1679 = vmatpush1.bf16.msra.mxu0 %v1635
  %1680 = vmatprep.subr.bf16.mxu0 0
  %1681 = vmatpush1.bf16.msra.mxu0 %v1636
  %1682 = vmatprep.subr.bf16.mxu0 0
  %1683 = vmatpush1.bf16.msra.mxu0 %v1637
  %1684 = vmatprep.subr.bf16.mxu0 0
  %1685 = vmatpush1.bf16.msra.mxu0 %v1638
  %1686 = vmatprep.subr.bf16.mxu0 0
  %1687 = vmatpush1.bf16.msra.mxu0 %v1639
  %1688 = vmatprep.mubr.bf16.mxu0 %v1559
  %1689 = vmatmul.mubr.bf16.gmra.mrb[0].mxu0 %v1558
  %v1690 = vpop.f32.mrb[0].mxu0
  %v1691 = vadd.f32 0.0, %v1690
  %v1692 = vpop.f32.mrb[0].mxu0
  %v1693 = vpop.f32.mrb[0].mxu0
  %v1694 = vadd.f32 0.0, %v1693
  %v1695 = vpop.f32.mrb[0].mxu0
  %1696 = vdwg.mxu0
  %v1697 = vadd.f32 %v1046, %v1691
  %v1698 = vadd.f32 %v1049, %v1694
  %v1700 = vlaneseq
  %v1701 = vshrl.u32 %v1700, 7
  %v1702 = vsub.s32 0, %v1701
  %v1703 = vrot.slane %v1286, %v1702
  %v1705 = vadd.f32 %v1697, %v1703
  %v1706 = vadd.f32 %v1698, %v1703
  %v1707 = vld [vmem:[%s41] sm:$0xff]
  %v1708 = vld [vmem:[%s41 + $0x8] sm:$0xff]
  %v1709 = vld [vmem:[%s41 + $0x10] sm:$0xff]
  %v1710 = vld [vmem:[%s41 + $0x18] sm:$0xff]
  %v1711 = vld [vmem:[%s41 + $0x20] sm:$0xff]
  %v1712 = vld [vmem:[%s41 + $0x28] sm:$0xff]
  %v1713 = vld [vmem:[%s41 + $0x30] sm:$0xff]
  %v1714 = vld [vmem:[%s41 + $0x38] sm:$0xff]
  %v1715 = vld [vmem:[%s41 + $0x40] sm:$0xff]
  %v1716 = vld [vmem:[%s41 + $0x48] sm:$0xff]
  %v1717 = vld [vmem:[%s41 + $0x50] sm:$0xff]
  %v1718 = vld [vmem:[%s41 + $0x58] sm:$0xff]
  %v1719 = vld [vmem:[%s41 + $0x60] sm:$0xff]
  %v1720 = vld [vmem:[%s41 + $0x68] sm:$0xff]
  %v1721 = vld [vmem:[%s41 + $0x70] sm:$0xff]
  %v1722 = vld [vmem:[%s41 + $0x78] sm:$0xff]
  %v1723 = vld [vmem:[%s41 + $0x80] sm:$0xff]
  %v1724 = vld [vmem:[%s41 + $0x88] sm:$0xff]
  %v1725 = vld [vmem:[%s41 + $0x90] sm:$0xff]
  %v1726 = vld [vmem:[%s41 + $0x98] sm:$0xff]
  %v1727 = vld [vmem:[%s41 + $0xa0] sm:$0xff]
  %v1728 = vld [vmem:[%s41 + $0xa8] sm:$0xff]
  %v1729 = vld [vmem:[%s41 + $0xb0] sm:$0xff]
  %v1730 = vld [vmem:[%s41 + $0xb8] sm:$0xff]
  %v1731 = vld [vmem:[%s41 + $0xc0] sm:$0xff]
  %v1732 = vld [vmem:[%s41 + $0xc8] sm:$0xff]
  %v1733 = vld [vmem:[%s41 + $0xd0] sm:$0xff]
  %v1734 = vld [vmem:[%s41 + $0xd8] sm:$0xff]
  %v1735 = vld [vmem:[%s41 + $0xe0] sm:$0xff]
  %v1736 = vld [vmem:[%s41 + $0xe8] sm:$0xff]
  %v1737 = vld [vmem:[%s41 + $0xf0] sm:$0xff]
  %v1738 = vld [vmem:[%s41 + $0xf8] sm:$0xff]
  %v1739 = vld [vmem:[%s43] sm:$0x3]
  %v1740 = vld [vmem:[%s45] sm:$0xf]
  %v1741 = vld [vmem:[%s45 + $0x4] sm:$0xf]
  %v1742 = vld [vmem:[%s45 + $0x8] sm:$0xf]
  %v1743 = vld [vmem:[%s45 + $0xc] sm:$0xf]
  %v1744 = vld [vmem:[%s45 + $0x10] sm:$0xf]
  %v1745 = vld [vmem:[%s45 + $0x14] sm:$0xf]
  %v1746 = vld [vmem:[%s45 + $0x18] sm:$0xf]
  %v1747 = vld [vmem:[%s45 + $0x1c] sm:$0xf]
  %v1748 = vld [vmem:[%s45 + $0x20] sm:$0xf]
  %v1749 = vld [vmem:[%s45 + $0x24] sm:$0xf]
  %v1750 = vld [vmem:[%s45 + $0x28] sm:$0xf]
  %v1751 = vld [vmem:[%s45 + $0x2c] sm:$0xf]
  %v1752 = vld [vmem:[%s45 + $0x30] sm:$0xf]
  %v1753 = vld [vmem:[%s45 + $0x34] sm:$0xf]
  %v1754 = vld [vmem:[%s45 + $0x38] sm:$0xf]
  %v1755 = vld [vmem:[%s45 + $0x3c] sm:$0xf]
  %v1756 = vld [vmem:[%s45 + $0x40] sm:$0xf]
  %v1757 = vld [vmem:[%s45 + $0x44] sm:$0xf]
  %v1758 = vld [vmem:[%s45 + $0x48] sm:$0xf]
  %v1759 = vld [vmem:[%s45 + $0x4c] sm:$0xf]
  %v1760 = vld [vmem:[%s45 + $0x50] sm:$0xf]
  %v1761 = vld [vmem:[%s45 + $0x54] sm:$0xf]
  %v1762 = vld [vmem:[%s45 + $0x58] sm:$0xf]
  %v1763 = vld [vmem:[%s45 + $0x5c] sm:$0xf]
  %v1764 = vld [vmem:[%s45 + $0x60] sm:$0xf]
  %v1765 = vld [vmem:[%s45 + $0x64] sm:$0xf]
  %v1766 = vld [vmem:[%s45 + $0x68] sm:$0xf]
  %v1767 = vld [vmem:[%s45 + $0x6c] sm:$0xf]
  %v1768 = vld [vmem:[%s45 + $0x70] sm:$0xf]
  %v1769 = vld [vmem:[%s45 + $0x74] sm:$0xf]
  %v1770 = vld [vmem:[%s45 + $0x78] sm:$0xf]
  %v1771 = vld [vmem:[%s45 + $0x7c] sm:$0xf]
  %v1772 = vld [vmem:[%s47] sm:$0x1]
  %v1774 = vlaneseq
  %v1775 = vshrl.u32 %v1774, 7
  %v1776 = vsub.s32 0, %v1775
  %v1777 = vrot.slane %v1739, %v1776
  %v1778 = vlaneseq
  %v1779 = vshrl.u32 %v1778, 7
  %v1780 = vsub.s32 1, %v1779
  %v1781 = vrot.slane %v1739, %v1780
  %v1816 = vunpack.c.l.b16 %v1707
  %v1817 = vunpack.c.h.b16 %v1707
  %v1818 = vunpack.c.l.b16 %v1708
  %v1819 = vunpack.c.h.b16 %v1708
  %v1820 = vunpack.c.l.b16 %v1709
  %v1821 = vunpack.c.h.b16 %v1709
  %v1822 = vunpack.c.l.b16 %v1710
  %v1823 = vunpack.c.h.b16 %v1710
  %v1824 = vunpack.c.l.b16 %v1711
  %v1825 = vunpack.c.h.b16 %v1711
  %v1826 = vunpack.c.l.b16 %v1712
  %v1827 = vunpack.c.h.b16 %v1712
  %v1828 = vunpack.c.l.b16 %v1713
  %v1829 = vunpack.c.h.b16 %v1713
  %v1830 = vunpack.c.l.b16 %v1714
  %v1831 = vunpack.c.h.b16 %v1714
  %v1832 = vunpack.c.l.b16 %v1715
  %v1833 = vunpack.c.h.b16 %v1715
  %v1834 = vunpack.c.l.b16 %v1716
  %v1835 = vunpack.c.h.b16 %v1716
  %v1836 = vunpack.c.l.b16 %v1717
  %v1837 = vunpack.c.h.b16 %v1717
  %v1838 = vunpack.c.l.b16 %v1718
  %v1839 = vunpack.c.h.b16 %v1718
  %v1840 = vunpack.c.l.b16 %v1719
  %v1841 = vunpack.c.h.b16 %v1719
  %v1842 = vunpack.c.l.b16 %v1720
  %v1843 = vunpack.c.h.b16 %v1720
  %v1844 = vunpack.c.l.b16 %v1721
  %v1845 = vunpack.c.h.b16 %v1721
  %v1846 = vunpack.c.l.b16 %v1722
  %v1847 = vunpack.c.h.b16 %v1722
  %v1848 = vunpack.c.l.b16 %v1723
  %v1849 = vunpack.c.h.b16 %v1723
  %v1850 = vunpack.c.l.b16 %v1724
  %v1851 = vunpack.c.h.b16 %v1724
  %v1852 = vunpack.c.l.b16 %v1725
  %v1853 = vunpack.c.h.b16 %v1725
  %v1854 = vunpack.c.l.b16 %v1726
  %v1855 = vunpack.c.h.b16 %v1726
  %v1856 = vunpack.c.l.b16 %v1727
  %v1857 = vunpack.c.h.b16 %v1727
  %v1858 = vunpack.c.l.b16 %v1728
  %v1859 = vunpack.c.h.b16 %v1728
  %v1860 = vunpack.c.l.b16 %v1729
  %v1861 = vunpack.c.h.b16 %v1729
  %v1862 = vunpack.c.l.b16 %v1730
  %v1863 = vunpack.c.h.b16 %v1730
  %v1864 = vunpack.c.l.b16 %v1731
  %v1865 = vunpack.c.h.b16 %v1731
  %v1866 = vunpack.c.l.b16 %v1732
  %v1867 = vunpack.c.h.b16 %v1732
  %v1868 = vunpack.c.l.b16 %v1733
  %v1869 = vunpack.c.h.b16 %v1733
  %v1870 = vunpack.c.l.b16 %v1734
  %v1871 = vunpack.c.h.b16 %v1734
  %v1872 = vunpack.c.l.b16 %v1735
  %v1873 = vunpack.c.h.b16 %v1735
  %v1874 = vunpack.c.l.b16 %v1736
  %v1875 = vunpack.c.h.b16 %v1736
  %v1876 = vunpack.c.l.b16 %v1737
  %v1877 = vunpack.c.h.b16 %v1737
  %v1878 = vunpack.c.l.b16 %v1738
  %v1879 = vunpack.c.h.b16 %v1738
  %v1880 = vpack.c.b16 %v1818, %v1816
  %v1881 = vpack.c.b16 %v1819, %v1817
  %v1882 = vpack.c.b16 %v1822, %v1820
  %v1883 = vpack.c.b16 %v1823, %v1821
  %v1884 = vpack.c.b16 %v1826, %v1824
  %v1885 = vpack.c.b16 %v1827, %v1825
  %v1886 = vpack.c.b16 %v1830, %v1828
  %v1887 = vpack.c.b16 %v1831, %v1829
  %v1888 = vpack.c.b16 %v1834, %v1832
  %v1889 = vpack.c.b16 %v1835, %v1833
  %v1890 = vpack.c.b16 %v1838, %v1836
  %v1891 = vpack.c.b16 %v1839, %v1837
  %v1892 = vpack.c.b16 %v1842, %v1840
  %v1893 = vpack.c.b16 %v1843, %v1841
  %v1894 = vpack.c.b16 %v1846, %v1844
  %v1895 = vpack.c.b16 %v1847, %v1845
  %v1896 = vpack.c.b16 %v1850, %v1848
  %v1897 = vpack.c.b16 %v1851, %v1849
  %v1898 = vpack.c.b16 %v1854, %v1852
  %v1899 = vpack.c.b16 %v1855, %v1853
  %v1900 = vpack.c.b16 %v1858, %v1856
  %v1901 = vpack.c.b16 %v1859, %v1857
  %v1902 = vpack.c.b16 %v1862, %v1860
  %v1903 = vpack.c.b16 %v1863, %v1861
  %v1904 = vpack.c.b16 %v1866, %v1864
  %v1905 = vpack.c.b16 %v1867, %v1865
  %v1906 = vpack.c.b16 %v1870, %v1868
  %v1907 = vpack.c.b16 %v1871, %v1869
  %v1908 = vpack.c.b16 %v1874, %v1872
  %v1909 = vpack.c.b16 %v1875, %v1873
  %v1910 = vpack.c.b16 %v1878, %v1876
  %v1911 = vpack.c.b16 %v1879, %v1877
  %1944 = vmatprep.subr.bf16.mxu0 %v1881
  %1945 = vmatpush1.bf16.msra.mxu0 %v1880
  %1946 = vmatprep.subr.bf16.mxu0 %v1883
  %1947 = vmatpush1.bf16.msra.mxu0 %v1882
  %1948 = vmatprep.subr.bf16.mxu0 %v1885
  %1949 = vmatpush1.bf16.msra.mxu0 %v1884
  %1950 = vmatprep.subr.bf16.mxu0 %v1887
  %1951 = vmatpush1.bf16.msra.mxu0 %v1886
  %1952 = vmatprep.subr.bf16.mxu0 %v1889
  %1953 = vmatpush1.bf16.msra.mxu0 %v1888
  %1954 = vmatprep.subr.bf16.mxu0 %v1891
  %1955 = vmatpush1.bf16.msra.mxu0 %v1890
  %1956 = vmatprep.subr.bf16.mxu0 %v1893
  %1957 = vmatpush1.bf16.msra.mxu0 %v1892
  %1958 = vmatprep.subr.bf16.mxu0 %v1895
  %1959 = vmatpush1.bf16.msra.mxu0 %v1894
  %1960 = vmatprep.subr.bf16.mxu0 %v1897
  %1961 = vmatpush1.bf16.msra.mxu0 %v1896
  %1962 = vmatprep.subr.bf16.mxu0 %v1899
  %1963 = vmatpush1.bf16.msra.mxu0 %v1898
  %1964 = vmatprep.subr.bf16.mxu0 %v1901
  %1965 = vmatpush1.bf16.msra.mxu0 %v1900
  %1966 = vmatprep.subr.bf16.mxu0 %v1903
  %1967 = vmatpush1.bf16.msra.mxu0 %v1902
  %1968 = vmatprep.subr.bf16.mxu0 %v1905
  %1969 = vmatpush1.bf16.msra.mxu0 %v1904
  %1970 = vmatprep.subr.bf16.mxu0 %v1907
  %1971 = vmatpush1.bf16.msra.mxu0 %v1906
  %1972 = vmatprep.subr.bf16.mxu0 %v1909
  %1973 = vmatpush1.bf16.msra.mxu0 %v1908
  %1974 = vmatprep.subr.bf16.mxu0 %v1911
  %1975 = vmatpush1.bf16.msra.mxu0 %v1910
  %1976 = vmatprep.mubr.bf16.mxu0 %v1559
  %1977 = vmatmul.mubr.bf16.gmra.mrb[0].mxu0 %v1558
  %v1978 = vpop.f32.mrb[0].mxu0
  %v1979 = vadd.f32 %v1777, %v1978
  %v1980 = vpop.f32.mrb[0].mxu0
  %v1981 = vadd.f32 %v1781, %v1980
  %v1982 = vpop.f32.mrb[0].mxu0
  %v1983 = vadd.f32 %v1777, %v1982
  %v1984 = vpop.f32.mrb[0].mxu0
  %v1985 = vadd.f32 %v1781, %v1984
  %1986 = vdwg.mxu0
  %v1987 = vmax.f32 %v1979, 0.0
  %v1988 = vmax.f32 %v1981, 0.0
  %v1989 = vmax.f32 %v1983, 0.0
  %v1990 = vmax.f32 %v1985, 0.0
  %v1991 = vpack.c.bf16 %v1989, %v1987
  %v1992 = vpack.c.bf16 %v1990, %v1988
  %1993 = vmatprep.subr.bf16.mxu0 %v1992
  %1994 = vmatpush1.bf16.msra.mxu0 %v1991
  %1995 = vmatprep.subr.bf16.mxu0 0
  %1996 = vmatpush1.bf16.msra.mxu0 0
  %1997 = vmatprep.subr.bf16.mxu0 0
  %1998 = vmatpush1.bf16.msra.mxu0 0
  %1999 = vmatprep.subr.bf16.mxu0 0
  %2000 = vmatpush1.bf16.msra.mxu0 0
  %2001 = vmatprep.subr.bf16.mxu0 0
  %2002 = vmatpush1.bf16.msra.mxu0 0
  %2003 = vmatprep.subr.bf16.mxu0 0
  %2004 = vmatpush1.bf16.msra.mxu0 0
  %2005 = vmatprep.subr.bf16.mxu0 0
  %2006 = vmatpush1.bf16.msra.mxu0 0
  %2007 = vmatprep.subr.bf16.mxu0 0
  %2008 = vmatpush1.bf16.msra.mxu0 0
  %2009 = vmatprep.subr.bf16.mxu0 0
  %2010 = vmatpush1.bf16.msra.mxu0 0
  %2011 = vmatprep.subr.bf16.mxu0 0
  %2012 = vmatpush1.bf16.msra.mxu0 0
  %2013 = vmatprep.subr.bf16.mxu0 0
  %2014 = vmatpush1.bf16.msra.mxu0 0
  %2015 = vmatprep.subr.bf16.mxu0 0
  %2016 = vmatpush1.bf16.msra.mxu0 0
  %2017 = vmatprep.subr.bf16.mxu0 0
  %2018 = vmatpush1.bf16.msra.mxu0 0
  %2019 = vmatprep.subr.bf16.mxu0 0
  %2020 = vmatpush1.bf16.msra.mxu0 0
  %2021 = vmatprep.subr.bf16.mxu0 0
  %2022 = vmatpush1.bf16.msra.mxu0 0
  %2023 = vmatprep.subr.bf16.mxu0 0
  %2024 = vmatpush1.bf16.msra.mxu0 0
  %2025 = vmatprep.mubr.bf16.mxu0 0
  %2026 = vmatmul.mubr.bf16.gmra.mrb[0].mxu0 %v1509
  %v2027 = vpop.f32.mrb[0].mxu0
  %v2028 = vadd.f32 0.0, %v2027
  %v2029 = vpop.f32.mrb[0].mxu0
  %v2030 = vadd.f32 0.0, %v2029
  %v2031 = vpop.f32.mrb[0].mxu0
  %v2032 = vadd.f32 0.0, %v2031
  %v2033 = vpop.f32.mrb[0].mxu0
  %v2034 = vadd.f32 0.0, %v2033
  %2035 = vdwg.mxu0
  %v2036 = vadd.f32 %v1554, %v2028
  %v2037 = vadd.f32 %v1555, %v2030
  %v2038 = vadd.f32 %v1556, %v2032
  %v2039 = vadd.f32 %v1557, %v2034
  %v2040 = vpack.c.bf16 %v2038, %v2036
  %v2041 = vpack.c.bf16 %v2039, %v2037
  %v2074 = vunpack.c.l.b16 %v1740
  %v2075 = vunpack.c.l.b16 %v1741
  %v2076 = vunpack.c.l.b16 %v1742
  %v2077 = vunpack.c.l.b16 %v1743
  %v2078 = vunpack.c.l.b16 %v1744
  %v2079 = vunpack.c.l.b16 %v1745
  %v2080 = vunpack.c.l.b16 %v1746
  %v2081 = vunpack.c.l.b16 %v1747
  %v2082 = vunpack.c.l.b16 %v1748
  %v2083 = vunpack.c.l.b16 %v1749
  %v2084 = vunpack.c.l.b16 %v1750
  %v2085 = vunpack.c.l.b16 %v1751
  %v2086 = vunpack.c.l.b16 %v1752
  %v2087 = vunpack.c.l.b16 %v1753
  %v2088 = vunpack.c.l.b16 %v1754
  %v2089 = vunpack.c.l.b16 %v1755
  %v2090 = vunpack.c.l.b16 %v1756
  %v2091 = vunpack.c.l.b16 %v1757
  %v2092 = vunpack.c.l.b16 %v1758
  %v2093 = vunpack.c.l.b16 %v1759
  %v2094 = vunpack.c.l.b16 %v1760
  %v2095 = vunpack.c.l.b16 %v1761
  %v2096 = vunpack.c.l.b16 %v1762
  %v2097 = vunpack.c.l.b16 %v1763
  %v2098 = vunpack.c.l.b16 %v1764
  %v2099 = vunpack.c.l.b16 %v1765
  %v2100 = vunpack.c.l.b16 %v1766
  %v2101 = vunpack.c.l.b16 %v1767
  %v2102 = vunpack.c.l.b16 %v1768
  %v2103 = vunpack.c.l.b16 %v1769
  %v2104 = vunpack.c.l.b16 %v1770
  %v2105 = vunpack.c.l.b16 %v1771
  %v2106 = vpack.c.b16 %v2075, %v2074
  %v2107 = vpack.c.b16 %v2077, %v2076
  %v2108 = vpack.c.b16 %v2079, %v2078
  %v2109 = vpack.c.b16 %v2081, %v2080
  %v2110 = vpack.c.b16 %v2083, %v2082
  %v2111 = vpack.c.b16 %v2085, %v2084
  %v2112 = vpack.c.b16 %v2087, %v2086
  %v2113 = vpack.c.b16 %v2089, %v2088
  %v2114 = vpack.c.b16 %v2091, %v2090
  %v2115 = vpack.c.b16 %v2093, %v2092
  %v2116 = vpack.c.b16 %v2095, %v2094
  %v2117 = vpack.c.b16 %v2097, %v2096
  %v2118 = vpack.c.b16 %v2099, %v2098
  %v2119 = vpack.c.b16 %v2101, %v2100
  %v2120 = vpack.c.b16 %v2103, %v2102
  %v2121 = vpack.c.b16 %v2105, %v2104
  %2138 = vmatprep.subr.bf16.mxu0 0
  %2139 = vmatpush1.bf16.msra.mxu0 %v2106
  %2140 = vmatprep.subr.bf16.mxu0 0
  %2141 = vmatpush1.bf16.msra.mxu0 %v2107
  %2142 = vmatprep.subr.bf16.mxu0 0
  %2143 = vmatpush1.bf16.msra.mxu0 %v2108
  %2144 = vmatprep.subr.bf16.mxu0 0
  %2145 = vmatpush1.bf16.msra.mxu0 %v2109
  %2146 = vmatprep.subr.bf16.mxu0 0
  %2147 = vmatpush1.bf16.msra.mxu0 %v2110
  %2148 = vmatprep.subr.bf16.mxu0 0
  %2149 = vmatpush1.bf16.msra.mxu0 %v2111
  %2150 = vmatprep.subr.bf16.mxu0 0
  %2151 = vmatpush1.bf16.msra.mxu0 %v2112
  %2152 = vmatprep.subr.bf16.mxu0 0
  %2153 = vmatpush1.bf16.msra.mxu0 %v2113
  %2154 = vmatprep.subr.bf16.mxu0 0
  %2155 = vmatpush1.bf16.msra.mxu0 %v2114
  %2156 = vmatprep.subr.bf16.mxu0 0
  %2157 = vmatpush1.bf16.msra.mxu0 %v2115
  %2158 = vmatprep.subr.bf16.mxu0 0
  %2159 = vmatpush1.bf16.msra.mxu0 %v2116
  %2160 = vmatprep.subr.bf16.mxu0 0
  %2161 = vmatpush1.bf16.msra.mxu0 %v2117
  %2162 = vmatprep.subr.bf16.mxu0 0
  %2163 = vmatpush1.bf16.msra.mxu0 %v2118
  %2164 = vmatprep.subr.bf16.mxu0 0
  %2165 = vmatpush1.bf16.msra.mxu0 %v2119
  %2166 = vmatprep.subr.bf16.mxu0 0
  %2167 = vmatpush1.bf16.msra.mxu0 %v2120
  %2168 = vmatprep.subr.bf16.mxu0 0
  %2169 = vmatpush1.bf16.msra.mxu0 %v2121
  %2170 = vmatprep.mubr.bf16.mxu0 %v2041
  %2171 = vmatmul.mubr.bf16.gmra.mrb[0].mxu0 %v2040
  %v2172 = vpop.f32.mrb[0].mxu0
  %v2173 = vadd.f32 0.0, %v2172
  %v2174 = vpop.f32.mrb[0].mxu0
  %v2175 = vpop.f32.mrb[0].mxu0
  %v2176 = vadd.f32 0.0, %v2175
  %v2177 = vpop.f32.mrb[0].mxu0
  %2178 = vdwg.mxu0
  %v2179 = vadd.f32 %v1705, %v2173
  %v2180 = vadd.f32 %v1706, %v2176
  %v2182 = vlaneseq
  %v2183 = vshrl.u32 %v2182, 7
  %v2184 = vsub.s32 0, %v2183
  %v2185 = vrot.slane %v1772, %v2184
  %v2187 = vadd.f32 %v2179, %v2185
  %v2188 = vadd.f32 %v2180, %v2185
  %v2189 = vld [vmem:[%s49] sm:$0xf]
  %v2190 = vld [vmem:[%s49 + $0x4] sm:$0xf]
  %v2191 = vld [vmem:[%s49 + $0x8] sm:$0xf]
  %v2192 = vld [vmem:[%s49 + $0xc] sm:$0xf]
  %v2193 = vld [vmem:[%s49 + $0x10] sm:$0xf]
  %v2194 = vld [vmem:[%s49 + $0x14] sm:$0xf]
  %v2195 = vld [vmem:[%s49 + $0x18] sm:$0xf]
  %v2196 = vld [vmem:[%s49 + $0x1c] sm:$0xf]
  %v2197 = vld [vmem:[%s49 + $0x20] sm:$0xf]
  %v2198 = vld [vmem:[%s49 + $0x24] sm:$0xf]
  %v2199 = vld [vmem:[%s49 + $0x28] sm:$0xf]
  %v2200 = vld [vmem:[%s49 + $0x2c] sm:$0xf]
  %v2201 = vld [vmem:[%s49 + $0x30] sm:$0xf]
  %v2202 = vld [vmem:[%s49 + $0x34] sm:$0xf]
  %v2203 = vld [vmem:[%s49 + $0x38] sm:$0xf]
  %v2204 = vld [vmem:[%s49 + $0x3c] sm:$0xf]
  %v2205 = vld [vmem:[%s51] sm:$0x1]
  %v2206 = vld [vmem:[%s53] sm:$0xf]
  %v2207 = vld [vmem:[%s53 + $0x4] sm:$0xf]
  %v2208 = vld [vmem:[%s53 + $0x8] sm:$0xf]
  %v2209 = vld [vmem:[%s53 + $0xc] sm:$0xf]
  %v2210 = vld [vmem:[%s53 + $0x10] sm:$0xf]
  %v2211 = vld [vmem:[%s53 + $0x14] sm:$0xf]
  %v2212 = vld [vmem:[%s53 + $0x18] sm:$0xf]
  %v2213 = vld [vmem:[%s53 + $0x1c] sm:$0xf]
  %v2214 = vld [vmem:[%s53 + $0x20] sm:$0xf]
  %v2215 = vld [vmem:[%s53 + $0x24] sm:$0xf]
  %v2216 = vld [vmem:[%s53 + $0x28] sm:$0xf]
  %v2217 = vld [vmem:[%s53 + $0x2c] sm:$0xf]
  %v2218 = vld [vmem:[%s53 + $0x30] sm:$0xf]
  %v2219 = vld [vmem:[%s53 + $0x34] sm:$0xf]
  %v2220 = vld [vmem:[%s53 + $0x38] sm:$0xf]
  %v2221 = vld [vmem:[%s53 + $0x3c] sm:$0xf]
  %v2222 = vld [vmem:[%s55] sm:$0x1]
  %v2223 = vpack.c.bf16 %v1218, %v1215
  %v2225 = vlaneseq
  %v2226 = vshrl.u32 %v2225, 7
  %v2227 = vsub.s32 0, %v2226
  %v2228 = vrot.slane %v2205, %v2227
  %v2246 = vunpack.c.l.b16 %v2189
  %v2247 = vunpack.c.l.b16 %v2190
  %v2248 = vunpack.c.l.b16 %v2191
  %v2249 = vunpack.c.l.b16 %v2192
  %v2250 = vunpack.c.l.b16 %v2193
  %v2251 = vunpack.c.l.b16 %v2194
  %v2252 = vunpack.c.l.b16 %v2195
  %v2253 = vunpack.c.l.b16 %v2196
  %v2254 = vunpack.c.l.b16 %v2197
  %v2255 = vunpack.c.l.b16 %v2198
  %v2256 = vunpack.c.l.b16 %v2199
  %v2257 = vunpack.c.l.b16 %v2200
  %v2258 = vunpack.c.l.b16 %v2201
  %v2259 = vunpack.c.l.b16 %v2202
  %v2260 = vunpack.c.l.b16 %v2203
  %v2261 = vunpack.c.l.b16 %v2204
  %v2262 = vpack.c.b16 %v2247, %v2246
  %v2263 = vpack.c.b16 %v2249, %v2248
  %v2264 = vpack.c.b16 %v2251, %v2250
  %v2265 = vpack.c.b16 %v2253, %v2252
  %v2266 = vpack.c.b16 %v2255, %v2254
  %v2267 = vpack.c.b16 %v2257, %v2256
  %v2268 = vpack.c.b16 %v2259, %v2258
  %v2269 = vpack.c.b16 %v2261, %v2260
  %2278 = vmatprep.subr.bf16.mxu0 0
  %2279 = vmatpush1.bf16.msra.mxu0 %v2262
  %2280 = vmatprep.subr.bf16.mxu0 0
  %2281 = vmatpush1.bf16.msra.mxu0 %v2263
  %2282 = vmatprep.subr.bf16.mxu0 0
  %2283 = vmatpush1.bf16.msra.mxu0 %v2264
  %2284 = vmatprep.subr.bf16.mxu0 0
  %2285 = vmatpush1.bf16.msra.mxu0 %v2265
  %2286 = vmatprep.subr.bf16.mxu0 0
  %2287 = vmatpush1.bf16.msra.mxu0 %v2266
  %2288 = vmatprep.subr.bf16.mxu0 0
  %2289 = vmatpush1.bf16.msra.mxu0 %v2267
  %2290 = vmatprep.subr.bf16.mxu0 0
  %2291 = vmatpush1.bf16.msra.mxu0 %v2268
  %2292 = vmatprep.subr.bf16.mxu0 0
  %2293 = vmatpush1.bf16.msra.mxu0 %v2269
  %2294 = vmatprep.subr.bf16.mxu0 0
  %2295 = vmatpush1.bf16.msra.mxu0 0
  %2296 = vmatprep.subr.bf16.mxu0 0
  %2297 = vmatpush1.bf16.msra.mxu0 0
  %2298 = vmatprep.subr.bf16.mxu0 0
  %2299 = vmatpush1.bf16.msra.mxu0 0
  %2300 = vmatprep.subr.bf16.mxu0 0
  %2301 = vmatpush1.bf16.msra.mxu0 0
  %2302 = vmatprep.subr.bf16.mxu0 0
  %2303 = vmatpush1.bf16.msra.mxu0 0
  %2304 = vmatprep.subr.bf16.mxu0 0
  %2305 = vmatpush1.bf16.msra.mxu0 0
  %2306 = vmatprep.subr.bf16.mxu0 0
  %2307 = vmatpush1.bf16.msra.mxu0 0
  %2308 = vmatprep.subr.bf16.mxu0 0
  %2309 = vmatpush1.bf16.msra.mxu0 0
  %2310 = vmatprep.mubr.bf16.mxu0 0
  %2311 = vmatmul.mubr.bf16.gmra.mrb[0].mxu0 %v2223
  %v2312 = vpop.f32.mrb[0].mxu0
  %v2313 = vadd.f32 %v2228, %v2312
  %v2314 = vpop.f32.mrb[0].mxu0
  %v2315 = vpop.f32.mrb[0].mxu0
  %v2316 = vadd.f32 %v2228, %v2315
  %v2317 = vpop.f32.mrb[0].mxu0
  %2318 = vdwg.mxu0
  %v2319 = vmax.f32 %v2313, 0.0
  %v2320 = vmax.f32 %v2316, 0.0
  %v2321 = vpack.c.bf16 %v2320, %v2319
  %2322 = vmatprep.subr.bf16.mxu0 0
  %2323 = vmatpush1.bf16.msra.mxu0 %v2321
  %2324 = vmatprep.subr.bf16.mxu0 0
  %2325 = vmatpush1.bf16.msra.mxu0 0
  %2326 = vmatprep.subr.bf16.mxu0 0
  %2327 = vmatpush1.bf16.msra.mxu0 0
  %2328 = vmatprep.subr.bf16.mxu0 0
  %2329 = vmatpush1.bf16.msra.mxu0 0
  %2330 = vmatprep.subr.bf16.mxu0 0
  %2331 = vmatpush1.bf16.msra.mxu0 0
  %2332 = vmatprep.subr.bf16.mxu0 0
  %2333 = vmatpush1.bf16.msra.mxu0 0
  %2334 = vmatprep.subr.bf16.mxu0 0
  %2335 = vmatpush1.bf16.msra.mxu0 0
  %2336 = vmatprep.subr.bf16.mxu0 0
  %2337 = vmatpush1.bf16.msra.mxu0 0
  %2338 = vmatprep.subr.bf16.mxu0 0
  %2339 = vmatpush1.bf16.msra.mxu0 0
  %2340 = vmatprep.subr.bf16.mxu0 0
  %2341 = vmatpush1.bf16.msra.mxu0 0
  %2342 = vmatprep.subr.bf16.mxu0 0
  %2343 = vmatpush1.bf16.msra.mxu0 0
  %2344 = vmatprep.subr.bf16.mxu0 0
  %2345 = vmatpush1.bf16.msra.mxu0 0
  %2346 = vmatprep.subr.bf16.mxu0 0
  %2347 = vmatpush1.bf16.msra.mxu0 0
  %2348 = vmatprep.subr.bf16.mxu0 0
  %2349 = vmatpush1.bf16.msra.mxu0 0
  %2350 = vmatprep.subr.bf16.mxu0 0
  %2351 = vmatpush1.bf16.msra.mxu0 0
  %2352 = vmatprep.subr.bf16.mxu0 0
  %2353 = vmatpush1.bf16.msra.mxu0 0
  %2354 = vmatprep.mubr.bf16.mxu0 0
  %2355 = vmatmul.mubr.bf16.gmra.mrb[0].mxu0 %v1509
  %v2356 = vpop.f32.mrb[0].mxu0
  %v2357 = vadd.f32 0.0, %v2356
  %v2358 = vpop.f32.mrb[0].mxu0
  %v2359 = vpop.f32.mrb[0].mxu0
  %v2360 = vadd.f32 0.0, %v2359
  %v2361 = vpop.f32.mrb[0].mxu0
  %2362 = vdwg.mxu0
  %v2363 = vadd.f32 %v1215, %v2357
  %v2364 = vadd.f32 %v1218, %v2360
  %v2365 = vpack.c.bf16 %v2364, %v2363
  %v2382 = vunpack.c.l.b16 %v2206
  %v2383 = vunpack.c.l.b16 %v2207
  %v2384 = vunpack.c.l.b16 %v2208
  %v2385 = vunpack.c.l.b16 %v2209
  %v2386 = vunpack.c.l.b16 %v2210
  %v2387 = vunpack.c.l.b16 %v2211
  %v2388 = vunpack.c.l.b16 %v2212
  %v2389 = vunpack.c.l.b16 %v2213
  %v2390 = vunpack.c.l.b16 %v2214
  %v2391 = vunpack.c.l.b16 %v2215
  %v2392 = vunpack.c.l.b16 %v2216
  %v2393 = vunpack.c.l.b16 %v2217
  %v2394 = vunpack.c.l.b16 %v2218
  %v2395 = vunpack.c.l.b16 %v2219
  %v2396 = vunpack.c.l.b16 %v2220
  %v2397 = vunpack.c.l.b16 %v2221
  %v2398 = vpack.c.b16 %v2383, %v2382
  %v2399 = vpack.c.b16 %v2385, %v2384
  %v2400 = vpack.c.b16 %v2387, %v2386
  %v2401 = vpack.c.b16 %v2389, %v2388
  %v2402 = vpack.c.b16 %v2391, %v2390
  %v2403 = vpack.c.b16 %v2393, %v2392
  %v2404 = vpack.c.b16 %v2395, %v2394
  %v2405 = vpack.c.b16 %v2397, %v2396
  %2414 = vmatprep.subr.bf16.mxu0 0
  %2415 = vmatpush1.bf16.msra.mxu0 %v2398
  %2416 = vmatprep.subr.bf16.mxu0 0
  %2417 = vmatpush1.bf16.msra.mxu0 %v2399
  %2418 = vmatprep.subr.bf16.mxu0 0
  %2419 = vmatpush1.bf16.msra.mxu0 %v2400
  %2420 = vmatprep.subr.bf16.mxu0 0
  %2421 = vmatpush1.bf16.msra.mxu0 %v2401
  %2422 = vmatprep.subr.bf16.mxu0 0
  %2423 = vmatpush1.bf16.msra.mxu0 %v2402
  %2424 = vmatprep.subr.bf16.mxu0 0
  %2425 = vmatpush1.bf16.msra.mxu0 %v2403
  %2426 = vmatprep.subr.bf16.mxu0 0
  %2427 = vmatpush1.bf16.msra.mxu0 %v2404
  %2428 = vmatprep.subr.bf16.mxu0 0
  %2429 = vmatpush1.bf16.msra.mxu0 %v2405
  %2430 = vmatprep.subr.bf16.mxu0 0
  %2431 = vmatpush1.bf16.msra.mxu0 0
  %2432 = vmatprep.subr.bf16.mxu0 0
  %2433 = vmatpush1.bf16.msra.mxu0 0
  %2434 = vmatprep.subr.bf16.mxu0 0
  %2435 = vmatpush1.bf16.msra.mxu0 0
  %2436 = vmatprep.subr.bf16.mxu0 0
  %2437 = vmatpush1.bf16.msra.mxu0 0
  %2438 = vmatprep.subr.bf16.mxu0 0
  %2439 = vmatpush1.bf16.msra.mxu0 0
  %2440 = vmatprep.subr.bf16.mxu0 0
  %2441 = vmatpush1.bf16.msra.mxu0 0
  %2442 = vmatprep.subr.bf16.mxu0 0
  %2443 = vmatpush1.bf16.msra.mxu0 0
  %2444 = vmatprep.subr.bf16.mxu0 0
  %2445 = vmatpush1.bf16.msra.mxu0 0
  %2446 = vmatprep.mubr.bf16.mxu0 0
  %2447 = vmatmul.mubr.bf16.gmra.mrb[0].mxu0 %v2365
  %v2448 = vpop.f32.mrb[0].mxu0
  %v2449 = vadd.f32 0.0, %v2448
  %v2450 = vpop.f32.mrb[0].mxu0
  %v2451 = vpop.f32.mrb[0].mxu0
  %v2452 = vadd.f32 0.0, %v2451
  %v2453 = vpop.f32.mrb[0].mxu0
  %2454 = vdwg.mxu0
  %v2455 = vadd.f32 %v2187, %v2449
  %v2456 = vadd.f32 %v2188, %v2452
  %v2458 = vlaneseq
  %v2459 = vshrl.u32 %v2458, 7
  %v2460 = vsub.s32 0, %v2459
  %v2461 = vrot.slane %v2222, %v2460
  %v2463 = vadd.f32 %v2455, %v2461
  %v2464 = vadd.f32 %v2456, %v2461
  %v2465 = vld [vmem:[%s57] sm:$0xf]
  %v2466 = vld [vmem:[%s57 + $0x4] sm:$0xf]
  %v2467 = vld [vmem:[%s59] sm:$0x1]
  %v2468 = vld [vmem:[%s61] sm:$0xf]
  %v2469 = vld [vmem:[%s61 + $0x4] sm:$0xf]
  %v2470 = vld [vmem:[%s61 + $0x8] sm:$0xf]
  %v2471 = vld [vmem:[%s61 + $0xc] sm:$0xf]
  %v2472 = vld [vmem:[%s63] sm:$0x1]
  %v2473 = vmax.f32 %v2463, 0.0
  %v2474 = vmax.f32 %v2464, 0.0
  %v2475 = vpack.c.bf16 %v2474, %v2473
  %v2477 = vlaneseq
  %v2478 = vshrl.u32 %v2477, 7
  %v2479 = vsub.s32 0, %v2478
  %v2480 = vrot.slane %v2467, %v2479
  %v2484 = vunpack.c.l.b16 %v2465
  %v2485 = vunpack.c.l.b16 %v2466
  %v2486 = vpack.c.b16 %v2485, %v2484
  %v2489 = vsel %vm306, %v2475, 0
  %2491 = vmatprep.subr.bf16.mxu0 0
  %2492 = vmatpush1.bf16.msra.mxu0 %v2486
  %2493 = vmatprep.subr.bf16.mxu0 0
  %2494 = vmatpush1.bf16.msra.mxu0 0
  %2495 = vmatprep.subr.bf16.mxu0 0
  %2496 = vmatpush1.bf16.msra.mxu0 0
  %2497 = vmatprep.subr.bf16.mxu0 0
  %2498 = vmatpush1.bf16.msra.mxu0 0
  %2499 = vmatprep.subr.bf16.mxu0 0
  %2500 = vmatpush1.bf16.msra.mxu0 0
  %2501 = vmatprep.subr.bf16.mxu0 0
  %2502 = vmatpush1.bf16.msra.mxu0 0
  %2503 = vmatprep.subr.bf16.mxu0 0
  %2504 = vmatpush1.bf16.msra.mxu0 0
  %2505 = vmatprep.subr.bf16.mxu0 0
  %2506 = vmatpush1.bf16.msra.mxu0 0
  %2507 = vmatprep.subr.bf16.mxu0 0
  %2508 = vmatpush1.bf16.msra.mxu0 0
  %2509 = vmatprep.subr.bf16.mxu0 0
  %2510 = vmatpush1.bf16.msra.mxu0 0
  %2511 = vmatprep.subr.bf16.mxu0 0
  %2512 = vmatpush1.bf16.msra.mxu0 0
  %2513 = vmatprep.subr.bf16.mxu0 0
  %2514 = vmatpush1.bf16.msra.mxu0 0
  %2515 = vmatprep.subr.bf16.mxu0 0
  %2516 = vmatpush1.bf16.msra.mxu0 0
  %2517 = vmatprep.subr.bf16.mxu0 0
  %2518 = vmatpush1.bf16.msra.mxu0 0
  %2519 = vmatprep.subr.bf16.mxu0 0
  %2520 = vmatpush1.bf16.msra.mxu0 0
  %2521 = vmatprep.subr.bf16.mxu0 0
  %2522 = vmatpush1.bf16.msra.mxu0 0
  %2523 = vmatprep.mubr.bf16.mxu0 0
  %2524 = vmatmul.mubr.bf16.gmra.mrb[0].mxu0 %v2489
  %v2525 = vpop.f32.mrb[0].mxu0
  %v2526 = vadd.f32 %v2480, %v2525
  %v2527 = vpop.f32.mrb[0].mxu0
  %v2528 = vpop.f32.mrb[0].mxu0
  %v2529 = vadd.f32 %v2480, %v2528
  %v2530 = vpop.f32.mrb[0].mxu0
  %2531 = vdwg.mxu0
  %v2532 = vmax.f32 %v2526, 0.0
  %v2533 = vmax.f32 %v2529, 0.0
  %v2534 = vpack.c.bf16 %v2533, %v2532
  %v2536 = vlaneseq
  %v2537 = vshrl.u32 %v2536, 7
  %v2538 = vsub.s32 0, %v2537
  %v2539 = vrot.slane %v2472, %v2538
  %v2545 = vunpack.c.l.b16 %v2468
  %v2546 = vunpack.c.l.b16 %v2469
  %v2547 = vunpack.c.l.b16 %v2470
  %v2548 = vunpack.c.l.b16 %v2471
  %v2549 = vpack.c.b16 %v2546, %v2545
  %v2550 = vpack.c.b16 %v2548, %v2547
  %vm2553 = vcmask 261120
  %v2555 = vsel %vm2553, %v2534, 0
  %2557 = vmatprep.subr.bf16.mxu0 0
  %2558 = vmatpush1.bf16.msra.mxu0 %v2549
  %2559 = vmatprep.subr.bf16.mxu0 0
  %2560 = vmatpush1.bf16.msra.mxu0 %v2550
  %2561 = vmatprep.subr.bf16.mxu0 0
  %2562 = vmatpush1.bf16.msra.mxu0 0
  %2563 = vmatprep.subr.bf16.mxu0 0
  %2564 = vmatpush1.bf16.msra.mxu0 0
  %2565 = vmatprep.subr.bf16.mxu0 0
  %2566 = vmatpush1.bf16.msra.mxu0 0
  %2567 = vmatprep.subr.bf16.mxu0 0
  %2568 = vmatpush1.bf16.msra.mxu0 0
  %2569 = vmatprep.subr.bf16.mxu0 0
  %2570 = vmatpush1.bf16.msra.mxu0 0
  %2571 = vmatprep.subr.bf16.mxu0 0
  %2572 = vmatpush1.bf16.msra.mxu0 0
  %2573 = vmatprep.subr.bf16.mxu0 0
  %2574 = vmatpush1.bf16.msra.mxu0 0
  %2575 = vmatprep.subr.bf16.mxu0 0
  %2576 = vmatpush1.bf16.msra.mxu0 0
  %2577 = vmatprep.subr.bf16.mxu0 0
  %2578 = vmatpush1.bf16.msra.mxu0 0
  %2579 = vmatprep.subr.bf16.mxu0 0
  %2580 = vmatpush1.bf16.msra.mxu0 0
  %2581 = vmatprep.subr.bf16.mxu0 0
  %2582 = vmatpush1.bf16.msra.mxu0 0
  %2583 = vmatprep.subr.bf16.mxu0 0
  %2584 = vmatpush1.bf16.msra.mxu0 0
  %2585 = vmatprep.subr.bf16.mxu0 0
  %2586 = vmatpush1.bf16.msra.mxu0 0
  %2587 = vmatprep.subr.bf16.mxu0 0
  %2588 = vmatpush1.bf16.msra.mxu0 0
  %2589 = vmatprep.mubr.bf16.mxu0 0
  %2590 = vmatmul.mubr.bf16.gmra.mrb[0].mxu0 %v2555
  %v2591 = vpop.f32.mrb[0].mxu0
  %v2592 = vadd.f32 %v2539, %v2591
  %v2593 = vpop.f32.mrb[0].mxu0
  %v2594 = vpop.f32.mrb[0].mxu0
  %v2595 = vadd.f32 %v2539, %v2594
  %v2596 = vpop.f32.mrb[0].mxu0
  %2597 = vdwg.mxu0
  %vm2598 = vcmask 31744
  %2599 = vst.msk [vmem:[%s65] sm:$0xff] %vm2598, %v2592
  %2600 = vst.msk [vmem:[%s65 + $0x8] sm:$0xff] %vm2598, %v2595
  // Predicated region
  $region130: #{net_forward_packed.1} parent=0 // pred_check
    _
  $region131: #{net_forward_packed.1} parent=0 // pred_check_branch
    %2602 = sbr.rel (0) target = $region133
  $region132: #{net_forward_packed.1} parent=0 // pred_region
    _
  $region133: #{net_forward_packed.1} parent=0 // pred_fallthru
    _
  // Predicated region
  $region134: #{net_forward_packed.1} parent=0 // pred_check
    _
  $region135: #{net_forward_packed.1} parent=0 // pred_check_branch
    %2604 = sbr.rel (0) target = $region137
  $region136: #{net_forward_packed.1} parent=0 // pred_region
    _
  $region137: #{net_forward_packed.1} parent=0 // pred_fallthru
    _

</llo_original>
